<compile_context>
chip_gen: v5e
topology: v5e:2x2
jax: 0.10.0
libtpu: 0.0.40
codegen_flags: <defaults>
</compile_context>

<pallas_src>
import math
from functools import partial

import jax
import jax.numpy as jnp
import numpy as np
from jax import lax
from jax.experimental import pallas as pl
from jax.experimental.pallas import tpu as pltpu


def _vmem_limit_bytes():
    """Per-generation VMEM budget: ~48 MiB on v7x (64 MiB physical), 96 MiB on v5e/v6e."""
    try:
        cap = int(getattr(pltpu.get_tpu_info(), "vmem_capacity_bytes", 128 * 2**20))
    except Exception:
        cap = 64 * 2**20          # conservative (v7x-sized) fallback
    return int(min(96 * 2**20, (3 * cap) // 4))


def _choose_row_tile(H, W, Cin, Cout, use_im2col, budget_bytes):
    """Largest divisor of H whose pass-A working set fits the VMEM budget."""
    K9 = 9 * Cin
    best = 1
    for tm in range(1, H + 1):
        if H % tm:
            continue
        need = (tm + 2) * (W + 2) * Cin * 2        # padded-tile scratch (bf16)
        need += 2 * tm * W * Cin * 2               # double-buffered input tile
        need += 4 * W * Cin * 2                    # halo-row blocks
        need += 2 * tm * W * Cout * 2              # double-buffered bf16 conv tile
        need += tm * W * Cout * 4                  # f32 accumulator
        need += K9 * Cout * 2                      # resident weights
        if use_im2col:
            need += tm * W * K9 * 2                # bf16 im2col patch
        if need <= budget_bytes:
            best = tm
    return best


def _choose_batch_tile(N, H, W, Cout, ph, pw, budget_bytes):
    """Largest divisor of N whose pass-B blocks fit the budget (big DMAs, few steps)."""
    Ho, Wo = H // ph, W // pw
    best = 1
    for bt in range(1, N + 1):
        if N % bt:
            continue
        need = 2 * bt * H * W * Cout * 2 + 2 * bt * Ho * Wo * Cout * 4
        if need <= budget_bytes:
            best = bt
    return best


def _conv_stats_kernel(H, W, Cin, Cout, TM, use_im2col):
    """Per (sample, row-tile): 3x3 conv on the MXU + per-tile BN partial stats."""
    TMW = TM * W
    K9 = 9 * Cin

    def kernel(x_ref, top_ref, bot_ref, w_ref, y_ref, sum_ref, ssq_ref, *scratch):
        # x_ref:   (1, TM, W, Cin)  bf16   unpadded row tile
        # top_ref: (1, 1,  W, Cin)  bf16   row above the tile (clamped at the image edge)
        # bot_ref: (1, 1,  W, Cin)  bf16   row below the tile (clamped)
        # w_ref:   (9*Cin, Cout)    bf16   flattened conv weights (resident)
        # y_ref:   (1, TM*W, Cout)  bf16   conv output tile (pre-BN)
        # sum/ssq: (1, 1, 1, Cout)  f32    per-tile BN partial stats
        if use_im2col:
            xv_ref, patch_ref = scratch
        else:
            (xv_ref,) = scratch
        r = pl.program_id(1)
        last_r = pl.num_programs(1) - 1
        cdt = xv_ref.dtype

        # --- assemble the zero-padded tile (TM+2, W+2, Cin) in VMEM (no wrapper pad) ---
        zcol = jnp.zeros((TM + 2, 1, Cin), cdt)
        xv_ref[:, 0:1, :] = zcol                         # left pad column
        xv_ref[:, W + 1:W + 2, :] = zcol                 # right pad column
        xv_ref[1:TM + 1, 1:W + 1, :] = x_ref[0]          # this row tile
        # halo rows from neighbouring tiles; zeroed at the top/bottom image border
        xv_ref[0:1, 1:W + 1, :] = top_ref[0] * (r > 0).astype(cdt)
        xv_ref[TM + 1:TM + 2, 1:W + 1, :] = bot_ref[0] * (r < last_r).astype(cdt)

        if use_im2col:
            # small Cin: one (TM*W, 9*Cin) bf16 patch, single MXU matmul (K = 9*Cin)
            for kh in range(3):
                for kw in range(3):
                    k = kh * 3 + kw
                    win = xv_ref[kh:kh + TM, kw:kw + W, :]
                    patch_ref[:, k * Cin:(k + 1) * Cin] = win.reshape(TMW, Cin)
            acc = jnp.dot(patch_ref[...], w_ref[...],
                          preferred_element_type=jnp.float32)          # (TM*W, Cout)
        else:
            # large Cin: K=Cin already fills the MXU; 9 accumulated matmuls, no patch.
            acc = jnp.zeros((TMW, Cout), jnp.float32)
            for kh in range(3):
                for kw in range(3):
                    k = kh * 3 + kw
                    win = xv_ref[kh:kh + TM, kw:kw + W, :].reshape(TMW, Cin)
                    acc = acc + jnp.dot(win, w_ref[k * Cin:(k + 1) * Cin, :],
                                        preferred_element_type=jnp.float32)

        y_ref[0] = acc.astype(y_ref.dtype)               # bf16 conv intermediate
        # BN partial stats from the f32 accumulator (not from the bf16 store)
        sum_ref[0, 0] = jnp.sum(acc, axis=0, keepdims=True)
        ssq_ref[0, 0] = jnp.sum(acc * acc, axis=0, keepdims=True)

    return kernel


def _bn_relu_pool_kernel(H, W, Cout, ph, pw, BT):
    """Per batch-tile: BN affine (y*scale + shift) -> ReLU -> ph x pw avg pool (VPU only)."""
    Ho, Wo = H // ph, W // pw
    inv = 1.0 / float(ph * pw)

    def kernel(y_ref, scale_ref, shift_ref, o_ref):
        # y_ref: (BT, H, Wo, pw*Cout) bf16 -- contiguous re-view of the conv output,
        #        so the pw W-neighbours of each pooling window are adjacent lane groups.
        scale = scale_ref[...]                               # (1, Cout) f32
        shift = shift_ref[...]
        y = y_ref[...].astype(jnp.float32)
        acc = None
        for j in range(pw):                                  # pool along W (lane groups)
            part = y[..., j * Cout:(j + 1) * Cout]           # (BT, H, Wo, Cout)
            part = jnp.maximum(part * scale + shift, 0.0)    # BN affine + ReLU
            acc = part if acc is None else acc + part
        acc = acc.reshape(BT, Ho, ph, Wo, Cout)              # leading-dim split: layout no-op
        pooled = acc[:, :, 0]
        for i in range(1, ph):                               # pool along H
            pooled = pooled + acc[:, :, i]
        o_ref[...] = pooled * inv

    return kernel


@partial(jax.jit, static_argnames=("pool_size", "eps", "row_tile", "batch_tile"))
def conv_block_forward(x_nchw, w_oihw, gamma, beta, pool_size=(2, 2), eps=1e-5,
                       row_tile=None, batch_tile=None):
    """Forward of ConvBlock. x_nchw: (N, Cin, H, W) -> (N, Cout, H/ph, W/pw)."""
    N, Cin, H, W = x_nchw.shape
    Cout = w_oihw.shape[0]
    ph, pw = pool_size
    # PyTorch AvgPool2d floors odd spatial sizes; fail loudly instead of silently mismatching.
    assert H % ph == 0 and W % pw == 0, "H/W must be divisible by the pool size"
    Ho, Wo = H // ph, W // pw
    K9 = 9 * Cin

    use_im2col = Cin < 128
    vmem_limit = _vmem_limit_bytes()
    TM = row_tile if row_tile is not None else _choose_row_tile(
        H, W, Cin, Cout, use_im2col, vmem_limit // 2)
    assert H % TM == 0, "row_tile must divide H"
    R = H // TM
    BT = batch_tile if batch_tile is not None else _choose_batch_tile(
        N, H, W, Cout, ph, pw, vmem_limit // 2)
    assert N % BT == 0, "batch_tile must divide N"

    # Layout glue (single HBM rewrite): NCHW -> NHWC, channels on lanes, bf16 for the MXU.
    # No jnp.pad -- halos/zero borders are handled inside the kernel.
    # TODO(synk): consume NCHW directly with an in-kernel pltpu.einshape to drop this rewrite.
    x = jnp.transpose(x_nchw, (0, 2, 3, 1)).astype(jnp.bfloat16)
    # conv weights OIHW -> (kh, kw, Cin, Cout) -> (9*Cin, Cout), bf16
    wmat = jnp.transpose(w_oihw, (2, 3, 1, 0)).reshape(K9, Cout).astype(jnp.bfloat16)
    # TODO(synk): for 64 <= Cout < 128 zero-pad wmat's lane dim to 128 for lane-dense stores.

    scratch = [pltpu.VMEM((TM + 2, W + 2, Cin), jnp.bfloat16)]
    if use_im2col:
        scratch.append(pltpu.VMEM((TM * W, K9), jnp.bfloat16))

    # --- pass A: row-tiled conv + per-tile BN partial stats ---------------------------------
    conv_flat, csum, cssq = pl.pallas_call(
        _conv_stats_kernel(H, W, Cin, Cout, TM, use_im2col),
        out_shape=(
            jax.ShapeDtypeStruct((N, H * W, Cout), jnp.bfloat16),
            jax.ShapeDtypeStruct((N, R, 1, Cout), jnp.float32),
            jax.ShapeDtypeStruct((N, R, 1, Cout), jnp.float32),
        ),
        grid=(N, R),
        in_specs=[
            pl.BlockSpec((1, TM, W, Cin), lambda n, r: (n, r, 0, 0)),
            pl.BlockSpec((1, 1, W, Cin),
                         lambda n, r: (n, jnp.maximum(r * TM - 1, 0), 0, 0)),
            pl.BlockSpec((1, 1, W, Cin),
                         lambda n, r: (n, jnp.minimum((r + 1) * TM, H - 1), 0, 0)),
            pl.BlockSpec((K9, Cout), lambda n, r: (0, 0)),
        ],
        out_specs=(
            pl.BlockSpec((1, TM * W, Cout), lambda n, r: (n, r, 0)),
            pl.BlockSpec((1, 1, 1, Cout), lambda n, r: (n, r, 0, 0)),
            pl.BlockSpec((1, 1, 1, Cout), lambda n, r: (n, r, 0, 0)),
        ),
        scratch_shapes=scratch,
        compiler_params=pltpu.CompilerParams(
            dimension_semantics=("parallel", "parallel"),
            vmem_limit_bytes=vmem_limit),
        cost_estimate=pl.CostEstimate(
            flops=2 * N * H * W * K9 * Cout,
            transcendentals=0,
            bytes_accessed=(N * H * W * Cin * 2 + K9 * Cout * 2
                            + N * H * W * Cout * 2 + 2 * N * R * Cout * 4)),
    )(x, x, x, wmat)

    # --- BN train-mode batch stats -> per-channel scale/shift (tiny XLA glue) ---------------
    cnt = float(N * H * W)
    mean = jnp.sum(csum, axis=(0, 1, 2)) / cnt
    # NOTE: E[x^2]-E[x]^2 in f32 can lose precision when |mean| >> std; clamped so it never NaNs.
    var = jnp.maximum(jnp.sum(cssq, axis=(0, 1, 2)) / cnt - mean * mean, 0.0)
    scale = gamma.astype(jnp.float32) * lax.rsqrt(var + eps)
    shift = beta.astype(jnp.float32) - mean * scale
    scale2 = scale.reshape(1, Cout)
    shift2 = shift.reshape(1, Cout)

    # free contiguous re-view: (N, H*W, Cout) == (N, H, Wo, pw*Cout) byte-for-byte
    y_view = conv_flat.reshape(N, H, Wo, pw * Cout)

    # --- pass B: BN affine + ReLU + avg pool, batch-tiled ------------------------------------
    out_nhwc = pl.pallas_call(
        _bn_relu_pool_kernel(H, W, Cout, ph, pw, BT),
        out_shape=jax.ShapeDtypeStruct((N, Ho, Wo, Cout), jnp.float32),
        grid=(N // BT,),
        in_specs=[
            pl.BlockSpec((BT, H, Wo, pw * Cout), lambda b: (b, 0, 0, 0)),
            pl.BlockSpec((1, Cout), lambda b: (0, 0)),
            pl.BlockSpec((1, Cout), lambda b: (0, 0)),
        ],
        out_specs=pl.BlockSpec((BT, Ho, Wo, Cout), lambda b: (b, 0, 0, 0)),
        compiler_params=pltpu.CompilerParams(
            dimension_semantics=("parallel",),
            vmem_limit_bytes=vmem_limit),
    )(y_view, scale2, shift2)

    # glue: back to PyTorch NCHW layout
    return jnp.transpose(out_nhwc, (0, 3, 1, 2))


def reference_forward(x_nchw, w_oihw, gamma, beta, pool_size=(2, 2), eps=1e-5):
    """Pure-JAX reference matching PyTorch ConvBlock.forward (train-mode BN)."""
    y = lax.conv_general_dilated(
        x_nchw, w_oihw, window_strides=(1, 1), padding=((1, 1), (1, 1)),
        dimension_numbers=("NCHW", "OIHW", "NCHW"),
        precision=lax.Precision.HIGHEST,
    )
    mean = y.mean(axis=(0, 2, 3), keepdims=True)
    var = ((y - mean) ** 2).mean(axis=(0, 2, 3), keepdims=True)
    y = (y - mean) / jnp.sqrt(var + eps)
    y = y * gamma.reshape(1, -1, 1, 1) + beta.reshape(1, -1, 1, 1)
    y = jnp.maximum(y, 0.0)
    N, C, H, W = y.shape
    ph, pw = pool_size
    y = y.reshape(N, C, H // ph, ph, W // pw, pw).mean(axis=(3, 5))
    return y


if __name__ == "__main__":
    key = jax.random.PRNGKey(0)
    k_x, k_w, k_g, k_b = jax.random.split(key, 4)

    N, Cin, H, W = 2, 4, 16, 16
    Cout = 8

    x = jax.random.normal(k_x, (N, Cin, H, W), jnp.float32)
    bound = 1.0 / math.sqrt(Cin * 3 * 3)               # kaiming-uniform-like bound
    w = jax.random.uniform(k_w, (Cout, Cin, 3, 3), jnp.float32, -bound, bound)
    gamma = 1.0 + 0.1 * jax.random.normal(k_g, (Cout,), jnp.float32)
    beta = 0.1 * jax.random.normal(k_b, (Cout,), jnp.float32)

    ref = reference_forward(x, w, gamma, beta)

    # default (auto) tiling: single row tile per sample at this small size
    out = jax.block_until_ready(conv_block_forward(x, w, gamma, beta))
    assert out.shape == (N, Cout, H // 2, W // 2), out.shape
    # tolerances loosened vs. the f32 HIGHEST reference: bf16 MXU operands + bf16 intermediate
    np.testing.assert_allclose(np.asarray(out), np.asarray(ref), rtol=3e-2, atol=3e-2)

    # forced small row tiles: exercises the cross-tile halo-row path (R = 4)
    out_tiled = jax.block_until_ready(
        conv_block_forward(x, w, gamma, beta, row_tile=4, batch_tile=1))
    np.testing.assert_allclose(np.asarray(out_tiled), np.asarray(ref), rtol=3e-2, atol=3e-2)

    print("KERNEL_OK")
</pallas_src>

<mosaic_0001>
module attributes {stable_mosaic.version = 11 : i64} {
  func.func @kernel(%arg0: i32, %arg1: i32, %arg2: memref<1x16x16x4xbf16, #tpu.memory_space<vmem>>, %arg3: memref<1x1x16x4xbf16, #tpu.memory_space<vmem>>, %arg4: memref<1x1x16x4xbf16, #tpu.memory_space<vmem>>, %arg5: memref<36x8xbf16, #tpu.memory_space<vmem>>, %arg6: memref<1x256x8xbf16, #tpu.memory_space<vmem>>, %arg7: memref<1x1x1x8xf32, #tpu.memory_space<vmem>>, %arg8: memref<1x1x1x8xf32, #tpu.memory_space<vmem>>, %arg9: memref<18x18x4xbf16, #tpu.memory_space<vmem>>, %arg10: memref<256x36xbf16, #tpu.memory_space<vmem>>) attributes {dimension_semantics = [#tpu.dimension_semantics<parallel>, #tpu.dimension_semantics<parallel>], iteration_bounds = array<i64: 2, 1>, scalar_prefetch = 0 : i64, scratch_operands = 2 : i64, tpu.core_type = #tpu.core_type<tc>, window_params = [{transform_indices = @transform_0, window_bounds = array<i64: 1, 16, 16, 4>}, {transform_indices = @transform_1, window_bounds = array<i64: 1, 1, 16, 4>}, {transform_indices = @transform_2, window_bounds = array<i64: 1, 1, 16, 4>}, {pipeline_mode = #tpu.pipeline_mode<synchronous>, transform_indices = @transform_3, window_bounds = array<i64: 36, 8>}, {transform_indices = @transform_4, window_bounds = array<i64: 1, 256, 8>}, {transform_indices = @transform_5, window_bounds = array<i64: 1, 1, 1, 8>}, {transform_indices = @transform_6, window_bounds = array<i64: 1, 1, 1, 8>}]} {
    %cst = arith.constant 0.000000e+00 : bf16
    %0 = vector.broadcast %cst : bf16 to vector<18x1x4xbf16>
    %c0 = arith.constant 0 : index
    %c0_0 = arith.constant 0 : index
    %c0_1 = arith.constant 0 : index
    %1 = vector.load %arg9[%c0, %c0_0, %c0_1] : memref<18x18x4xbf16, #tpu.memory_space<vmem>>, vector<18x1x4xbf16>
    tpu.vector_store %arg9[%c0, %c0_0, %c0_1], %0 {strides = array<i32>} : memref<18x18x4xbf16, #tpu.memory_space<vmem>>, vector<18x1x4xbf16>,
    %c0_2 = arith.constant 0 : index
    %c17 = arith.constant 17 : index
    %c0_3 = arith.constant 0 : index
    %2 = vector.load %arg9[%c0_2, %c17, %c0_3] : memref<18x18x4xbf16, #tpu.memory_space<vmem>>, vector<18x1x4xbf16>
    tpu.vector_store %arg9[%c0_2, %c17, %c0_3], %0 {strides = array<i32>} : memref<18x18x4xbf16, #tpu.memory_space<vmem>>, vector<18x1x4xbf16>,
    %c0_4 = arith.constant 0 : index
    %c0_5 = arith.constant 0 : index
    %c0_6 = arith.constant 0 : index
    %c0_7 = arith.constant 0 : index
    %3 = vector.load %arg2[%c0_4, %c0_5, %c0_6, %c0_7] : memref<1x16x16x4xbf16, #tpu.memory_space<vmem>>, vector<1x16x16x4xbf16>
    %4 = vector.shape_cast %3 : vector<1x16x16x4xbf16> to vector<16x16x4xbf16>
    %c1 = arith.constant 1 : index
    %c1_8 = arith.constant 1 : index
    %c0_9 = arith.constant 0 : index
    %5 = vector.load %arg9[%c1, %c1_8, %c0_9] : memref<18x18x4xbf16, #tpu.memory_space<vmem>>, vector<16x16x4xbf16>
    tpu.vector_store %arg9[%c1, %c1_8, %c0_9], %4 {strides = array<i32>} : memref<18x18x4xbf16, #tpu.memory_space<vmem>>, vector<16x16x4xbf16>,
    %c0_10 = arith.constant 0 : index
    %c0_11 = arith.constant 0 : index
    %c0_12 = arith.constant 0 : index
    %c0_13 = arith.constant 0 : index
    %6 = vector.load %arg3[%c0_10, %c0_11, %c0_12, %c0_13] : memref<1x1x16x4xbf16, #tpu.memory_space<vmem>>, vector<1x1x16x4xbf16>
    %7 = vector.shape_cast %6 : vector<1x1x16x4xbf16> to vector<1x16x4xbf16>
    %c0_i32 = arith.constant 0 : i32
    %8 = arith.cmpi sgt, %arg1, %c0_i32 : i32
    %9 = arith.extui %8 : i1 to i32
    %10 = arith.sitofp %9 : i32 to f32
    %11 = arith.truncf %10 : f32 to bf16
    %12 = vector.broadcast %11 : bf16 to vector<1x16x4xbf16>
    %13 = arith.mulf %7, %12 : vector<1x16x4xbf16>
    %c0_14 = arith.constant 0 : index
    %c1_15 = arith.constant 1 : index
    %c0_16 = arith.constant 0 : index
    %14 = vector.load %arg9[%c0_14, %c1_15, %c0_16] : memref<18x18x4xbf16, #tpu.memory_space<vmem>>, vector<1x16x4xbf16>
    tpu.vector_store %arg9[%c0_14, %c1_15, %c0_16], %13 {strides = array<i32>} : memref<18x18x4xbf16, #tpu.memory_space<vmem>>, vector<1x16x4xbf16>,
    %c0_17 = arith.constant 0 : index
    %c0_18 = arith.constant 0 : index
    %c0_19 = arith.constant 0 : index
    %c0_20 = arith.constant 0 : index
    %15 = vector.load %arg4[%c0_17, %c0_18, %c0_19, %c0_20] : memref<1x1x16x4xbf16, #tpu.memory_space<vmem>>, vector<1x1x16x4xbf16>
    %16 = vector.shape_cast %15 : vector<1x1x16x4xbf16> to vector<1x16x4xbf16>
    %c0_i32_21 = arith.constant 0 : i32
    %17 = arith.cmpi slt, %arg1, %c0_i32_21 : i32
    %18 = arith.extui %17 : i1 to i32
    %19 = arith.sitofp %18 : i32 to f32
    %20 = arith.truncf %19 : f32 to bf16
    %21 = vector.broadcast %20 : bf16 to vector<1x16x4xbf16>
    %22 = arith.mulf %16, %21 : vector<1x16x4xbf16>
    %c17_22 = arith.constant 17 : index
    %c1_23 = arith.constant 1 : index
    %c0_24 = arith.constant 0 : index
    %23 = vector.load %arg9[%c17_22, %c1_23, %c0_24] : memref<18x18x4xbf16, #tpu.memory_space<vmem>>, vector<1x16x4xbf16>
    tpu.vector_store %arg9[%c17_22, %c1_23, %c0_24], %22 {strides = array<i32>} : memref<18x18x4xbf16, #tpu.memory_space<vmem>>, vector<1x16x4xbf16>,
    %c0_25 = arith.constant 0 : index
    %c0_26 = arith.constant 0 : index
    %c0_27 = arith.constant 0 : index
    %24 = vector.load %arg9[%c0_25, %c0_26, %c0_27] : memref<18x18x4xbf16, #tpu.memory_space<vmem>>, vector<16x16x4xbf16>
    %25 = vector.shape_cast %24 : vector<16x16x4xbf16> to vector<256x4xbf16>
    %c0_28 = arith.constant 0 : index
    %c0_29 = arith.constant 0 : index
    %26 = vector.load %arg10[%c0_28, %c0_29] : memref<256x36xbf16, #tpu.memory_space<vmem>>, vector<256x4xbf16>
    tpu.vector_store %arg10[%c0_28, %c0_29], %25 {strides = array<i32>} : memref<256x36xbf16, #tpu.memory_space<vmem>>, vector<256x4xbf16>,
    %c0_30 = arith.constant 0 : index
    %c1_31 = arith.constant 1 : index
    %c0_32 = arith.constant 0 : index
    %27 = vector.load %arg9[%c0_30, %c1_31, %c0_32] : memref<18x18x4xbf16, #tpu.memory_space<vmem>>, vector<16x16x4xbf16>
    %28 = vector.shape_cast %27 : vector<16x16x4xbf16> to vector<256x4xbf16>
    %c0_33 = arith.constant 0 : index
    %c4 = arith.constant 4 : index
    %29 = vector.load %arg10[%c0_33, %c4] : memref<256x36xbf16, #tpu.memory_space<vmem>>, vector<256x4xbf16>
    tpu.vector_store %arg10[%c0_33, %c4], %28 {strides = array<i32>} : memref<256x36xbf16, #tpu.memory_space<vmem>>, vector<256x4xbf16>,
    %c0_34 = arith.constant 0 : index
    %c2 = arith.constant 2 : index
    %c0_35 = arith.constant 0 : index
    %30 = vector.load %arg9[%c0_34, %c2, %c0_35] : memref<18x18x4xbf16, #tpu.memory_space<vmem>>, vector<16x16x4xbf16>
    %31 = vector.shape_cast %30 : vector<16x16x4xbf16> to vector<256x4xbf16>
    %c0_36 = arith.constant 0 : index
    %c8 = arith.constant 8 : index
    %32 = vector.load %arg10[%c0_36, %c8] : memref<256x36xbf16, #tpu.memory_space<vmem>>, vector<256x4xbf16>
    tpu.vector_store %arg10[%c0_36, %c8], %31 {strides = array<i32>} : memref<256x36xbf16, #tpu.memory_space<vmem>>, vector<256x4xbf16>,
    %c1_37 = arith.constant 1 : index
    %c0_38 = arith.constant 0 : index
    %c0_39 = arith.constant 0 : index
    %33 = vector.load %arg9[%c1_37, %c0_38, %c0_39] : memref<18x18x4xbf16, #tpu.memory_space<vmem>>, vector<16x16x4xbf16>
    %34 = vector.shape_cast %33 : vector<16x16x4xbf16> to vector<256x4xbf16>
    %c0_40 = arith.constant 0 : index
    %c12 = arith.constant 12 : index
    %35 = vector.load %arg10[%c0_40, %c12] : memref<256x36xbf16, #tpu.memory_space<vmem>>, vector<256x4xbf16>
    tpu.vector_store %arg10[%c0_40, %c12], %34 {strides = array<i32>} : memref<256x36xbf16, #tpu.memory_space<vmem>>, vector<256x4xbf16>,
    %c1_41 = arith.constant 1 : index
    %c1_42 = arith.constant 1 : index
    %c0_43 = arith.constant 0 : index
    %36 = vector.load %arg9[%c1_41, %c1_42, %c0_43] : memref<18x18x4xbf16, #tpu.memory_space<vmem>>, vector<16x16x4xbf16>
    %37 = vector.shape_cast %36 : vector<16x16x4xbf16> to vector<256x4xbf16>
    %c0_44 = arith.constant 0 : index
    %c16 = arith.constant 16 : index
    %38 = vector.load %arg10[%c0_44, %c16] : memref<256x36xbf16, #tpu.memory_space<vmem>>, vector<256x4xbf16>
    tpu.vector_store %arg10[%c0_44, %c16], %37 {strides = array<i32>} : memref<256x36xbf16, #tpu.memory_space<vmem>>, vector<256x4xbf16>,
    %c1_45 = arith.constant 1 : index
    %c2_46 = arith.constant 2 : index
    %c0_47 = arith.constant 0 : index
    %39 = vector.load %arg9[%c1_45, %c2_46, %c0_47] : memref<18x18x4xbf16, #tpu.memory_space<vmem>>, vector<16x16x4xbf16>
    %40 = vector.shape_cast %39 : vector<16x16x4xbf16> to vector<256x4xbf16>
    %c0_48 = arith.constant 0 : index
    %c20 = arith.constant 20 : index
    %41 = vector.load %arg10[%c0_48, %c20] : memref<256x36xbf16, #tpu.memory_space<vmem>>, vector<256x4xbf16>
    tpu.vector_store %arg10[%c0_48, %c20], %40 {strides = array<i32>} : memref<256x36xbf16, #tpu.memory_space<vmem>>, vector<256x4xbf16>,
    %c2_49 = arith.constant 2 : index
    %c0_50 = arith.constant 0 : index
    %c0_51 = arith.constant 0 : index
    %42 = vector.load %arg9[%c2_49, %c0_50, %c0_51] : memref<18x18x4xbf16, #tpu.memory_space<vmem>>, vector<16x16x4xbf16>
    %43 = vector.shape_cast %42 : vector<16x16x4xbf16> to vector<256x4xbf16>
    %c0_52 = arith.constant 0 : index
    %c24 = arith.constant 24 : index
    %44 = vector.load %arg10[%c0_52, %c24] : memref<256x36xbf16, #tpu.memory_space<vmem>>, vector<256x4xbf16>
    tpu.vector_store %arg10[%c0_52, %c24], %43 {strides = array<i32>} : memref<256x36xbf16, #tpu.memory_space<vmem>>, vector<256x4xbf16>,
    %c2_53 = arith.constant 2 : index
    %c1_54 = arith.constant 1 : index
    %c0_55 = arith.constant 0 : index
    %45 = vector.load %arg9[%c2_53, %c1_54, %c0_55] : memref<18x18x4xbf16, #tpu.memory_space<vmem>>, vector<16x16x4xbf16>
    %46 = vector.shape_cast %45 : vector<16x16x4xbf16> to vector<256x4xbf16>
    %c0_56 = arith.constant 0 : index
    %c28 = arith.constant 28 : index
    %47 = vector.load %arg10[%c0_56, %c28] : memref<256x36xbf16, #tpu.memory_space<vmem>>, vector<256x4xbf16>
    tpu.vector_store %arg10[%c0_56, %c28], %46 {strides = array<i32>} : memref<256x36xbf16, #tpu.memory_space<vmem>>, vector<256x4xbf16>,
    %c2_57 = arith.constant 2 : index
    %c2_58 = arith.constant 2 : index
    %c0_59 = arith.constant 0 : index
    %48 = vector.load %arg9[%c2_57, %c2_58, %c0_59] : memref<18x18x4xbf16, #tpu.memory_space<vmem>>, vector<16x16x4xbf16>
    %49 = vector.shape_cast %48 : vector<16x16x4xbf16> to vector<256x4xbf16>
    %c0_60 = arith.constant 0 : index
    %c32 = arith.constant 32 : index
    %50 = vector.load %arg10[%c0_60, %c32] : memref<256x36xbf16, #tpu.memory_space<vmem>>, vector<256x4xbf16>
    tpu.vector_store %arg10[%c0_60, %c32], %49 {strides = array<i32>} : memref<256x36xbf16, #tpu.memory_space<vmem>>, vector<256x4xbf16>,
    %c0_61 = arith.constant 0 : index
    %c0_62 = arith.constant 0 : index
    %51 = vector.load %arg10[%c0_61, %c0_62] : memref<256x36xbf16, #tpu.memory_space<vmem>>, vector<256x36xbf16>
    %c0_63 = arith.constant 0 : index
    %c0_64 = arith.constant 0 : index
    %52 = vector.load %arg5[%c0_63, %c0_64] : memref<36x8xbf16, #tpu.memory_space<vmem>>, vector<36x8xbf16>
    %cst_65 = arith.constant dense<0.000000e+00> : vector<256x8xf32>
    %53 = tpu.matmul %51, %52, %cst_65 {dimension_numbers = #tpu.dot_dimension_numbers<[1], [0], [0], [1], [0, 0, 1, 1], [], []>} : vector<256x36xbf16>, vector<36x8xbf16>, vector<256x8xf32> -> vector<256x8xf32>
    %54 = arith.truncf %53 : vector<256x8xf32> to vector<256x8xbf16>
    %c0_66 = arith.constant 0 : index
    %c0_67 = arith.constant 0 : index
    %c0_68 = arith.constant 0 : index
    %55 = vector.load %arg6[%c0_66, %c0_67, %c0_68] : memref<1x256x8xbf16, #tpu.memory_space<vmem>>, vector<1x256x8xbf16>
    %56 = vector.shape_cast %55 : vector<1x256x8xbf16> to vector<256x8xbf16>
    %57 = vector.shape_cast %54 : vector<256x8xbf16> to vector<1x256x8xbf16>
    tpu.vector_store %arg6[%c0_66, %c0_67, %c0_68], %57 {strides = array<i32>} : memref<1x256x8xbf16, #tpu.memory_space<vmem>>, vector<1x256x8xbf16>,
    %cst_69 = arith.constant dense<0.000000e+00> : vector<8xf32>
    %58 = vector.multi_reduction <add>, %53, %cst_69 [0] : vector<256x8xf32> to vector<8xf32>
    %59 = vector.shape_cast %58 : vector<8xf32> to vector<1x8xf32>
    %c0_70 = arith.constant 0 : index
    %c0_71 = arith.constant 0 : index
    %c0_72 = arith.constant 0 : index
    %c0_73 = arith.constant 0 : index
    %60 = vector.load %arg7[%c0_70, %c0_71, %c0_72, %c0_73] : memref<1x1x1x8xf32, #tpu.memory_space<vmem>>, vector<1x1x1x8xf32>
    %61 = vector.shape_cast %60 : vector<1x1x1x8xf32> to vector<1x8xf32>
    %62 = vector.shape_cast %59 : vector<1x8xf32> to vector<1x1x1x8xf32>
    tpu.vector_store %arg7[%c0_70, %c0_71, %c0_72, %c0_73], %62 {strides = array<i32>} : memref<1x1x1x8xf32, #tpu.memory_space<vmem>>, vector<1x1x1x8xf32>,
    %63 = arith.mulf %53, %53 : vector<256x8xf32>
    %cst_74 = arith.constant dense<0.000000e+00> : vector<8xf32>
    %64 = vector.multi_reduction <add>, %63, %cst_74 [0] : vector<256x8xf32> to vector<8xf32>
    %65 = vector.shape_cast %64 : vector<8xf32> to vector<1x8xf32>
    %c0_75 = arith.constant 0 : index
    %c0_76 = arith.constant 0 : index
    %c0_77 = arith.constant 0 : index
    %c0_78 = arith.constant 0 : index
    %66 = vector.load %arg8[%c0_75, %c0_76, %c0_77, %c0_78] : memref<1x1x1x8xf32, #tpu.memory_space<vmem>>, vector<1x1x1x8xf32>
    %67 = vector.shape_cast %66 : vector<1x1x1x8xf32> to vector<1x8xf32>
    %68 = vector.shape_cast %65 : vector<1x8xf32> to vector<1x1x1x8xf32>
    tpu.vector_store %arg8[%c0_75, %c0_76, %c0_77, %c0_78], %68 {strides = array<i32>} : memref<1x1x1x8xf32, #tpu.memory_space<vmem>>, vector<1x1x1x8xf32>,
    return
  }
  func.func @transform_0(%arg0: i32, %arg1: i32) -> (i32, i32, i32, i32) {
    %c0_i32 = arith.constant 0 : i32
    %c0_i32_0 = arith.constant 0 : i32
    %c0_i32_1 = arith.constant 0 : i32
    return %arg0, %arg1, %c0_i32, %c0_i32_0 : i32, i32, i32, i32
  }
  func.func @transform_1(%arg0: i32, %arg1: i32) -> (i32, i32, i32, i32) {
    %c16_i32 = arith.constant 16 : i32
    %0 = arith.muli %arg1, %c16_i32 : i32
    %c1_i32 = arith.constant 1 : i32
    %1 = arith.subi %0, %c1_i32 : i32
    %c0_i32 = arith.constant 0 : i32
    %2 = arith.maxsi %1, %c0_i32 : i32
    %c0_i32_0 = arith.constant 0 : i32
    %c0_i32_1 = arith.constant 0 : i32
    %c0_i32_2 = arith.constant 0 : i32
    return %arg0, %2, %c0_i32_0, %c0_i32_1 : i32, i32, i32, i32
  }
  func.func @transform_2(%arg0: i32, %arg1: i32) -> (i32, i32, i32, i32) {
    %c1_i32 = arith.constant 1 : i32
    %0 = arith.addi %arg1, %c1_i32 : i32
    %c16_i32 = arith.constant 16 : i32
    %1 = arith.muli %0, %c16_i32 : i32
    %c15_i32 = arith.constant 15 : i32
    %2 = arith.minsi %1, %c15_i32 : i32
    %c0_i32 = arith.constant 0 : i32
    %c0_i32_0 = arith.constant 0 : i32
    %c0_i32_1 = arith.constant 0 : i32
    return %arg0, %2, %c0_i32, %c0_i32_0 : i32, i32, i32, i32
  }
  func.func @transform_3(%arg0: i32, %arg1: i32) -> (i32, i32) {
    %c0_i32 = arith.constant 0 : i32
    %c0_i32_0 = arith.constant 0 : i32
    %c0_i32_1 = arith.constant 0 : i32
    return %c0_i32, %c0_i32_0 : i32, i32
  }
  func.func @transform_4(%arg0: i32, %arg1: i32) -> (i32, i32, i32) {
    %c0_i32 = arith.constant 0 : i32
    %c0_i32_0 = arith.constant 0 : i32
    return %arg0, %arg1, %c0_i32 : i32, i32, i32
  }
  func.func @transform_5(%arg0: i32, %arg1: i32) -> (i32, i32, i32, i32) {
    %c0_i32 = arith.constant 0 : i32
    %c0_i32_0 = arith.constant 0 : i32
    %c0_i32_1 = arith.constant 0 : i32
    return %arg0, %arg1, %c0_i32, %c0_i32_0 : i32, i32, i32, i32
  }
  func.func @transform_6(%arg0: i32, %arg1: i32) -> (i32, i32, i32, i32) {
    %c0_i32 = arith.constant 0 : i32
    %c0_i32_0 = arith.constant 0 : i32
    %c0_i32_1 = arith.constant 0 : i32
    return %arg0, %arg1, %c0_i32, %c0_i32_0 : i32, i32, i32, i32
  }
}

module attributes {stable_mosaic.version = 11 : i64} {
  func.func @kernel(%arg0: i32, %arg1: memref<2x16x8x16xbf16, #tpu.memory_space<vmem>>, %arg2: memref<1x8xf32, #tpu.memory_space<vmem>>, %arg3: memref<1x8xf32, #tpu.memory_space<vmem>>, %arg4: memref<2x8x8x8xf32, #tpu.memory_space<vmem>>) attributes {dimension_semantics = [#tpu.dimension_semantics<parallel>], iteration_bounds = array<i64: 1>, scalar_prefetch = 0 : i64, scratch_operands = 0 : i64, tpu.core_type = #tpu.core_type<tc>, window_params = [{transform_indices = @transform_0, window_bounds = array<i64: 2, 16, 8, 16>}, {pipeline_mode = #tpu.pipeline_mode<synchronous>, transform_indices = @transform_1, window_bounds = array<i64: 1, 8>}, {pipeline_mode = #tpu.pipeline_mode<synchronous>, transform_indices = @transform_2, window_bounds = array<i64: 1, 8>}, {transform_indices = @transform_3, window_bounds = array<i64: 2, 8, 8, 8>}]} {
    %c0 = arith.constant 0 : index
    %c0_0 = arith.constant 0 : index
    %0 = vector.load %arg2[%c0, %c0_0] : memref<1x8xf32, #tpu.memory_space<vmem>>, vector<1x8xf32>
    %c0_1 = arith.constant 0 : index
    %c0_2 = arith.constant 0 : index
    %1 = vector.load %arg3[%c0_1, %c0_2] : memref<1x8xf32, #tpu.memory_space<vmem>>, vector<1x8xf32>
    %c0_3 = arith.constant 0 : index
    %c0_4 = arith.constant 0 : index
    %c0_5 = arith.constant 0 : index
    %c0_6 = arith.constant 0 : index
    %2 = vector.load %arg1[%c0_3, %c0_4, %c0_5, %c0_6] : memref<2x16x8x16xbf16, #tpu.memory_space<vmem>>, vector<2x16x8x16xbf16>
    %3 = arith.extf %2 : vector<2x16x8x16xbf16> to vector<2x16x8x16xf32>
    %4 = vector.extract_strided_slice %3 {offsets = [0, 0, 0, 0], sizes = [2, 16, 8, 8], strides = [1, 1, 1, 1]} : vector<2x16x8x16xf32> to vector<2x16x8x8xf32>
    %5 = vector.shape_cast %0 : vector<1x8xf32> to vector<1x1x1x8xf32>
    %6 = vector.broadcast %5 : vector<1x1x1x8xf32> to vector<2x16x8x8xf32>
    %7 = arith.mulf %4, %6 : vector<2x16x8x8xf32>
    %8 = vector.shape_cast %1 : vector<1x8xf32> to vector<1x1x1x8xf32>
    %9 = vector.broadcast %8 : vector<1x1x1x8xf32> to vector<2x16x8x8xf32>
    %10 = arith.addf %7, %9 : vector<2x16x8x8xf32>
    %cst = arith.constant 0.000000e+00 : f32
    %11 = vector.broadcast %cst : f32 to vector<2x16x8x8xf32>
    %12 = arith.maximumf %10, %11 : vector<2x16x8x8xf32>
    %13 = vector.extract_strided_slice %3 {offsets = [0, 0, 0, 8], sizes = [2, 16, 8, 8], strides = [1, 1, 1, 1]} : vector<2x16x8x16xf32> to vector<2x16x8x8xf32>
    %14 = vector.shape_cast %0 : vector<1x8xf32> to vector<1x1x1x8xf32>
    %15 = vector.broadcast %14 : vector<1x1x1x8xf32> to vector<2x16x8x8xf32>
    %16 = arith.mulf %13, %15 : vector<2x16x8x8xf32>
    %17 = vector.shape_cast %1 : vector<1x8xf32> to vector<1x1x1x8xf32>
    %18 = vector.broadcast %17 : vector<1x1x1x8xf32> to vector<2x16x8x8xf32>
    %19 = arith.addf %16, %18 : vector<2x16x8x8xf32>
    %cst_7 = arith.constant 0.000000e+00 : f32
    %20 = vector.broadcast %cst_7 : f32 to vector<2x16x8x8xf32>
    %21 = arith.maximumf %19, %20 : vector<2x16x8x8xf32>
    %22 = arith.addf %12, %21 : vector<2x16x8x8xf32>
    %23 = vector.shape_cast %22 : vector<2x16x8x8xf32> to vector<2x8x2x8x8xf32>
    %24 = vector.extract_strided_slice %23 {offsets = [0, 0, 0, 0, 0], sizes = [2, 8, 1, 8, 8], strides = [1, 1, 1, 1, 1]} : vector<2x8x2x8x8xf32> to vector<2x8x1x8x8xf32>
    %25 = vector.shape_cast %24 : vector<2x8x1x8x8xf32> to vector<2x8x8x8xf32>
    %26 = vector.extract_strided_slice %23 {offsets = [0, 0, 1, 0, 0], sizes = [2, 8, 1, 8, 8], strides = [1, 1, 1, 1, 1]} : vector<2x8x2x8x8xf32> to vector<2x8x1x8x8xf32>
    %27 = vector.shape_cast %26 : vector<2x8x1x8x8xf32> to vector<2x8x8x8xf32>
    %28 = arith.addf %25, %27 : vector<2x8x8x8xf32>
    %cst_8 = arith.constant 2.500000e-01 : f32
    %29 = vector.broadcast %cst_8 : f32 to vector<2x8x8x8xf32>
    %30 = arith.mulf %28, %29 : vector<2x8x8x8xf32>
    %c0_9 = arith.constant 0 : index
    %c0_10 = arith.constant 0 : index
    %c0_11 = arith.constant 0 : index
    %c0_12 = arith.constant 0 : index
    %31 = vector.load %arg4[%c0_9, %c0_10, %c0_11, %c0_12] : memref<2x8x8x8xf32, #tpu.memory_space<vmem>>, vector<2x8x8x8xf32>
    tpu.vector_store %arg4[%c0_9, %c0_10, %c0_11, %c0_12], %30 {strides = array<i32>} : memref<2x8x8x8xf32, #tpu.memory_space<vmem>>, vector<2x8x8x8xf32>,
    return
  }
  func.func @transform_0(%arg0: i32) -> (i32, i32, i32, i32) {
    %c0_i32 = arith.constant 0 : i32
    %c0_i32_0 = arith.constant 0 : i32
    %c0_i32_1 = arith.constant 0 : i32
    %c0_i32_2 = arith.constant 0 : i32
    return %arg0, %c0_i32, %c0_i32_0, %c0_i32_1 : i32, i32, i32, i32
  }
  func.func @transform_1(%arg0: i32) -> (i32, i32) {
    %c0_i32 = arith.constant 0 : i32
    %c0_i32_0 = arith.constant 0 : i32
    %c0_i32_1 = arith.constant 0 : i32
    return %c0_i32, %c0_i32_0 : i32, i32
  }
  func.func @transform_2(%arg0: i32) -> (i32, i32) {
    %c0_i32 = arith.constant 0 : i32
    %c0_i32_0 = arith.constant 0 : i32
    %c0_i32_1 = arith.constant 0 : i32
    return %c0_i32, %c0_i32_0 : i32, i32
  }
  func.func @transform_3(%arg0: i32) -> (i32, i32, i32, i32) {
    %c0_i32 = arith.constant 0 : i32
    %c0_i32_0 = arith.constant 0 : i32
    %c0_i32_1 = arith.constant 0 : i32
    %c0_i32_2 = arith.constant 0 : i32
    return %arg0, %c0_i32, %c0_i32_0, %c0_i32_1 : i32, i32, i32, i32
  }
}

</mosaic_0001>

<llo_original>
// kernel: conv_block_forward.3
$region0: #{conv_block_forward.3}
  #allocation0 [shape = 'u32[]', space=smem, size = 0x4, offset = 0x4, fixed_abs, tag = 'smem constant byte address 0x4 - core index']
  #allocation1 [shape = 'u32[72,128]{1,0:T(1,128)}', space=vmem, size = 0x9000, scoped, tag = 'internal scratch']
  %s0 = inlined_call_operand.vmem [shape: bf16[2,16,8,16], index: 0, kind: input, shape index: {}]
  %s1 = inlined_call_operand.vmem [shape: f32[1,8], index: 1, kind: input, shape index: {}]
  %s2 = inlined_call_operand.vmem [shape: f32[1,8], index: 2, kind: input, shape index: {}]
  %s3 = inlined_call_operand.vmem [shape: f32[2,8,8,8], index: 3, kind: output, shape index: {}]
  %s4 = sld [smem:[#allocation0]]
  $region22: #{conv_block_forward.3} parent=0
    _
  %s6 = ssub.s32 1, %s4
  %s7 = scalar_select 0, %s6, %s4
  // Predicated region
  $region2: #{conv_block_forward.3} parent=0 // pred_check
    _
  $region3: #{conv_block_forward.3} parent=0 // pred_check_branch
    %9 = sbr.rel (0) target = $region5
  $region4: #{conv_block_forward.3} parent=0 // pred_region
    _
  $region5: #{conv_block_forward.3} parent=0 // pred_fallthru
    _
  // Predicated region
  $region6: #{conv_block_forward.3} parent=0 // pred_check
    _
  $region7: #{conv_block_forward.3} parent=0 // pred_check_branch
    %11 = sbr.rel (0) target = $region9
  $region8: #{conv_block_forward.3} parent=0 // pred_region
    _
  $region9: #{conv_block_forward.3} parent=0 // pred_fallthru
    _
  // Predicated region
  $region10: #{conv_block_forward.3} parent=0 // pred_check
    _
  $region11: #{conv_block_forward.3} parent=0 // pred_check_branch
    %13 = sbr.rel (0) target = $region13
  $region12: #{conv_block_forward.3} parent=0 // pred_region
    _
  $region13: #{conv_block_forward.3} parent=0 // pred_fallthru
    _
  %v14 = vld [vmem:[%s1] sm:$0x1]
  %v15 = vld [vmem:[%s2] sm:$0x1]
  %v16 = vld [vmem:[%s0] sm:$0xf]
  %v17 = vld [vmem:[%s0 + $0x4] sm:$0xf]
  %v18 = vld [vmem:[%s0 + $0x8] sm:$0xf]
  %v19 = vld [vmem:[%s0 + $0xc] sm:$0xf]
  %v20 = vld [vmem:[%s0 + $0x10] sm:$0xf]
  %v21 = vld [vmem:[%s0 + $0x14] sm:$0xf]
  %v22 = vld [vmem:[%s0 + $0x18] sm:$0xf]
  %v23 = vld [vmem:[%s0 + $0x1c] sm:$0xf]
  %v24 = vld [vmem:[%s0 + $0x20] sm:$0xf]
  %v25 = vld [vmem:[%s0 + $0x24] sm:$0xf]
  %v26 = vld [vmem:[%s0 + $0x28] sm:$0xf]
  %v27 = vld [vmem:[%s0 + $0x2c] sm:$0xf]
  %v28 = vld [vmem:[%s0 + $0x30] sm:$0xf]
  %v29 = vld [vmem:[%s0 + $0x34] sm:$0xf]
  %v30 = vld [vmem:[%s0 + $0x38] sm:$0xf]
  %v31 = vld [vmem:[%s0 + $0x3c] sm:$0xf]
  %v32 = vld [vmem:[%s0 + $0x40] sm:$0xf]
  %v33 = vld [vmem:[%s0 + $0x44] sm:$0xf]
  %v34 = vld [vmem:[%s0 + $0x48] sm:$0xf]
  %v35 = vld [vmem:[%s0 + $0x4c] sm:$0xf]
  %v36 = vld [vmem:[%s0 + $0x50] sm:$0xf]
  %v37 = vld [vmem:[%s0 + $0x54] sm:$0xf]
  %v38 = vld [vmem:[%s0 + $0x58] sm:$0xf]
  %v39 = vld [vmem:[%s0 + $0x5c] sm:$0xf]
  %v40 = vld [vmem:[%s0 + $0x60] sm:$0xf]
  %v41 = vld [vmem:[%s0 + $0x64] sm:$0xf]
  %v42 = vld [vmem:[%s0 + $0x68] sm:$0xf]
  %v43 = vld [vmem:[%s0 + $0x6c] sm:$0xf]
  %v44 = vld [vmem:[%s0 + $0x70] sm:$0xf]
  %v45 = vld [vmem:[%s0 + $0x74] sm:$0xf]
  %v46 = vld [vmem:[%s0 + $0x78] sm:$0xf]
  %v47 = vld [vmem:[%s0 + $0x7c] sm:$0xf]
  %v48 = vunpack.c.l.bf16 %v16
  %v49 = vunpack.c.l.bf16 %v17
  %v50 = vunpack.c.l.bf16 %v18
  %v51 = vunpack.c.l.bf16 %v19
  %v52 = vunpack.c.l.bf16 %v20
  %v53 = vunpack.c.l.bf16 %v21
  %v54 = vunpack.c.l.bf16 %v22
  %v55 = vunpack.c.l.bf16 %v23
  %v56 = vunpack.c.l.bf16 %v24
  %v57 = vunpack.c.l.bf16 %v25
  %v58 = vunpack.c.l.bf16 %v26
  %v59 = vunpack.c.l.bf16 %v27
  %v60 = vunpack.c.l.bf16 %v28
  %v61 = vunpack.c.l.bf16 %v29
  %v62 = vunpack.c.l.bf16 %v30
  %v63 = vunpack.c.l.bf16 %v31
  %v64 = vunpack.c.l.bf16 %v32
  %v65 = vunpack.c.l.bf16 %v33
  %v66 = vunpack.c.l.bf16 %v34
  %v67 = vunpack.c.l.bf16 %v35
  %v68 = vunpack.c.l.bf16 %v36
  %v69 = vunpack.c.l.bf16 %v37
  %v70 = vunpack.c.l.bf16 %v38
  %v71 = vunpack.c.l.bf16 %v39
  %v72 = vunpack.c.l.bf16 %v40
  %v73 = vunpack.c.l.bf16 %v41
  %v74 = vunpack.c.l.bf16 %v42
  %v75 = vunpack.c.l.bf16 %v43
  %v76 = vunpack.c.l.bf16 %v44
  %v77 = vunpack.c.l.bf16 %v45
  %v78 = vunpack.c.l.bf16 %v46
  %v79 = vunpack.c.l.bf16 %v47
  %v81 = vperm.slane %v14, 0
  %v83 = vmul.f32 %v48, %v81
  %v84 = vmul.f32 %v49, %v81
  %v85 = vmul.f32 %v50, %v81
  %v86 = vmul.f32 %v51, %v81
  %v87 = vmul.f32 %v52, %v81
  %v88 = vmul.f32 %v53, %v81
  %v89 = vmul.f32 %v54, %v81
  %v90 = vmul.f32 %v55, %v81
  %v91 = vmul.f32 %v56, %v81
  %v92 = vmul.f32 %v57, %v81
  %v93 = vmul.f32 %v58, %v81
  %v94 = vmul.f32 %v59, %v81
  %v95 = vmul.f32 %v60, %v81
  %v96 = vmul.f32 %v61, %v81
  %v97 = vmul.f32 %v62, %v81
  %v98 = vmul.f32 %v63, %v81
  %v99 = vmul.f32 %v64, %v81
  %v100 = vmul.f32 %v65, %v81
  %v101 = vmul.f32 %v66, %v81
  %v102 = vmul.f32 %v67, %v81
  %v103 = vmul.f32 %v68, %v81
  %v104 = vmul.f32 %v69, %v81
  %v105 = vmul.f32 %v70, %v81
  %v106 = vmul.f32 %v71, %v81
  %v107 = vmul.f32 %v72, %v81
  %v108 = vmul.f32 %v73, %v81
  %v109 = vmul.f32 %v74, %v81
  %v110 = vmul.f32 %v75, %v81
  %v111 = vmul.f32 %v76, %v81
  %v112 = vmul.f32 %v77, %v81
  %v113 = vmul.f32 %v78, %v81
  %v114 = vmul.f32 %v79, %v81
  %v116 = vperm.slane %v15, 0
  %v118 = vadd.f32 %v83, %v116
  %v119 = vadd.f32 %v84, %v116
  %v120 = vadd.f32 %v85, %v116
  %v121 = vadd.f32 %v86, %v116
  %v122 = vadd.f32 %v87, %v116
  %v123 = vadd.f32 %v88, %v116
  %v124 = vadd.f32 %v89, %v116
  %v125 = vadd.f32 %v90, %v116
  %v126 = vadd.f32 %v91, %v116
  %v127 = vadd.f32 %v92, %v116
  %v128 = vadd.f32 %v93, %v116
  %v129 = vadd.f32 %v94, %v116
  %v130 = vadd.f32 %v95, %v116
  %v131 = vadd.f32 %v96, %v116
  %v132 = vadd.f32 %v97, %v116
  %v133 = vadd.f32 %v98, %v116
  %v134 = vadd.f32 %v99, %v116
  %v135 = vadd.f32 %v100, %v116
  %v136 = vadd.f32 %v101, %v116
  %v137 = vadd.f32 %v102, %v116
  %v138 = vadd.f32 %v103, %v116
  %v139 = vadd.f32 %v104, %v116
  %v140 = vadd.f32 %v105, %v116
  %v141 = vadd.f32 %v106, %v116
  %v142 = vadd.f32 %v107, %v116
  %v143 = vadd.f32 %v108, %v116
  %v144 = vadd.f32 %v109, %v116
  %v145 = vadd.f32 %v110, %v116
  %v146 = vadd.f32 %v111, %v116
  %v147 = vadd.f32 %v112, %v116
  %v148 = vadd.f32 %v113, %v116
  %v149 = vadd.f32 %v114, %v116
  %v150 = vmax.f32 %v118, 0.0
  %v151 = vmax.f32 %v119, 0.0
  %v152 = vmax.f32 %v120, 0.0
  %v153 = vmax.f32 %v121, 0.0
  %v154 = vmax.f32 %v122, 0.0
  %v155 = vmax.f32 %v123, 0.0
  %v156 = vmax.f32 %v124, 0.0
  %v157 = vmax.f32 %v125, 0.0
  %v158 = vmax.f32 %v126, 0.0
  %v159 = vmax.f32 %v127, 0.0
  %v160 = vmax.f32 %v128, 0.0
  %v161 = vmax.f32 %v129, 0.0
  %v162 = vmax.f32 %v130, 0.0
  %v163 = vmax.f32 %v131, 0.0
  %v164 = vmax.f32 %v132, 0.0
  %v165 = vmax.f32 %v133, 0.0
  %v166 = vmax.f32 %v134, 0.0
  %v167 = vmax.f32 %v135, 0.0
  %v168 = vmax.f32 %v136, 0.0
  %v169 = vmax.f32 %v137, 0.0
  %v170 = vmax.f32 %v138, 0.0
  %v171 = vmax.f32 %v139, 0.0
  %v172 = vmax.f32 %v140, 0.0
  %v173 = vmax.f32 %v141, 0.0
  %v174 = vmax.f32 %v142, 0.0
  %v175 = vmax.f32 %v143, 0.0
  %v176 = vmax.f32 %v144, 0.0
  %v177 = vmax.f32 %v145, 0.0
  %v178 = vmax.f32 %v146, 0.0
  %v179 = vmax.f32 %v147, 0.0
  %v180 = vmax.f32 %v148, 0.0
  %v181 = vmax.f32 %v149, 0.0
  %182 = vrot.lane.b32.xlu0 %v81, 8
  %v183 = vpop.permute.xlu0 %182
  %v185 = vmul.f32 %v48, %v183
  %v186 = vmul.f32 %v49, %v183
  %v187 = vmul.f32 %v50, %v183
  %v188 = vmul.f32 %v51, %v183
  %v189 = vmul.f32 %v52, %v183
  %v190 = vmul.f32 %v53, %v183
  %v191 = vmul.f32 %v54, %v183
  %v192 = vmul.f32 %v55, %v183
  %v193 = vmul.f32 %v56, %v183
  %v194 = vmul.f32 %v57, %v183
  %v195 = vmul.f32 %v58, %v183
  %v196 = vmul.f32 %v59, %v183
  %v197 = vmul.f32 %v60, %v183
  %v198 = vmul.f32 %v61, %v183
  %v199 = vmul.f32 %v62, %v183
  %v200 = vmul.f32 %v63, %v183
  %v201 = vmul.f32 %v64, %v183
  %v202 = vmul.f32 %v65, %v183
  %v203 = vmul.f32 %v66, %v183
  %v204 = vmul.f32 %v67, %v183
  %v205 = vmul.f32 %v68, %v183
  %v206 = vmul.f32 %v69, %v183
  %v207 = vmul.f32 %v70, %v183
  %v208 = vmul.f32 %v71, %v183
  %v209 = vmul.f32 %v72, %v183
  %v210 = vmul.f32 %v73, %v183
  %v211 = vmul.f32 %v74, %v183
  %v212 = vmul.f32 %v75, %v183
  %v213 = vmul.f32 %v76, %v183
  %v214 = vmul.f32 %v77, %v183
  %v215 = vmul.f32 %v78, %v183
  %v216 = vmul.f32 %v79, %v183
  %217 = vrot.lane.b32.xlu0 %v116, 8
  %v218 = vpop.permute.xlu0 %217
  %v220 = vadd.f32 %v185, %v218
  %v221 = vadd.f32 %v186, %v218
  %v222 = vadd.f32 %v187, %v218
  %v223 = vadd.f32 %v188, %v218
  %v224 = vadd.f32 %v189, %v218
  %v225 = vadd.f32 %v190, %v218
  %v226 = vadd.f32 %v191, %v218
  %v227 = vadd.f32 %v192, %v218
  %v228 = vadd.f32 %v193, %v218
  %v229 = vadd.f32 %v194, %v218
  %v230 = vadd.f32 %v195, %v218
  %v231 = vadd.f32 %v196, %v218
  %v232 = vadd.f32 %v197, %v218
  %v233 = vadd.f32 %v198, %v218
  %v234 = vadd.f32 %v199, %v218
  %v235 = vadd.f32 %v200, %v218
  %v236 = vadd.f32 %v201, %v218
  %v237 = vadd.f32 %v202, %v218
  %v238 = vadd.f32 %v203, %v218
  %v239 = vadd.f32 %v204, %v218
  %v240 = vadd.f32 %v205, %v218
  %v241 = vadd.f32 %v206, %v218
  %v242 = vadd.f32 %v207, %v218
  %v243 = vadd.f32 %v208, %v218
  %v244 = vadd.f32 %v209, %v218
  %v245 = vadd.f32 %v210, %v218
  %v246 = vadd.f32 %v211, %v218
  %v247 = vadd.f32 %v212, %v218
  %v248 = vadd.f32 %v213, %v218
  %v249 = vadd.f32 %v214, %v218
  %v250 = vadd.f32 %v215, %v218
  %v251 = vadd.f32 %v216, %v218
  %v252 = vmax.f32 %v220, 0.0
  %v253 = vmax.f32 %v221, 0.0
  %v254 = vmax.f32 %v222, 0.0
  %v255 = vmax.f32 %v223, 0.0
  %v256 = vmax.f32 %v224, 0.0
  %v257 = vmax.f32 %v225, 0.0
  %v258 = vmax.f32 %v226, 0.0
  %v259 = vmax.f32 %v227, 0.0
  %v260 = vmax.f32 %v228, 0.0
  %v261 = vmax.f32 %v229, 0.0
  %v262 = vmax.f32 %v230, 0.0
  %v263 = vmax.f32 %v231, 0.0
  %v264 = vmax.f32 %v232, 0.0
  %v265 = vmax.f32 %v233, 0.0
  %v266 = vmax.f32 %v234, 0.0
  %v267 = vmax.f32 %v235, 0.0
  %v268 = vmax.f32 %v236, 0.0
  %v269 = vmax.f32 %v237, 0.0
  %v270 = vmax.f32 %v238, 0.0
  %v271 = vmax.f32 %v239, 0.0
  %v272 = vmax.f32 %v240, 0.0
  %v273 = vmax.f32 %v241, 0.0
  %v274 = vmax.f32 %v242, 0.0
  %v275 = vmax.f32 %v243, 0.0
  %v276 = vmax.f32 %v244, 0.0
  %v277 = vmax.f32 %v245, 0.0
  %v278 = vmax.f32 %v246, 0.0
  %v279 = vmax.f32 %v247, 0.0
  %v280 = vmax.f32 %v248, 0.0
  %v281 = vmax.f32 %v249, 0.0
  %v282 = vmax.f32 %v250, 0.0
  %v283 = vmax.f32 %v251, 0.0
  %316 = vrot.lane.b32.xlu0 %v252, 120
  %v317 = vpop.permute.xlu0 %316
  %318 = vrot.lane.b32.xlu0 %v253, 120
  %v319 = vpop.permute.xlu0 %318
  %320 = vrot.lane.b32.xlu0 %v254, 120
  %v321 = vpop.permute.xlu0 %320
  %322 = vrot.lane.b32.xlu0 %v255, 120
  %v323 = vpop.permute.xlu0 %322
  %324 = vrot.lane.b32.xlu0 %v256, 120
  %v325 = vpop.permute.xlu0 %324
  %326 = vrot.lane.b32.xlu0 %v257, 120
  %v327 = vpop.permute.xlu0 %326
  %328 = vrot.lane.b32.xlu0 %v258, 120
  %v329 = vpop.permute.xlu0 %328
  %330 = vrot.lane.b32.xlu0 %v259, 120
  %v331 = vpop.permute.xlu0 %330
  %332 = vrot.lane.b32.xlu0 %v260, 120
  %v333 = vpop.permute.xlu0 %332
  %334 = vrot.lane.b32.xlu0 %v261, 120
  %v335 = vpop.permute.xlu0 %334
  %336 = vrot.lane.b32.xlu0 %v262, 120
  %v337 = vpop.permute.xlu0 %336
  %338 = vrot.lane.b32.xlu0 %v263, 120
  %v339 = vpop.permute.xlu0 %338
  %340 = vrot.lane.b32.xlu0 %v264, 120
  %v341 = vpop.permute.xlu0 %340
  %342 = vrot.lane.b32.xlu0 %v265, 120
  %v343 = vpop.permute.xlu0 %342
  %344 = vrot.lane.b32.xlu0 %v266, 120
  %v345 = vpop.permute.xlu0 %344
  %346 = vrot.lane.b32.xlu0 %v267, 120
  %v347 = vpop.permute.xlu0 %346
  %348 = vrot.lane.b32.xlu0 %v268, 120
  %v349 = vpop.permute.xlu0 %348
  %350 = vrot.lane.b32.xlu0 %v269, 120
  %v351 = vpop.permute.xlu0 %350
  %352 = vrot.lane.b32.xlu0 %v270, 120
  %v353 = vpop.permute.xlu0 %352
  %354 = vrot.lane.b32.xlu0 %v271, 120
  %v355 = vpop.permute.xlu0 %354
  %356 = vrot.lane.b32.xlu0 %v272, 120
  %v357 = vpop.permute.xlu0 %356
  %358 = vrot.lane.b32.xlu0 %v273, 120
  %v359 = vpop.permute.xlu0 %358
  %360 = vrot.lane.b32.xlu0 %v274, 120
  %v361 = vpop.permute.xlu0 %360
  %362 = vrot.lane.b32.xlu0 %v275, 120
  %v363 = vpop.permute.xlu0 %362
  %364 = vrot.lane.b32.xlu0 %v276, 120
  %v365 = vpop.permute.xlu0 %364
  %366 = vrot.lane.b32.xlu0 %v277, 120
  %v367 = vpop.permute.xlu0 %366
  %368 = vrot.lane.b32.xlu0 %v278, 120
  %v369 = vpop.permute.xlu0 %368
  %370 = vrot.lane.b32.xlu0 %v279, 120
  %v371 = vpop.permute.xlu0 %370
  %372 = vrot.lane.b32.xlu0 %v280, 120
  %v373 = vpop.permute.xlu0 %372
  %374 = vrot.lane.b32.xlu0 %v281, 120
  %v375 = vpop.permute.xlu0 %374
  %376 = vrot.lane.b32.xlu0 %v282, 120
  %v377 = vpop.permute.xlu0 %376
  %378 = vrot.lane.b32.xlu0 %v283, 120
  %v379 = vpop.permute.xlu0 %378
  %v412 = vadd.f32 %v150, %v317
  %v413 = vadd.f32 %v151, %v319
  %v414 = vadd.f32 %v152, %v321
  %v415 = vadd.f32 %v153, %v323
  %v416 = vadd.f32 %v154, %v325
  %v417 = vadd.f32 %v155, %v327
  %v418 = vadd.f32 %v156, %v329
  %v419 = vadd.f32 %v157, %v331
  %v420 = vadd.f32 %v158, %v333
  %v421 = vadd.f32 %v159, %v335
  %v422 = vadd.f32 %v160, %v337
  %v423 = vadd.f32 %v161, %v339
  %v424 = vadd.f32 %v162, %v341
  %v425 = vadd.f32 %v163, %v343
  %v426 = vadd.f32 %v164, %v345
  %v427 = vadd.f32 %v165, %v347
  %v428 = vadd.f32 %v166, %v349
  %v429 = vadd.f32 %v167, %v351
  %v430 = vadd.f32 %v168, %v353
  %v431 = vadd.f32 %v169, %v355
  %v432 = vadd.f32 %v170, %v357
  %v433 = vadd.f32 %v171, %v359
  %v434 = vadd.f32 %v172, %v361
  %v435 = vadd.f32 %v173, %v363
  %v436 = vadd.f32 %v174, %v365
  %v437 = vadd.f32 %v175, %v367
  %v438 = vadd.f32 %v176, %v369
  %v439 = vadd.f32 %v177, %v371
  %v440 = vadd.f32 %v178, %v373
  %v441 = vadd.f32 %v179, %v375
  %v442 = vadd.f32 %v180, %v377
  %v443 = vadd.f32 %v181, %v379
  %v444 = vadd.f32 %v412, %v413
  %v445 = vadd.f32 %v414, %v415
  %v446 = vadd.f32 %v416, %v417
  %v447 = vadd.f32 %v418, %v419
  %v448 = vadd.f32 %v420, %v421
  %v449 = vadd.f32 %v422, %v423
  %v450 = vadd.f32 %v424, %v425
  %v451 = vadd.f32 %v426, %v427
  %v452 = vadd.f32 %v428, %v429
  %v453 = vadd.f32 %v430, %v431
  %v454 = vadd.f32 %v432, %v433
  %v455 = vadd.f32 %v434, %v435
  %v456 = vadd.f32 %v436, %v437
  %v457 = vadd.f32 %v438, %v439
  %v458 = vadd.f32 %v440, %v441
  %v459 = vadd.f32 %v442, %v443
  %v460 = vmul.f32 %v444, 0.25
  %v461 = vmul.f32 %v445, 0.25
  %v462 = vmul.f32 %v446, 0.25
  %v463 = vmul.f32 %v447, 0.25
  %v464 = vmul.f32 %v448, 0.25
  %v465 = vmul.f32 %v449, 0.25
  %v466 = vmul.f32 %v450, 0.25
  %v467 = vmul.f32 %v451, 0.25
  %v468 = vmul.f32 %v452, 0.25
  %v469 = vmul.f32 %v453, 0.25
  %v470 = vmul.f32 %v454, 0.25
  %v471 = vmul.f32 %v455, 0.25
  %v472 = vmul.f32 %v456, 0.25
  %v473 = vmul.f32 %v457, 0.25
  %v474 = vmul.f32 %v458, 0.25
  %v475 = vmul.f32 %v459, 0.25
  %vm476 = vcmask 64512
  %477 = vst.msk [vmem:[%s3] sm:$0xff] %vm476, %v460
  %478 = vst.msk [vmem:[%s3 + $0x8] sm:$0xff] %vm476, %v461
  %479 = vst.msk [vmem:[%s3 + $0x10] sm:$0xff] %vm476, %v462
  %480 = vst.msk [vmem:[%s3 + $0x18] sm:$0xff] %vm476, %v463
  %481 = vst.msk [vmem:[%s3 + $0x20] sm:$0xff] %vm476, %v464
  %482 = vst.msk [vmem:[%s3 + $0x28] sm:$0xff] %vm476, %v465
  %483 = vst.msk [vmem:[%s3 + $0x30] sm:$0xff] %vm476, %v466
  %484 = vst.msk [vmem:[%s3 + $0x38] sm:$0xff] %vm476, %v467
  %485 = vst.msk [vmem:[%s3 + $0x40] sm:$0xff] %vm476, %v468
  %486 = vst.msk [vmem:[%s3 + $0x48] sm:$0xff] %vm476, %v469
  %487 = vst.msk [vmem:[%s3 + $0x50] sm:$0xff] %vm476, %v470
  %488 = vst.msk [vmem:[%s3 + $0x58] sm:$0xff] %vm476, %v471
  %489 = vst.msk [vmem:[%s3 + $0x60] sm:$0xff] %vm476, %v472
  %490 = vst.msk [vmem:[%s3 + $0x68] sm:$0xff] %vm476, %v473
  %491 = vst.msk [vmem:[%s3 + $0x70] sm:$0xff] %vm476, %v474
  %492 = vst.msk [vmem:[%s3 + $0x78] sm:$0xff] %vm476, %v475
  // Predicated region
  $region14: #{conv_block_forward.3} parent=0 // pred_check
    _
  $region15: #{conv_block_forward.3} parent=0 // pred_check_branch
    %494 = sbr.rel (0) target = $region17
  $region16: #{conv_block_forward.3} parent=0 // pred_region
    _
  $region17: #{conv_block_forward.3} parent=0 // pred_fallthru
    _
  // Predicated region
  $region18: #{conv_block_forward.3} parent=0 // pred_check
    _
  $region19: #{conv_block_forward.3} parent=0 // pred_check_branch
    %496 = sbr.rel (0) target = $region21
  $region20: #{conv_block_forward.3} parent=0 // pred_region
    _
  $region21: #{conv_block_forward.3} parent=0 // pred_fallthru
    _

// kernel: conv_block_forward.2
$region0: #{conv_block_forward.2}
  #allocation0 [shape = 'u32[]', space=smem, size = 0x4, offset = 0x4, fixed_abs, tag = 'smem constant byte address 0x4 - core index']
  #allocation1 [shape = 'u32[72,128]{1,0:T(1,128)}', space=vmem, size = 0x9000, scoped, tag = 'internal scratch']
  #allocation2 [shape = 'bf16[18,18,4]{2,1,0:T(8,128)(2,1)}', space=vmem, size = 0x1b000, scoped, tag = 'scratch operand']
  #allocation3 [shape = 'bf16[256,36]{1,0:T(8,128)(2,1)}', space=vmem, size = 0x10000, scoped, tag = 'scratch operand']
  %s0 = inlined_call_operand.vmem [shape: bf16[2,16,16,4], index: 0, kind: input, shape index: {}, may-alias: {0,1,2}]
  %s1 = inlined_call_operand.vmem [shape: bf16[2,16,16,4], index: 1, kind: input, shape index: {}, may-alias: {0,1,2}]
  %s2 = inlined_call_operand.vmem [shape: bf16[2,16,16,4], index: 2, kind: input, shape index: {}, may-alias: {0,1,2}]
  %s3 = inlined_call_operand.vmem [shape: bf16[36,8], index: 3, kind: input, shape index: {}]
  %s4 = inlined_call_operand.vmem [shape: bf16[2,256,8], index: 4, kind: output, shape index: {0}]
  %s5 = inlined_call_operand.vmem [shape: f32[2,1,1,8], index: 5, kind: output, shape index: {1}]
  %s6 = inlined_call_operand.vmem [shape: f32[2,1,1,8], index: 6, kind: output, shape index: {2}]
  %7 = xla_tuple %s4, %s5, %s6
  %s8 = sld [smem:[#allocation0]]
  $region65: #{conv_block_forward.2} parent=0
    _
  %s10 = ssub.s32 1, %s8
  %s11 = scalar_select 0, %s10, %s8
  loop: start=0, step=1, limit=4
  $region2: #{conv_block_forward.2} parent=0 // loop_pre_header
    _
  $region3: #{conv_block_forward.2} parent=0 // loop_header
    %s13 = sphi 0, %s17
    %p14 = scmp.ge.s32.totalorder %s13, 4
    %s20 = sphi 0, %s32
    %s21 = sphi 0, %s28
    %s22 = sphi 0, %s20
    %s23 = sphi 0, %s21
    %s24 = sphi 0, %s22
    %s25 = sphi 0, %s23
    %s37 = sphi 0, %s39
    %s40 = sphi 0, %s37
    %s41 = sphi 0, %s40
    %s57 = sphi 0, %s41
    %s73 = sphi 0, %s75
    %s76 = sphi 0, %s73
    %s77 = sphi 0, %s76
    %s93 = sphi 0, %s77
    %s109 = sphi 0, %s111
    %s112 = sphi 0, %s109
    %s113 = sphi 0, %s112
    %s129 = sphi 0, %s113
    %s133 = sphi 0, %s133
    %s135 = sphi 0, %s133
    %s136 = sphi 0, %s135
    %s150 = sphi 0, %s136
    %s158 = sphi 0, %s160
    %s161 = sphi 0, %s158
    %s162 = sphi 0, %s161
    %s178 = sphi 0, %s162
    %s186 = sphi 0, %s188
    %s189 = sphi 0, %s186
    %s190 = sphi 0, %s189
    %s206 = sphi 0, %s190
    %s214 = sphi 0, %s216
    %s217 = sphi 0, %s214
    %s218 = sphi 0, %s217
    %s234 = sphi 0, %s218
  $region4: #{conv_block_forward.2} parent=0 // loop_header_branch
    %16 = sbr.rel (%p14) target = $region8
  $region5: #{conv_block_forward.2} parent=0 // loop_body
    %s18 = ssub.s32 %s13, 1
    %s19 = ssub.s32 %s13, 2
    %s26 = sadd.s32 1, %s21
    %p27 = scmp.ge.s32.totalorder %s26, 1
    %s28 = scalar_select %p27, 0, %s26
    %s29 = sadd.s32 1, %s20
    %s30 = scalar_select %p27, %s29, %s20
    %p31 = scmp.ge.s32.totalorder %s30, 2
    %s32 = scalar_select %p31, 0, %s30
    %s33 = ssub.s32 %s20, %s32
    %s34 = ssub.s32 %s21, %s28
    %s35 = sor.u32 %s33, %s34
    %p36 = scmp.eq.s32.totalorder %s35, 0
    %s38 = sadd.s32 %s37, 1
    %s39 = scalar_select %p36, %s37, %s38
    %p42 = pneg %p36
    %p43 = scmp.eq.s32.totalorder %s13, 1
    %p44 = por %p42, %p43
    %p45 = scmp.ne.s32.totalorder %s37, %s40
    %p46 = scmp.eq.s32.totalorder %s13, 0
    %p47 = por %p45, %p46
    %p48 = scmp.ne.s32.totalorder %s37, %s40
    %p49 = scmp.eq.s32.totalorder %s18, 1
    %p50 = por %p48, %p49
    %p51 = scmp.ne.s32.totalorder %s40, %s41
    %p52 = scmp.eq.s32.totalorder %s18, 0
    %p53 = por %p51, %p52
    %p54 = scmp.ne.s32.totalorder %s40, %s41
    %p55 = scmp.eq.s32.totalorder %s19, 1
    %p56 = por %p54, %p55
    %p58 = scmp.ne.s32.totalorder %s41, %s57
    %p59 = scmp.eq.s32.totalorder %s19, 0
    %p60 = por %p58, %p59
    %s61 = smul.u32 %s21, 16
    %s62 = ssub.s32 %s61, 1
    %p63 = scmp.gt.s32.totalorder %s62, 0
    %s64 = scalar_select %p63, %s62, 0
    %s65 = smul.u32 %s28, 16
    %s66 = ssub.s32 %s65, 1
    %p67 = scmp.gt.s32.totalorder %s66, 0
    %s68 = scalar_select %p67, %s66, 0
    %s69 = ssub.s32 %s20, %s32
    %s70 = ssub.s32 %s64, %s68
    %s71 = sor.u32 %s69, %s70
    %p72 = scmp.eq.s32.totalorder %s71, 0
    %s74 = sadd.s32 %s73, 1
    %s75 = scalar_select %p72, %s73, %s74
    %p78 = pneg %p72
    %p79 = scmp.eq.s32.totalorder %s13, 1
    %p80 = por %p78, %p79
    %p81 = scmp.ne.s32.totalorder %s73, %s76
    %p82 = scmp.eq.s32.totalorder %s13, 0
    %p83 = por %p81, %p82
    %p84 = scmp.ne.s32.totalorder %s73, %s76
    %p85 = scmp.eq.s32.totalorder %s18, 1
    %p86 = por %p84, %p85
    %p87 = scmp.ne.s32.totalorder %s76, %s77
    %p88 = scmp.eq.s32.totalorder %s18, 0
    %p89 = por %p87, %p88
    %p90 = scmp.ne.s32.totalorder %s76, %s77
    %p91 = scmp.eq.s32.totalorder %s19, 1
    %p92 = por %p90, %p91
    %p94 = scmp.ne.s32.totalorder %s77, %s93
    %p95 = scmp.eq.s32.totalorder %s19, 0
    %p96 = por %p94, %p95
    %s97 = sadd.s32 %s21, 1
    %s98 = smul.u32 %s97, 16
    %p99 = scmp.lt.s32.totalorder %s98, 15
    %s100 = scalar_select %p99, %s98, 15
    %s101 = sadd.s32 %s28, 1
    %s102 = smul.u32 %s101, 16
    %p103 = scmp.lt.s32.totalorder %s102, 15
    %s104 = scalar_select %p103, %s102, 15
    %s105 = ssub.s32 %s20, %s32
    %s106 = ssub.s32 %s100, %s104
    %s107 = sor.u32 %s105, %s106
    %p108 = scmp.eq.s32.totalorder %s107, 0
    %s110 = sadd.s32 %s109, 1
    %s111 = scalar_select %p108, %s109, %s110
    %p114 = pneg %p108
    %p115 = scmp.eq.s32.totalorder %s13, 1
    %p116 = por %p114, %p115
    %p117 = scmp.ne.s32.totalorder %s109, %s112
    %p118 = scmp.eq.s32.totalorder %s13, 0
    %p119 = por %p117, %p118
    %p120 = scmp.ne.s32.totalorder %s109, %s112
    %p121 = scmp.eq.s32.totalorder %s18, 1
    %p122 = por %p120, %p121
    %p123 = scmp.ne.s32.totalorder %s112, %s113
    %p124 = scmp.eq.s32.totalorder %s18, 0
    %p125 = por %p123, %p124
    %p126 = scmp.ne.s32.totalorder %s112, %s113
    %p127 = scmp.eq.s32.totalorder %s19, 1
    %p128 = por %p126, %p127
    %p130 = scmp.ne.s32.totalorder %s113, %s129
    %p131 = scmp.eq.s32.totalorder %s19, 0
    %p132 = por %p130, %p131
    %s134 = sadd.s32 %s133, 1
    %p137 = scmp.eq.s32.totalorder %s13, 1
    %p138 = scmp.ne.s32.totalorder %s133, %s135
    %p139 = scmp.eq.s32.totalorder %s13, 0
    %p140 = por %p138, %p139
    %p141 = scmp.ne.s32.totalorder %s133, %s135
    %p142 = scmp.eq.s32.totalorder %s18, 1
    %p143 = por %p141, %p142
    %p144 = scmp.ne.s32.totalorder %s135, %s136
    %p145 = scmp.eq.s32.totalorder %s18, 0
    %p146 = por %p144, %p145
    %p147 = scmp.ne.s32.totalorder %s135, %s136
    %p148 = scmp.eq.s32.totalorder %s19, 1
    %p149 = por %p147, %p148
    %p151 = scmp.ne.s32.totalorder %s136, %s150
    %p152 = scmp.eq.s32.totalorder %s19, 0
    %p153 = por %p151, %p152
    %s154 = ssub.s32 %s20, %s32
    %s155 = ssub.s32 %s21, %s28
    %s156 = sor.u32 %s154, %s155
    %p157 = scmp.eq.s32.totalorder %s156, 0
    %s159 = sadd.s32 %s158, 1
    %s160 = scalar_select %p157, %s158, %s159
    %p163 = pneg %p157
    %p164 = scmp.eq.s32.totalorder %s13, 1
    %p165 = por %p163, %p164
    %p166 = scmp.ne.s32.totalorder %s158, %s161
    %p167 = scmp.eq.s32.totalorder %s13, 0
    %p168 = por %p166, %p167
    %p169 = scmp.ne.s32.totalorder %s158, %s161
    %p170 = scmp.eq.s32.totalorder %s18, 1
    %p171 = por %p169, %p170
    %p172 = scmp.ne.s32.totalorder %s161, %s162
    %p173 = scmp.eq.s32.totalorder %s18, 0
    %p174 = por %p172, %p173
    %p175 = scmp.ne.s32.totalorder %s161, %s162
    %p176 = scmp.eq.s32.totalorder %s19, 1
    %p177 = por %p175, %p176
    %p179 = scmp.ne.s32.totalorder %s162, %s178
    %p180 = scmp.eq.s32.totalorder %s19, 0
    %p181 = por %p179, %p180
    %s182 = ssub.s32 %s20, %s32
    %s183 = ssub.s32 %s21, %s28
    %s184 = sor.u32 %s182, %s183
    %p185 = scmp.eq.s32.totalorder %s184, 0
    %s187 = sadd.s32 %s186, 1
    %s188 = scalar_select %p185, %s186, %s187
    %p191 = pneg %p185
    %p192 = scmp.eq.s32.totalorder %s13, 1
    %p193 = por %p191, %p192
    %p194 = scmp.ne.s32.totalorder %s186, %s189
    %p195 = scmp.eq.s32.totalorder %s13, 0
    %p196 = por %p194, %p195
    %p197 = scmp.ne.s32.totalorder %s186, %s189
    %p198 = scmp.eq.s32.totalorder %s18, 1
    %p199 = por %p197, %p198
    %p200 = scmp.ne.s32.totalorder %s189, %s190
    %p201 = scmp.eq.s32.totalorder %s18, 0
    %p202 = por %p200, %p201
    %p203 = scmp.ne.s32.totalorder %s189, %s190
    %p204 = scmp.eq.s32.totalorder %s19, 1
    %p205 = por %p203, %p204
    %p207 = scmp.ne.s32.totalorder %s190, %s206
    %p208 = scmp.eq.s32.totalorder %s19, 0
    %p209 = por %p207, %p208
    %s210 = ssub.s32 %s20, %s32
    %s211 = ssub.s32 %s21, %s28
    %s212 = sor.u32 %s210, %s211
    %p213 = scmp.eq.s32.totalorder %s212, 0
    %s215 = sadd.s32 %s214, 1
    %s216 = scalar_select %p213, %s214, %s215
    %p219 = pneg %p213
    %p220 = scmp.eq.s32.totalorder %s13, 1
    %p221 = por %p219, %p220
    %p222 = scmp.ne.s32.totalorder %s214, %s217
    %p223 = scmp.eq.s32.totalorder %s13, 0
    %p224 = por %p222, %p223
    %p225 = scmp.ne.s32.totalorder %s214, %s217
    %p226 = scmp.eq.s32.totalorder %s18, 1
    %p227 = por %p225, %p226
    %p228 = scmp.ne.s32.totalorder %s217, %s218
    %p229 = scmp.eq.s32.totalorder %s18, 0
    %p230 = por %p228, %p229
    %p231 = scmp.ne.s32.totalorder %s217, %s218
    %p232 = scmp.eq.s32.totalorder %s19, 1
    %p233 = por %p231, %p232
    %p235 = scmp.ne.s32.totalorder %s218, %s234
    %p236 = scmp.eq.s32.totalorder %s19, 0
    %p237 = por %p235, %p236
    %p238 = scmp.le.s32.totalorder 1, %s13
    %p239 = scmp.lt.s32.totalorder %s13, 3
    %p240 = pnand %p238, %p239
    %p241 = pneg %p240
    // Predicated region
    $region9: #{conv_block_forward.2} parent=5 // pred_check
      _
    $region10: #{conv_block_forward.2} parent=5 // pred_check_branch
      %243 = sbr.rel (%p240) target = $region12
    $region11: #{conv_block_forward.2} parent=5 // pred_region
      %s244 = ssub.s32 %s13, 1
      // Predicated region
      $region13: #{conv_block_forward.2} parent=11 // pred_check
        %p245 = pneg %p146
      $region14: #{conv_block_forward.2} parent=11 // pred_check_branch
        %247 = sbr.rel (%p245) target = $region16
      $region15: #{conv_block_forward.2} parent=11 // pred_region
        _
      $region16: #{conv_block_forward.2} parent=11 // pred_fallthru
        _
    $region12: #{conv_block_forward.2} parent=5 // pred_fallthru
      _
    %p248 = scmp.lt.s32.totalorder %s13, 2
    // Predicated region
    $region17: #{conv_block_forward.2} parent=5 // pred_check
      %p249 = pneg %p248
    $region18: #{conv_block_forward.2} parent=5 // pred_check_branch
      %251 = sbr.rel (%p249) target = $region20
    $region19: #{conv_block_forward.2} parent=5 // pred_region
      // Predicated region
      $region21: #{conv_block_forward.2} parent=19 // pred_check
        %p252 = pneg %p47
      $region22: #{conv_block_forward.2} parent=19 // pred_check_branch
        %254 = sbr.rel (%p252) target = $region24
      $region23: #{conv_block_forward.2} parent=19 // pred_region
        %s255 = smul.u32 16, %s21
        %p256 = scmp.lt.s32.totalorder %s20, 1
        %s257 = scalar_select %p256, %s20, 1
        %p258 = scmp.lt.s32.totalorder %s255, 15
        %s259 = scalar_select %p258, %s255, 15
        %s260 = smul.addr %s259, 2
        %s261 = smul.addr %s257, 32
        %s262 = sadd.s32 %s260, %s261
        %s263 = smul.addr %s262, 4
        %s264 = scalar_lea.vmem %s0, %s263
        %s265 = smul.u32 16, %s21
      $region24: #{conv_block_forward.2} parent=19 // pred_fallthru
        _
      // Predicated region
      $region25: #{conv_block_forward.2} parent=19 // pred_check
        %p266 = pneg %p83
      $region26: #{conv_block_forward.2} parent=19 // pred_check_branch
        %268 = sbr.rel (%p266) target = $region28
      $region27: #{conv_block_forward.2} parent=19 // pred_region
        %s269 = smul.u32 %s21, 16
        %s270 = ssub.s32 %s269, 1
        %p271 = scmp.gt.s32.totalorder %s270, 0
        %s272 = scalar_select %p271, %s270, 0
        %p273 = scmp.lt.s32.totalorder %s20, 1
        %s274 = scalar_select %p273, %s20, 1
        %p275 = scmp.lt.s32.totalorder %s272, 15
        %s276 = scalar_select %p275, %s272, 15
        %s277 = smul.addr %s276, 2
        %s278 = smul.addr %s274, 32
        %s279 = sadd.s32 %s277, %s278
        %s280 = smul.addr %s279, 4
        %s281 = scalar_lea.vmem %s1, %s280
        %s282 = smul.u32 %s21, 16
        %s283 = ssub.s32 %s282, 1
        %p284 = scmp.gt.s32.totalorder %s283, 0
        %s285 = scalar_select %p284, %s283, 0
      $region28: #{conv_block_forward.2} parent=19 // pred_fallthru
        _
      // Predicated region
      $region29: #{conv_block_forward.2} parent=19 // pred_check
        %p286 = pneg %p119
      $region30: #{conv_block_forward.2} parent=19 // pred_check_branch
        %288 = sbr.rel (%p286) target = $region32
      $region31: #{conv_block_forward.2} parent=19 // pred_region
        %s289 = sadd.s32 %s21, 1
        %s290 = smul.u32 %s289, 16
        %p291 = scmp.lt.s32.totalorder %s290, 15
        %s292 = scalar_select %p291, %s290, 15
        %p293 = scmp.lt.s32.totalorder %s20, 1
        %s294 = scalar_select %p293, %s20, 1
        %p295 = scmp.lt.s32.totalorder %s292, 15
        %s296 = scalar_select %p295, %s292, 15
        %s297 = smul.addr %s296, 2
        %s298 = smul.addr %s294, 32
        %s299 = sadd.s32 %s297, %s298
        %s300 = smul.addr %s299, 4
        %s301 = scalar_lea.vmem %s2, %s300
        %s302 = sadd.s32 %s21, 1
        %s303 = smul.u32 %s302, 16
        %p304 = scmp.lt.s32.totalorder %s303, 15
        %s305 = scalar_select %p304, %s303, 15
      $region32: #{conv_block_forward.2} parent=19 // pred_fallthru
        _
    $region20: #{conv_block_forward.2} parent=5 // pred_fallthru
      _
    %p306 = scmp.le.s32.totalorder 1, %s13
    %p307 = scmp.lt.s32.totalorder %s13, 3
    %p308 = pnand %p306, %p307
    %p309 = pneg %p308
    // Predicated region
    $region33: #{conv_block_forward.2} parent=5 // pred_check
      _
    $region34: #{conv_block_forward.2} parent=5 // pred_check_branch
      %311 = sbr.rel (%p308) target = $region36
    $region35: #{conv_block_forward.2} parent=5 // pred_region
      %s312 = ssub.s32 %s13, 1
      %s313 = smul.u32 16, %s23
      %p314 = scmp.lt.s32.totalorder %s22, 1
      %s315 = scalar_select %p314, %s22, 1
      %p316 = scmp.lt.s32.totalorder %s313, 15
      %s317 = scalar_select %p316, %s313, 15
      %s318 = smul.addr %s317, 2
      %s319 = smul.addr %s315, 32
      %s320 = sadd.s32 %s318, %s319
      %s321 = smul.addr %s320, 4
      %s322 = scalar_lea.vmem %s0, %s321
      %p323 = pneg %p53
      %p324 = pneg %p50
      %s325 = smul.u32 %s23, 16
      %s326 = ssub.s32 %s325, 1
      %p327 = scmp.gt.s32.totalorder %s326, 0
      %s328 = scalar_select %p327, %s326, 0
      %p329 = scmp.lt.s32.totalorder %s22, 1
      %s330 = scalar_select %p329, %s22, 1
      %p331 = scmp.lt.s32.totalorder %s328, 15
      %s332 = scalar_select %p331, %s328, 15
      %s333 = smul.addr %s332, 2
      %s334 = smul.addr %s330, 32
      %s335 = sadd.s32 %s333, %s334
      %s336 = smul.addr %s335, 4
      %s337 = scalar_lea.vmem %s1, %s336
      %p338 = pneg %p89
      %p339 = pneg %p86
      %s340 = sadd.s32 %s23, 1
      %s341 = smul.u32 %s340, 16
      %p342 = scmp.lt.s32.totalorder %s341, 15
      %s343 = scalar_select %p342, %s341, 15
      %p344 = scmp.lt.s32.totalorder %s22, 1
      %s345 = scalar_select %p344, %s22, 1
      %p346 = scmp.lt.s32.totalorder %s343, 15
      %s347 = scalar_select %p346, %s343, 15
      %s348 = smul.addr %s347, 2
      %s349 = smul.addr %s345, 32
      %s350 = sadd.s32 %s348, %s349
      %s351 = smul.addr %s350, 4
      %s352 = scalar_lea.vmem %s2, %s351
      %p353 = pneg %p125
      %p354 = pneg %p122
      %p355 = pneg %p146
      %p356 = pneg %p143
      %p357 = pneg %p174
      %p358 = pneg %p171
      %s359 = smul.u32 32, %s23
      %p360 = scmp.lt.s32.totalorder %s22, 1
      %s361 = scalar_select %p360, %s22, 1
      %p362 = scmp.lt.s32.totalorder %s359, 31
      %s363 = scalar_select %p362, %s359, 31
      %s364 = smul.addr %s361, 32
      %s365 = sadd.s32 %s363, %s364
      %s366 = smul.addr %s365, 4
      %s367 = scalar_lea.vmem %s4, %s366
      %p368 = pneg %p202
      %p369 = pneg %p199
      %p370 = scmp.lt.s32.totalorder %s22, 1
      %s371 = scalar_select %p370, %s22, 1
      %p372 = scmp.lt.s32.totalorder %s23, 0
      %s373 = scalar_select %p372, %s23, 0
      %s374 = sadd.s32 %s373, %s371
      %s375 = scalar_lea.vmem %s5, %s374
      %p376 = pneg %p230
      %p377 = pneg %p227
      %p378 = scmp.lt.s32.totalorder %s22, 1
      %s379 = scalar_select %p378, %s22, 1
      %p380 = scmp.lt.s32.totalorder %s23, 0
      %s381 = scalar_select %p380, %s23, 0
      %s382 = sadd.s32 %s381, %s379
      %s383 = scalar_lea.vmem %s6, %s382
      %s384 = smul.u32 16, %s23
      %p385 = scmp.lt.s32.totalorder %s22, 1
      %s386 = scalar_select %p385, %s22, 1
      %p387 = scmp.lt.s32.totalorder %s384, 15
      %s388 = scalar_select %p387, %s384, 15
      %s389 = smul.addr %s388, 2
      %s390 = smul.addr %s386, 32
      %s391 = sadd.s32 %s389, %s390
      %s392 = smul.addr %s391, 4
      %s393 = scalar_lea.vmem %s0, %s392
      %s394 = smul.u32 16, %s23
      %s395 = smul.u32 %s23, 16
      %s396 = ssub.s32 %s395, 1
      %p397 = scmp.gt.s32.totalorder %s396, 0
      %s398 = scalar_select %p397, %s396, 0
      %p399 = scmp.lt.s32.totalorder %s22, 1
      %s400 = scalar_select %p399, %s22, 1
      %p401 = scmp.lt.s32.totalorder %s398, 15
      %s402 = scalar_select %p401, %s398, 15
      %s403 = smul.addr %s402, 2
      %s404 = smul.addr %s400, 32
      %s405 = sadd.s32 %s403, %s404
      %s406 = smul.addr %s405, 4
      %s407 = scalar_lea.vmem %s1, %s406
      %s408 = smul.u32 %s23, 16
      %s409 = ssub.s32 %s408, 1
      %p410 = scmp.gt.s32.totalorder %s409, 0
      %s411 = scalar_select %p410, %s409, 0
      %s412 = sadd.s32 %s23, 1
      %s413 = smul.u32 %s412, 16
      %p414 = scmp.lt.s32.totalorder %s413, 15
      %s415 = scalar_select %p414, %s413, 15
      %p416 = scmp.lt.s32.totalorder %s22, 1
      %s417 = scalar_select %p416, %s22, 1
      %p418 = scmp.lt.s32.totalorder %s415, 15
      %s419 = scalar_select %p418, %s415, 15
      %s420 = smul.addr %s419, 2
      %s421 = smul.addr %s417, 32
      %s422 = sadd.s32 %s420, %s421
      %s423 = smul.addr %s422, 4
      %s424 = scalar_lea.vmem %s2, %s423
      %s425 = sadd.s32 %s23, 1
      %s426 = smul.u32 %s425, 16
      %p427 = scmp.lt.s32.totalorder %s426, 15
      %s428 = scalar_select %p427, %s426, 15
      %s429 = smul.u32 32, %s23
      %p430 = scmp.lt.s32.totalorder %s22, 1
      %s431 = scalar_select %p430, %s22, 1
      %p432 = scmp.lt.s32.totalorder %s429, 31
      %s433 = scalar_select %p432, %s429, 31
      %s434 = smul.addr %s431, 32
      %s435 = sadd.s32 %s433, %s434
      %s436 = smul.addr %s435, 4
      %s437 = scalar_lea.vmem %s4, %s436
      %s438 = smul.u32 32, %s23
      %p439 = scmp.lt.s32.totalorder %s22, 1
      %s440 = scalar_select %p439, %s22, 1
      %p441 = scmp.lt.s32.totalorder %s23, 0
      %s442 = scalar_select %p441, %s23, 0
      %s443 = sadd.s32 %s442, %s440
      %s444 = scalar_lea.vmem %s5, %s443
      %p445 = scmp.lt.s32.totalorder %s22, 1
      %s446 = scalar_select %p445, %s22, 1
      %p447 = scmp.lt.s32.totalorder %s23, 0
      %s448 = scalar_select %p447, %s23, 0
      %s449 = sadd.s32 %s448, %s446
      %s450 = scalar_lea.vmem %s6, %s449
      %vm452 = vcmask 24576
      %vm453 = vsmask.f32 256
      %vm454 = vmand %vm452, %vm453
      %v455 = vld [vmem:[#allocation2] sm:$0x1]
      %v456 = vsel %vm454, 0, %v455
      %457 = vst [vmem:[#allocation2] sm:$0x1] %v456
      %v458 = vld [vmem:[#allocation2 + $0xc] sm:$0x1]
      %v459 = vsel %vm454, 0, %v458
      %460 = vst [vmem:[#allocation2 + $0xc] sm:$0x1] %v459
      %v461 = vld [vmem:[#allocation2 + $0x18] sm:$0x1]
      %v462 = vsel %vm454, 0, %v461
      %463 = vst [vmem:[#allocation2 + $0x18] sm:$0x1] %v462
      %v464 = vld [vmem:[#allocation2 + $0x24] sm:$0x1]
      %v465 = vsel %vm454, 0, %v464
      %466 = vst [vmem:[#allocation2 + $0x24] sm:$0x1] %v465
      %v467 = vld [vmem:[#allocation2 + $0x30] sm:$0x1]
      %v468 = vsel %vm454, 0, %v467
      %469 = vst [vmem:[#allocation2 + $0x30] sm:$0x1] %v468
      %v470 = vld [vmem:[#allocation2 + $0x3c] sm:$0x1]
      %v471 = vsel %vm454, 0, %v470
      %472 = vst [vmem:[#allocation2 + $0x3c] sm:$0x1] %v471
      %v473 = vld [vmem:[#allocation2 + $0x48] sm:$0x1]
      %v474 = vsel %vm454, 0, %v473
      %475 = vst [vmem:[#allocation2 + $0x48] sm:$0x1] %v474
      %v476 = vld [vmem:[#allocation2 + $0x54] sm:$0x1]
      %v477 = vsel %vm454, 0, %v476
      %478 = vst [vmem:[#allocation2 + $0x54] sm:$0x1] %v477
      %v479 = vld [vmem:[#allocation2 + $0x60] sm:$0x1]
      %v480 = vsel %vm454, 0, %v479
      %481 = vst [vmem:[#allocation2 + $0x60] sm:$0x1] %v480
      %v482 = vld [vmem:[#allocation2 + $0x6c] sm:$0x1]
      %v483 = vsel %vm454, 0, %v482
      %484 = vst [vmem:[#allocation2 + $0x6c] sm:$0x1] %v483
      %v485 = vld [vmem:[#allocation2 + $0x78] sm:$0x1]
      %v486 = vsel %vm454, 0, %v485
      %487 = vst [vmem:[#allocation2 + $0x78] sm:$0x1] %v486
      %v488 = vld [vmem:[#allocation2 + $0x84] sm:$0x1]
      %v489 = vsel %vm454, 0, %v488
      %490 = vst [vmem:[#allocation2 + $0x84] sm:$0x1] %v489
      %v491 = vld [vmem:[#allocation2 + $0x90] sm:$0x1]
      %v492 = vsel %vm454, 0, %v491
      %493 = vst [vmem:[#allocation2 + $0x90] sm:$0x1] %v492
      %v494 = vld [vmem:[#allocation2 + $0x9c] sm:$0x1]
      %v495 = vsel %vm454, 0, %v494
      %496 = vst [vmem:[#allocation2 + $0x9c] sm:$0x1] %v495
      %v497 = vld [vmem:[#allocation2 + $0xa8] sm:$0x1]
      %v498 = vsel %vm454, 0, %v497
      %499 = vst [vmem:[#allocation2 + $0xa8] sm:$0x1] %v498
      %v500 = vld [vmem:[#allocation2 + $0xb4] sm:$0x1]
      %v501 = vsel %vm454, 0, %v500
      %502 = vst [vmem:[#allocation2 + $0xb4] sm:$0x1] %v501
      %v503 = vld [vmem:[#allocation2 + $0xc0] sm:$0x1]
      %v504 = vsel %vm454, 0, %v503
      %505 = vst [vmem:[#allocation2 + $0xc0] sm:$0x1] %v504
      %v506 = vld [vmem:[#allocation2 + $0xcc] sm:$0x1]
      %v507 = vsel %vm454, 0, %v506
      %508 = vst [vmem:[#allocation2 + $0xcc] sm:$0x1] %v507
      %vm509 = vsmask.f32 7938
      %vm510 = vmand %vm452, %vm509
      %v511 = vld [vmem:[#allocation2 + $0x8] sm:$0x1]
      %v512 = vsel %vm510, 0, %v511
      %513 = vst [vmem:[#allocation2 + $0x8] sm:$0x1] %v512
      %v514 = vld [vmem:[#allocation2 + $0x14] sm:$0x1]
      %v515 = vsel %vm510, 0, %v514
      %516 = vst [vmem:[#allocation2 + $0x14] sm:$0x1] %v515
      %v517 = vld [vmem:[#allocation2 + $0x20] sm:$0x1]
      %v518 = vsel %vm510, 0, %v517
      %519 = vst [vmem:[#allocation2 + $0x20] sm:$0x1] %v518
      %v520 = vld [vmem:[#allocation2 + $0x2c] sm:$0x1]
      %v521 = vsel %vm510, 0, %v520
      %522 = vst [vmem:[#allocation2 + $0x2c] sm:$0x1] %v521
      %v523 = vld [vmem:[#allocation2 + $0x38] sm:$0x1]
      %v524 = vsel %vm510, 0, %v523
      %525 = vst [vmem:[#allocation2 + $0x38] sm:$0x1] %v524
      %v526 = vld [vmem:[#allocation2 + $0x44] sm:$0x1]
      %v527 = vsel %vm510, 0, %v526
      %528 = vst [vmem:[#allocation2 + $0x44] sm:$0x1] %v527
      %v529 = vld [vmem:[#allocation2 + $0x50] sm:$0x1]
      %v530 = vsel %vm510, 0, %v529
      %531 = vst [vmem:[#allocation2 + $0x50] sm:$0x1] %v530
      %v532 = vld [vmem:[#allocation2 + $0x5c] sm:$0x1]
      %v533 = vsel %vm510, 0, %v532
      %534 = vst [vmem:[#allocation2 + $0x5c] sm:$0x1] %v533
      %v535 = vld [vmem:[#allocation2 + $0x68] sm:$0x1]
      %v536 = vsel %vm510, 0, %v535
      %537 = vst [vmem:[#allocation2 + $0x68] sm:$0x1] %v536
      %v538 = vld [vmem:[#allocation2 + $0x74] sm:$0x1]
      %v539 = vsel %vm510, 0, %v538
      %540 = vst [vmem:[#allocation2 + $0x74] sm:$0x1] %v539
      %v541 = vld [vmem:[#allocation2 + $0x80] sm:$0x1]
      %v542 = vsel %vm510, 0, %v541
      %543 = vst [vmem:[#allocation2 + $0x80] sm:$0x1] %v542
      %v544 = vld [vmem:[#allocation2 + $0x8c] sm:$0x1]
      %v545 = vsel %vm510, 0, %v544
      %546 = vst [vmem:[#allocation2 + $0x8c] sm:$0x1] %v545
      %v547 = vld [vmem:[#allocation2 + $0x98] sm:$0x1]
      %v548 = vsel %vm510, 0, %v547
      %549 = vst [vmem:[#allocation2 + $0x98] sm:$0x1] %v548
      %v550 = vld [vmem:[#allocation2 + $0xa4] sm:$0x1]
      %v551 = vsel %vm510, 0, %v550
      %552 = vst [vmem:[#allocation2 + $0xa4] sm:$0x1] %v551
      %v553 = vld [vmem:[#allocation2 + $0xb0] sm:$0x1]
      %v554 = vsel %vm510, 0, %v553
      %555 = vst [vmem:[#allocation2 + $0xb0] sm:$0x1] %v554
      %v556 = vld [vmem:[#allocation2 + $0xbc] sm:$0x1]
      %v557 = vsel %vm510, 0, %v556
      %558 = vst [vmem:[#allocation2 + $0xbc] sm:$0x1] %v557
      %v559 = vld [vmem:[#allocation2 + $0xc8] sm:$0x1]
      %v560 = vsel %vm510, 0, %v559
      %561 = vst [vmem:[#allocation2 + $0xc8] sm:$0x1] %v560
      %v562 = vld [vmem:[#allocation2 + $0xd4] sm:$0x1]
      %v563 = vsel %vm510, 0, %v562
      %564 = vst [vmem:[#allocation2 + $0xd4] sm:$0x1] %v563
      %v565 = vld [vmem:[%s393] sm:$0xf]
      %v566 = vld [vmem:[%s393 + $0x4] sm:$0xf]
      %v567 = vld [vmem:[%s393 + $0x8] sm:$0xf]
      %v568 = vld [vmem:[%s393 + $0xc] sm:$0xf]
      %v569 = vld [vmem:[%s393 + $0x10] sm:$0xf]
      %v570 = vld [vmem:[%s393 + $0x14] sm:$0xf]
      %v571 = vld [vmem:[%s393 + $0x18] sm:$0xf]
      %v572 = vld [vmem:[%s393 + $0x1c] sm:$0xf]
      %v573 = vld [vmem:[%s393 + $0x20] sm:$0xf]
      %v574 = vld [vmem:[%s393 + $0x24] sm:$0xf]
      %v575 = vld [vmem:[%s393 + $0x28] sm:$0xf]
      %v576 = vld [vmem:[%s393 + $0x2c] sm:$0xf]
      %v577 = vld [vmem:[%s393 + $0x30] sm:$0xf]
      %v578 = vld [vmem:[%s393 + $0x34] sm:$0xf]
      %v579 = vld [vmem:[%s393 + $0x38] sm:$0xf]
      %v580 = vld [vmem:[%s393 + $0x3c] sm:$0xf]
      %v581 = vld [vmem:[%s393 + $0x40] sm:$0xf]
      %v582 = vld [vmem:[%s393 + $0x44] sm:$0xf]
      %v583 = vld [vmem:[%s393 + $0x48] sm:$0xf]
      %v584 = vld [vmem:[%s393 + $0x4c] sm:$0xf]
      %v585 = vld [vmem:[%s393 + $0x50] sm:$0xf]
      %v586 = vld [vmem:[%s393 + $0x54] sm:$0xf]
      %v587 = vld [vmem:[%s393 + $0x58] sm:$0xf]
      %v588 = vld [vmem:[%s393 + $0x5c] sm:$0xf]
      %v589 = vld [vmem:[%s393 + $0x60] sm:$0xf]
      %v590 = vld [vmem:[%s393 + $0x64] sm:$0xf]
      %v591 = vld [vmem:[%s393 + $0x68] sm:$0xf]
      %v592 = vld [vmem:[%s393 + $0x6c] sm:$0xf]
      %v593 = vld [vmem:[%s393 + $0x70] sm:$0xf]
      %v594 = vld [vmem:[%s393 + $0x74] sm:$0xf]
      %v595 = vld [vmem:[%s393 + $0x78] sm:$0xf]
      %v596 = vld [vmem:[%s393 + $0x7c] sm:$0xf]
      %vm597 = vsmask.f32 4368
      %vm598 = vmor %vm453, %vm597
      %v600 = vshrl.u32 %v565, 16
      %v602 = vrot.slane %v600, 7
      %v603 = vshll.u32 %v565, 16
      %v605 = vor.u32 %v602, %v603
      %v606 = vrot.slane %v602, 4
      %v608 = vshrl.u32 %v566, 16
      %v610 = vrot.slane %v608, 7
      %v611 = vshll.u32 %v566, 16
      %v613 = vor.u32 %v610, %v611
      %v614 = vsel %vm598, %v606, %v613
      %v615 = vrot.slane %v610, 4
      %v617 = vshrl.u32 %v567, 16
      %v619 = vrot.slane %v617, 7
      %v620 = vshll.u32 %v567, 16
      %v622 = vor.u32 %v619, %v620
      %v623 = vrot.slane %v619, 4
      %v625 = vshrl.u32 %v568, 16
      %v627 = vrot.slane %v625, 7
      %v628 = vshll.u32 %v568, 16
      %v630 = vor.u32 %v627, %v628
      %v631 = vsel %vm598, %v623, %v630
      %v632 = vrot.slane %v627, 4
      %v634 = vshrl.u32 %v569, 16
      %v636 = vrot.slane %v634, 7
      %v637 = vshll.u32 %v569, 16
      %v639 = vor.u32 %v636, %v637
      %v640 = vrot.slane %v636, 4
      %v642 = vshrl.u32 %v570, 16
      %v644 = vrot.slane %v642, 7
      %v645 = vshll.u32 %v570, 16
      %v647 = vor.u32 %v644, %v645
      %v648 = vsel %vm598, %v640, %v647
      %v649 = vrot.slane %v644, 4
      %v651 = vshrl.u32 %v571, 16
      %v653 = vrot.slane %v651, 7
      %v654 = vshll.u32 %v571, 16
      %v656 = vor.u32 %v653, %v654
      %v657 = vrot.slane %v653, 4
      %v659 = vshrl.u32 %v572, 16
      %v661 = vrot.slane %v659, 7
      %v662 = vshll.u32 %v572, 16
      %v664 = vor.u32 %v661, %v662
      %v665 = vsel %vm598, %v657, %v664
      %v666 = vrot.slane %v661, 4
      %v668 = vshrl.u32 %v573, 16
      %v670 = vrot.slane %v668, 7
      %v671 = vshll.u32 %v573, 16
      %v673 = vor.u32 %v670, %v671
      %v674 = vrot.slane %v670, 4
      %v676 = vshrl.u32 %v574, 16
      %v678 = vrot.slane %v676, 7
      %v679 = vshll.u32 %v574, 16
      %v681 = vor.u32 %v678, %v679
      %v682 = vsel %vm598, %v674, %v681
      %v683 = vrot.slane %v678, 4
      %v685 = vshrl.u32 %v575, 16
      %v687 = vrot.slane %v685, 7
      %v688 = vshll.u32 %v575, 16
      %v690 = vor.u32 %v687, %v688
      %v691 = vrot.slane %v687, 4
      %v693 = vshrl.u32 %v576, 16
      %v695 = vrot.slane %v693, 7
      %v696 = vshll.u32 %v576, 16
      %v698 = vor.u32 %v695, %v696
      %v699 = vsel %vm598, %v691, %v698
      %v700 = vrot.slane %v695, 4
      %v702 = vshrl.u32 %v577, 16
      %v704 = vrot.slane %v702, 7
      %v705 = vshll.u32 %v577, 16
      %v707 = vor.u32 %v704, %v705
      %v708 = vrot.slane %v704, 4
      %v710 = vshrl.u32 %v578, 16
      %v712 = vrot.slane %v710, 7
      %v713 = vshll.u32 %v578, 16
      %v715 = vor.u32 %v712, %v713
      %v716 = vsel %vm598, %v708, %v715
      %v717 = vrot.slane %v712, 4
      %v719 = vshrl.u32 %v579, 16
      %v721 = vrot.slane %v719, 7
      %v722 = vshll.u32 %v579, 16
      %v724 = vor.u32 %v721, %v722
      %v725 = vrot.slane %v721, 4
      %v727 = vshrl.u32 %v580, 16
      %v729 = vrot.slane %v727, 7
      %v730 = vshll.u32 %v580, 16
      %v732 = vor.u32 %v729, %v730
      %v733 = vsel %vm598, %v725, %v732
      %v734 = vrot.slane %v729, 4
      %v736 = vshrl.u32 %v581, 16
      %v738 = vrot.slane %v736, 7
      %v739 = vshll.u32 %v581, 16
      %v741 = vor.u32 %v738, %v739
      %v742 = vrot.slane %v738, 4
      %v744 = vshrl.u32 %v582, 16
      %v746 = vrot.slane %v744, 7
      %v747 = vshll.u32 %v582, 16
      %v749 = vor.u32 %v746, %v747
      %v750 = vsel %vm598, %v742, %v749
      %v751 = vrot.slane %v746, 4
      %v753 = vshrl.u32 %v583, 16
      %v755 = vrot.slane %v753, 7
      %v756 = vshll.u32 %v583, 16
      %v758 = vor.u32 %v755, %v756
      %v759 = vrot.slane %v755, 4
      %v761 = vshrl.u32 %v584, 16
      %v763 = vrot.slane %v761, 7
      %v764 = vshll.u32 %v584, 16
      %v766 = vor.u32 %v763, %v764
      %v767 = vsel %vm598, %v759, %v766
      %v768 = vrot.slane %v763, 4
      %v770 = vshrl.u32 %v585, 16
      %v772 = vrot.slane %v770, 7
      %v773 = vshll.u32 %v585, 16
      %v775 = vor.u32 %v772, %v773
      %v776 = vrot.slane %v772, 4
      %v778 = vshrl.u32 %v586, 16
      %v780 = vrot.slane %v778, 7
      %v781 = vshll.u32 %v586, 16
      %v783 = vor.u32 %v780, %v781
      %v784 = vsel %vm598, %v776, %v783
      %v785 = vrot.slane %v780, 4
      %v787 = vshrl.u32 %v587, 16
      %v789 = vrot.slane %v787, 7
      %v790 = vshll.u32 %v587, 16
      %v792 = vor.u32 %v789, %v790
      %v793 = vrot.slane %v789, 4
      %v795 = vshrl.u32 %v588, 16
      %v797 = vrot.slane %v795, 7
      %v798 = vshll.u32 %v588, 16
      %v800 = vor.u32 %v797, %v798
      %v801 = vsel %vm598, %v793, %v800
      %v802 = vrot.slane %v797, 4
      %v804 = vshrl.u32 %v589, 16
      %v806 = vrot.slane %v804, 7
      %v807 = vshll.u32 %v589, 16
      %v809 = vor.u32 %v806, %v807
      %v810 = vrot.slane %v806, 4
      %v812 = vshrl.u32 %v590, 16
      %v814 = vrot.slane %v812, 7
      %v815 = vshll.u32 %v590, 16
      %v817 = vor.u32 %v814, %v815
      %v818 = vsel %vm598, %v810, %v817
      %v819 = vrot.slane %v814, 4
      %v821 = vshrl.u32 %v591, 16
      %v823 = vrot.slane %v821, 7
      %v824 = vshll.u32 %v591, 16
      %v826 = vor.u32 %v823, %v824
      %v827 = vrot.slane %v823, 4
      %v829 = vshrl.u32 %v592, 16
      %v831 = vrot.slane %v829, 7
      %v832 = vshll.u32 %v592, 16
      %v834 = vor.u32 %v831, %v832
      %v835 = vsel %vm598, %v827, %v834
      %v836 = vrot.slane %v831, 4
      %v838 = vshrl.u32 %v593, 16
      %v840 = vrot.slane %v838, 7
      %v841 = vshll.u32 %v593, 16
      %v843 = vor.u32 %v840, %v841
      %v844 = vrot.slane %v840, 4
      %v846 = vshrl.u32 %v594, 16
      %v848 = vrot.slane %v846, 7
      %v849 = vshll.u32 %v594, 16
      %v851 = vor.u32 %v848, %v849
      %v852 = vsel %vm598, %v844, %v851
      %v853 = vrot.slane %v848, 4
      %v855 = vshrl.u32 %v595, 16
      %v857 = vrot.slane %v855, 7
      %v858 = vshll.u32 %v595, 16
      %v860 = vor.u32 %v857, %v858
      %v861 = vrot.slane %v857, 4
      %v863 = vshrl.u32 %v596, 16
      %v865 = vrot.slane %v863, 7
      %v866 = vshll.u32 %v596, 16
      %v868 = vor.u32 %v865, %v866
      %v869 = vsel %vm598, %v861, %v868
      %v870 = vrot.slane %v865, 4
      %s919 = scalar_lea.vmem [#allocation2], 12
      %vm920 = vcmask 27648
      %vm921 = vmand %vm920, %vm509
      %v922 = vld [vmem:[%s919] sm:$0xf]
      %v923 = vsel %vm921, %v605, %v922
      %924 = vst [vmem:[%s919] sm:$0xf] %v923
      %vm925 = vcmask 27648
      %926 = vst.msk [vmem:[%s919 + $0x4] sm:$0xf] %vm925, %v614
      %v927 = vld [vmem:[%s919 + $0x8] sm:$0x1]
      %v928 = vsel %vm454, %v615, %v927
      %929 = vst [vmem:[%s919 + $0x8] sm:$0x1] %v928
      %v930 = vld [vmem:[%s919 + $0xc] sm:$0xf]
      %v931 = vsel %vm921, %v622, %v930
      %932 = vst [vmem:[%s919 + $0xc] sm:$0xf] %v931
      %933 = vst.msk [vmem:[%s919 + $0x10] sm:$0xf] %vm925, %v631
      %v934 = vld [vmem:[%s919 + $0x14] sm:$0x1]
      %v935 = vsel %vm454, %v632, %v934
      %936 = vst [vmem:[%s919 + $0x14] sm:$0x1] %v935
      %v937 = vld [vmem:[%s919 + $0x18] sm:$0xf]
      %v938 = vsel %vm921, %v639, %v937
      %939 = vst [vmem:[%s919 + $0x18] sm:$0xf] %v938
      %940 = vst.msk [vmem:[%s919 + $0x1c] sm:$0xf] %vm925, %v648
      %v941 = vld [vmem:[%s919 + $0x20] sm:$0x1]
      %v942 = vsel %vm454, %v649, %v941
      %943 = vst [vmem:[%s919 + $0x20] sm:$0x1] %v942
      %v944 = vld [vmem:[%s919 + $0x24] sm:$0xf]
      %v945 = vsel %vm921, %v656, %v944
      %946 = vst [vmem:[%s919 + $0x24] sm:$0xf] %v945
      %947 = vst.msk [vmem:[%s919 + $0x28] sm:$0xf] %vm925, %v665
      %v948 = vld [vmem:[%s919 + $0x2c] sm:$0x1]
      %v949 = vsel %vm454, %v666, %v948
      %950 = vst [vmem:[%s919 + $0x2c] sm:$0x1] %v949
      %v951 = vld [vmem:[%s919 + $0x30] sm:$0xf]
      %v952 = vsel %vm921, %v673, %v951
      %953 = vst [vmem:[%s919 + $0x30] sm:$0xf] %v952
      %954 = vst.msk [vmem:[%s919 + $0x34] sm:$0xf] %vm925, %v682
      %v955 = vld [vmem:[%s919 + $0x38] sm:$0x1]
      %v956 = vsel %vm454, %v683, %v955
      %957 = vst [vmem:[%s919 + $0x38] sm:$0x1] %v956
      %v958 = vld [vmem:[%s919 + $0x3c] sm:$0xf]
      %v959 = vsel %vm921, %v690, %v958
      %960 = vst [vmem:[%s919 + $0x3c] sm:$0xf] %v959
      %961 = vst.msk [vmem:[%s919 + $0x40] sm:$0xf] %vm925, %v699
      %v962 = vld [vmem:[%s919 + $0x44] sm:$0x1]
      %v963 = vsel %vm454, %v700, %v962
      %964 = vst [vmem:[%s919 + $0x44] sm:$0x1] %v963
      %v965 = vld [vmem:[%s919 + $0x48] sm:$0xf]
      %v966 = vsel %vm921, %v707, %v965
      %967 = vst [vmem:[%s919 + $0x48] sm:$0xf] %v966
      %968 = vst.msk [vmem:[%s919 + $0x4c] sm:$0xf] %vm925, %v716
      %v969 = vld [vmem:[%s919 + $0x50] sm:$0x1]
      %v970 = vsel %vm454, %v717, %v969
      %971 = vst [vmem:[%s919 + $0x50] sm:$0x1] %v970
      %v972 = vld [vmem:[%s919 + $0x54] sm:$0xf]
      %v973 = vsel %vm921, %v724, %v972
      %974 = vst [vmem:[%s919 + $0x54] sm:$0xf] %v973
      %975 = vst.msk [vmem:[%s919 + $0x58] sm:$0xf] %vm925, %v733
      %v976 = vld [vmem:[%s919 + $0x5c] sm:$0x1]
      %v977 = vsel %vm454, %v734, %v976
      %978 = vst [vmem:[%s919 + $0x5c] sm:$0x1] %v977
      %v979 = vld [vmem:[%s919 + $0x60] sm:$0xf]
      %v980 = vsel %vm921, %v741, %v979
      %981 = vst [vmem:[%s919 + $0x60] sm:$0xf] %v980
      %982 = vst.msk [vmem:[%s919 + $0x64] sm:$0xf] %vm925, %v750
      %v983 = vld [vmem:[%s919 + $0x68] sm:$0x1]
      %v984 = vsel %vm454, %v751, %v983
      %985 = vst [vmem:[%s919 + $0x68] sm:$0x1] %v984
      %v986 = vld [vmem:[%s919 + $0x6c] sm:$0xf]
      %v987 = vsel %vm921, %v758, %v986
      %988 = vst [vmem:[%s919 + $0x6c] sm:$0xf] %v987
      %989 = vst.msk [vmem:[%s919 + $0x70] sm:$0xf] %vm925, %v767
      %v990 = vld [vmem:[%s919 + $0x74] sm:$0x1]
      %v991 = vsel %vm454, %v768, %v990
      %992 = vst [vmem:[%s919 + $0x74] sm:$0x1] %v991
      %v993 = vld [vmem:[%s919 + $0x78] sm:$0xf]
      %v994 = vsel %vm921, %v775, %v993
      %995 = vst [vmem:[%s919 + $0x78] sm:$0xf] %v994
      %996 = vst.msk [vmem:[%s919 + $0x7c] sm:$0xf] %vm925, %v784
      %v997 = vld [vmem:[%s919 + $0x80] sm:$0x1]
      %v998 = vsel %vm454, %v785, %v997
      %999 = vst [vmem:[%s919 + $0x80] sm:$0x1] %v998
      %v1000 = vld [vmem:[%s919 + $0x84] sm:$0xf]
      %v1001 = vsel %vm921, %v792, %v1000
      %1002 = vst [vmem:[%s919 + $0x84] sm:$0xf] %v1001
      %1003 = vst.msk [vmem:[%s919 + $0x88] sm:$0xf] %vm925, %v801
      %v1004 = vld [vmem:[%s919 + $0x8c] sm:$0x1]
      %v1005 = vsel %vm454, %v802, %v1004
      %1006 = vst [vmem:[%s919 + $0x8c] sm:$0x1] %v1005
      %v1007 = vld [vmem:[%s919 + $0x90] sm:$0xf]
      %v1008 = vsel %vm921, %v809, %v1007
      %1009 = vst [vmem:[%s919 + $0x90] sm:$0xf] %v1008
      %1010 = vst.msk [vmem:[%s919 + $0x94] sm:$0xf] %vm925, %v818
      %v1011 = vld [vmem:[%s919 + $0x98] sm:$0x1]
      %v1012 = vsel %vm454, %v819, %v1011
      %1013 = vst [vmem:[%s919 + $0x98] sm:$0x1] %v1012
      %v1014 = vld [vmem:[%s919 + $0x9c] sm:$0xf]
      %v1015 = vsel %vm921, %v826, %v1014
      %1016 = vst [vmem:[%s919 + $0x9c] sm:$0xf] %v1015
      %1017 = vst.msk [vmem:[%s919 + $0xa0] sm:$0xf] %vm925, %v835
      %v1018 = vld [vmem:[%s919 + $0xa4] sm:$0x1]
      %v1019 = vsel %vm454, %v836, %v1018
      %1020 = vst [vmem:[%s919 + $0xa4] sm:$0x1] %v1019
      %v1021 = vld [vmem:[%s919 + $0xa8] sm:$0xf]
      %v1022 = vsel %vm921, %v843, %v1021
      %1023 = vst [vmem:[%s919 + $0xa8] sm:$0xf] %v1022
      %1024 = vst.msk [vmem:[%s919 + $0xac] sm:$0xf] %vm925, %v852
      %v1025 = vld [vmem:[%s919 + $0xb0] sm:$0x1]
      %v1026 = vsel %vm454, %v853, %v1025
      %1027 = vst [vmem:[%s919 + $0xb0] sm:$0x1] %v1026
      %v1028 = vld [vmem:[%s919 + $0xb4] sm:$0xf]
      %v1029 = vsel %vm921, %v860, %v1028
      %1030 = vst [vmem:[%s919 + $0xb4] sm:$0xf] %v1029
      %1031 = vst.msk [vmem:[%s919 + $0xb8] sm:$0xf] %vm925, %v869
      %v1032 = vld [vmem:[%s919 + $0xbc] sm:$0x1]
      %v1033 = vsel %vm454, %v870, %v1032
      %1034 = vst [vmem:[%s919 + $0xbc] sm:$0x1] %v1033
      %v1035 = vld [vmem:[%s407] sm:$0xf]
      %v1036 = vld [vmem:[%s407 + $0x4] sm:$0xf]
      %p1037 = scmp.gt.s32.totalorder %s23, 0
      %s1038 = scalar_select %p1037, 1, 0
      %s1039 = scvt.s32.f32 %s1038
      %p1041 = scmp.ne.f32.partialorder %s1039, %s1039
      %s1042 = sshrl.u32 %s1039, 16
      %s1043 = sand.u32 %s1042, 1
      %s1044 = sadd.s32 32767, %s1043
      %s1045 = sadd.s32 %s1039, %s1044
      %s1046 = sand.u32 %s1045, 4294901760
      %s1047 = scalar_select %p1041, 2143289344, %s1046
      %s1049 = sshrl.u32 %s1047, 16
      %s1050 = sshll.u32 %s1049, 16
      %s1051 = sor.u32 %s1049, %s1050
      %v1052 = vstv %s1051
      %v1054 = vunpack.c.l.bf16 %v1035
      %v1055 = vunpack.c.l.bf16 %v1036
      %v1056 = vunpack.c.l.bf16 %v1052
      %v1057 = vmul.f32 %v1054, %v1056
      %v1058 = vmul.f32 %v1055, %v1056
      %v1059 = vpack.c.bf16 %v1057, %v1057
      %v1060 = vpack.c.bf16 %v1058, %v1058
      %v1062 = vshrl.u32 %v1059, 16
      %v1064 = vrot.slane %v1062, 7
      %v1065 = vshll.u32 %v1059, 16
      %v1067 = vor.u32 %v1064, %v1065
      %v1068 = vrot.slane %v1064, 4
      %v1070 = vshrl.u32 %v1060, 16
      %v1072 = vrot.slane %v1070, 7
      %v1073 = vshll.u32 %v1060, 16
      %v1075 = vor.u32 %v1072, %v1073
      %v1076 = vsel %vm598, %v1068, %v1075
      %v1077 = vrot.slane %v1072, 4
      %v1081 = vld [vmem:[#allocation2] sm:$0xf]
      %v1082 = vsel %vm921, %v1067, %v1081
      %1083 = vst [vmem:[#allocation2] sm:$0xf] %v1082
      %1084 = vst.msk [vmem:[#allocation2 + $0x4] sm:$0xf] %vm925, %v1076
      %v1085 = vld [vmem:[#allocation2 + $0x8] sm:$0x1]
      %v1086 = vsel %vm454, %v1077, %v1085
      %1087 = vst [vmem:[#allocation2 + $0x8] sm:$0x1] %v1086
      %v1088 = vld [vmem:[%s424] sm:$0xf]
      %v1089 = vld [vmem:[%s424 + $0x4] sm:$0xf]
      %p1090 = scmp.lt.s32.totalorder %s23, 0
      %s1091 = scalar_select %p1090, 1, 0
      %s1092 = scvt.s32.f32 %s1091
      %p1094 = scmp.ne.f32.partialorder %s1092, %s1092
      %s1095 = sshrl.u32 %s1092, 16
      %s1096 = sand.u32 %s1095, 1
      %s1097 = sadd.s32 32767, %s1096
      %s1098 = sadd.s32 %s1092, %s1097
      %s1099 = sand.u32 %s1098, 4294901760
      %s1100 = scalar_select %p1094, 2143289344, %s1099
      %s1102 = sshrl.u32 %s1100, 16
      %s1103 = sshll.u32 %s1102, 16
      %s1104 = sor.u32 %s1102, %s1103
      %v1105 = vstv %s1104
      %v1107 = vunpack.c.l.bf16 %v1088
      %v1108 = vunpack.c.l.bf16 %v1089
      %v1109 = vunpack.c.l.bf16 %v1105
      %v1110 = vmul.f32 %v1107, %v1109
      %v1111 = vmul.f32 %v1108, %v1109
      %v1112 = vpack.c.bf16 %v1110, %v1110
      %v1113 = vpack.c.bf16 %v1111, %v1111
      %v1115 = vshrl.u32 %v1112, 16
      %v1117 = vrot.slane %v1115, 7
      %v1118 = vshll.u32 %v1112, 16
      %v1120 = vor.u32 %v1117, %v1118
      %v1121 = vrot.slane %v1117, 4
      %v1123 = vshrl.u32 %v1113, 16
      %v1125 = vrot.slane %v1123, 7
      %v1126 = vshll.u32 %v1113, 16
      %v1128 = vor.u32 %v1125, %v1126
      %v1129 = vsel %vm598, %v1121, %v1128
      %v1130 = vrot.slane %v1125, 4
      %s1134 = scalar_lea.vmem [#allocation2], 204
      %v1135 = vld [vmem:[%s1134] sm:$0xf]
      %v1136 = vsel %vm921, %v1120, %v1135
      %1137 = vst [vmem:[%s1134] sm:$0xf] %v1136
      %1138 = vst.msk [vmem:[%s1134 + $0x4] sm:$0xf] %vm925, %v1129
      %v1139 = vld [vmem:[%s1134 + $0x8] sm:$0x1]
      %v1140 = vsel %vm454, %v1130, %v1139
      %1141 = vst [vmem:[%s1134 + $0x8] sm:$0x1] %v1140
      %v1142 = vld [vmem:[#allocation2] sm:$0xf]
      %v1143 = vld [vmem:[#allocation2 + $0x4] sm:$0xf]
      %v1144 = vld [vmem:[#allocation2 + $0xc] sm:$0xf]
      %v1145 = vld [vmem:[#allocation2 + $0x10] sm:$0xf]
      %v1146 = vld [vmem:[#allocation2 + $0x18] sm:$0xf]
      %v1147 = vld [vmem:[#allocation2 + $0x1c] sm:$0xf]
      %v1148 = vld [vmem:[#allocation2 + $0x24] sm:$0xf]
      %v1149 = vld [vmem:[#allocation2 + $0x28] sm:$0xf]
      %v1150 = vld [vmem:[#allocation2 + $0x30] sm:$0xf]
      %v1151 = vld [vmem:[#allocation2 + $0x34] sm:$0xf]
      %v1152 = vld [vmem:[#allocation2 + $0x3c] sm:$0xf]
      %v1153 = vld [vmem:[#allocation2 + $0x40] sm:$0xf]
      %v1154 = vld [vmem:[#allocation2 + $0x48] sm:$0xf]
      %v1155 = vld [vmem:[#allocation2 + $0x4c] sm:$0xf]
      %v1156 = vld [vmem:[#allocation2 + $0x54] sm:$0xf]
      %v1157 = vld [vmem:[#allocation2 + $0x58] sm:$0xf]
      %v1158 = vld [vmem:[#allocation2 + $0x60] sm:$0xf]
      %v1159 = vld [vmem:[#allocation2 + $0x64] sm:$0xf]
      %v1160 = vld [vmem:[#allocation2 + $0x6c] sm:$0xf]
      %v1161 = vld [vmem:[#allocation2 + $0x70] sm:$0xf]
      %v1162 = vld [vmem:[#allocation2 + $0x78] sm:$0xf]
      %v1163 = vld [vmem:[#allocation2 + $0x7c] sm:$0xf]
      %v1164 = vld [vmem:[#allocation2 + $0x84] sm:$0xf]
      %v1165 = vld [vmem:[#allocation2 + $0x88] sm:$0xf]
      %v1166 = vld [vmem:[#allocation2 + $0x90] sm:$0xf]
      %v1167 = vld [vmem:[#allocation2 + $0x94] sm:$0xf]
      %v1168 = vld [vmem:[#allocation2 + $0x9c] sm:$0xf]
      %v1169 = vld [vmem:[#allocation2 + $0xa0] sm:$0xf]
      %v1170 = vld [vmem:[#allocation2 + $0xa8] sm:$0xf]
      %v1171 = vld [vmem:[#allocation2 + $0xac] sm:$0xf]
      %v1172 = vld [vmem:[#allocation2 + $0xb4] sm:$0xf]
      %v1173 = vld [vmem:[#allocation2 + $0xb8] sm:$0xf]
      %1174 = vst.msk [vmem:[#allocation3] sm:$0xf] %vm925, %v1142
      %1175 = vst.msk [vmem:[#allocation3 + $0x4] sm:$0xf] %vm925, %v1143
      %1176 = vst.msk [vmem:[#allocation3 + $0x8] sm:$0xf] %vm925, %v1144
      %1177 = vst.msk [vmem:[#allocation3 + $0xc] sm:$0xf] %vm925, %v1145
      %1178 = vst.msk [vmem:[#allocation3 + $0x10] sm:$0xf] %vm925, %v1146
      %1179 = vst.msk [vmem:[#allocation3 + $0x14] sm:$0xf] %vm925, %v1147
      %1180 = vst.msk [vmem:[#allocation3 + $0x18] sm:$0xf] %vm925, %v1148
      %1181 = vst.msk [vmem:[#allocation3 + $0x1c] sm:$0xf] %vm925, %v1149
      %1182 = vst.msk [vmem:[#allocation3 + $0x20] sm:$0xf] %vm925, %v1150
      %1183 = vst.msk [vmem:[#allocation3 + $0x24] sm:$0xf] %vm925, %v1151
      %1184 = vst.msk [vmem:[#allocation3 + $0x28] sm:$0xf] %vm925, %v1152
      %1185 = vst.msk [vmem:[#allocation3 + $0x2c] sm:$0xf] %vm925, %v1153
      %1186 = vst.msk [vmem:[#allocation3 + $0x30] sm:$0xf] %vm925, %v1154
      %1187 = vst.msk [vmem:[#allocation3 + $0x34] sm:$0xf] %vm925, %v1155
      %1188 = vst.msk [vmem:[#allocation3 + $0x38] sm:$0xf] %vm925, %v1156
      %1189 = vst.msk [vmem:[#allocation3 + $0x3c] sm:$0xf] %vm925, %v1157
      %1190 = vst.msk [vmem:[#allocation3 + $0x40] sm:$0xf] %vm925, %v1158
      %1191 = vst.msk [vmem:[#allocation3 + $0x44] sm:$0xf] %vm925, %v1159
      %1192 = vst.msk [vmem:[#allocation3 + $0x48] sm:$0xf] %vm925, %v1160
      %1193 = vst.msk [vmem:[#allocation3 + $0x4c] sm:$0xf] %vm925, %v1161
      %1194 = vst.msk [vmem:[#allocation3 + $0x50] sm:$0xf] %vm925, %v1162
      %1195 = vst.msk [vmem:[#allocation3 + $0x54] sm:$0xf] %vm925, %v1163
      %1196 = vst.msk [vmem:[#allocation3 + $0x58] sm:$0xf] %vm925, %v1164
      %1197 = vst.msk [vmem:[#allocation3 + $0x5c] sm:$0xf] %vm925, %v1165
      %1198 = vst.msk [vmem:[#allocation3 + $0x60] sm:$0xf] %vm925, %v1166
      %1199 = vst.msk [vmem:[#allocation3 + $0x64] sm:$0xf] %vm925, %v1167
      %1200 = vst.msk [vmem:[#allocation3 + $0x68] sm:$0xf] %vm925, %v1168
      %1201 = vst.msk [vmem:[#allocation3 + $0x6c] sm:$0xf] %vm925, %v1169
      %1202 = vst.msk [vmem:[#allocation3 + $0x70] sm:$0xf] %vm925, %v1170
      %1203 = vst.msk [vmem:[#allocation3 + $0x74] sm:$0xf] %vm925, %v1171
      %1204 = vst.msk [vmem:[#allocation3 + $0x78] sm:$0xf] %vm925, %v1172
      %1205 = vst.msk [vmem:[#allocation3 + $0x7c] sm:$0xf] %vm925, %v1173
      %v1206 = vld [vmem:[#allocation2] sm:$0xf]
      %v1207 = vld [vmem:[#allocation2 + $0x4] sm:$0xf]
      %v1208 = vld [vmem:[#allocation2 + $0x8] sm:$0x1]
      %v1209 = vld [vmem:[#allocation2 + $0xc] sm:$0xf]
      %v1210 = vld [vmem:[#allocation2 + $0x10] sm:$0xf]
      %v1211 = vld [vmem:[#allocation2 + $0x14] sm:$0x1]
      %v1212 = vld [vmem:[#allocation2 + $0x18] sm:$0xf]
      %v1213 = vld [vmem:[#allocation2 + $0x1c] sm:$0xf]
      %v1214 = vld [vmem:[#allocation2 + $0x20] sm:$0x1]
      %v1215 = vld [vmem:[#allocation2 + $0x24] sm:$0xf]
      %v1216 = vld [vmem:[#allocation2 + $0x28] sm:$0xf]
      %v1217 = vld [vmem:[#allocation2 + $0x2c] sm:$0x1]
      %v1218 = vld [vmem:[#allocation2 + $0x30] sm:$0xf]
      %v1219 = vld [vmem:[#allocation2 + $0x34] sm:$0xf]
      %v1220 = vld [vmem:[#allocation2 + $0x38] sm:$0x1]
      %v1221 = vld [vmem:[#allocation2 + $0x3c] sm:$0xf]
      %v1222 = vld [vmem:[#allocation2 + $0x40] sm:$0xf]
      %v1223 = vld [vmem:[#allocation2 + $0x44] sm:$0x1]
      %v1224 = vld [vmem:[#allocation2 + $0x48] sm:$0xf]
      %v1225 = vld [vmem:[#allocation2 + $0x4c] sm:$0xf]
      %v1226 = vld [vmem:[#allocation2 + $0x50] sm:$0x1]
      %v1227 = vld [vmem:[#allocation2 + $0x54] sm:$0xf]
      %v1228 = vld [vmem:[#allocation2 + $0x58] sm:$0xf]
      %v1229 = vld [vmem:[#allocation2 + $0x5c] sm:$0x1]
      %v1230 = vld [vmem:[#allocation2 + $0x60] sm:$0xf]
      %v1231 = vld [vmem:[#allocation2 + $0x64] sm:$0xf]
      %v1232 = vld [vmem:[#allocation2 + $0x68] sm:$0x1]
      %v1233 = vld [vmem:[#allocation2 + $0x6c] sm:$0xf]
      %v1234 = vld [vmem:[#allocation2 + $0x70] sm:$0xf]
      %v1235 = vld [vmem:[#allocation2 + $0x74] sm:$0x1]
      %v1236 = vld [vmem:[#allocation2 + $0x78] sm:$0xf]
      %v1237 = vld [vmem:[#allocation2 + $0x7c] sm:$0xf]
      %v1238 = vld [vmem:[#allocation2 + $0x80] sm:$0x1]
      %v1239 = vld [vmem:[#allocation2 + $0x84] sm:$0xf]
      %v1240 = vld [vmem:[#allocation2 + $0x88] sm:$0xf]
      %v1241 = vld [vmem:[#allocation2 + $0x8c] sm:$0x1]
      %v1242 = vld [vmem:[#allocation2 + $0x90] sm:$0xf]
      %v1243 = vld [vmem:[#allocation2 + $0x94] sm:$0xf]
      %v1244 = vld [vmem:[#allocation2 + $0x98] sm:$0x1]
      %v1245 = vld [vmem:[#allocation2 + $0x9c] sm:$0xf]
      %v1246 = vld [vmem:[#allocation2 + $0xa0] sm:$0xf]
      %v1247 = vld [vmem:[#allocation2 + $0xa4] sm:$0x1]
      %v1248 = vld [vmem:[#allocation2 + $0xa8] sm:$0xf]
      %v1249 = vld [vmem:[#allocation2 + $0xac] sm:$0xf]
      %v1250 = vld [vmem:[#allocation2 + $0xb0] sm:$0x1]
      %v1251 = vld [vmem:[#allocation2 + $0xb4] sm:$0xf]
      %v1252 = vld [vmem:[#allocation2 + $0xb8] sm:$0xf]
      %v1253 = vld [vmem:[#allocation2 + $0xbc] sm:$0x1]
      %vm1254 = vsmask.f32 3328
      %vm1255 = vsmask.f32 7440
      %vm1256 = vmor %vm1254, %vm1255
      %v1258 = vshrl.u32 %v1206, 16
      %v1260 = vrot.slane %v1258, 4
      %v1261 = vshll.u32 %v1206, 16
      %v1263 = vrot.slane %v1261, 5
      %v1264 = vor.u32 %v1260, %v1263
      %v1265 = vrot.slane %v1264, 4
      %v1267 = vshll.u32 %v1207, 16
      %v1269 = vrot.slane %v1267, 5
      %v1270 = vsel %vm1256, %v1265, %v1269
      %v1271 = vshrl.u32 %v1207, 16
      %v1273 = vrot.slane %v1271, 4
      %v1274 = vor.u32 %v1273, %v1269
      %v1275 = vrot.slane %v1274, 4
      %v1277 = vshll.u32 %v1208, 16
      %v1279 = vrot.slane %v1277, 5
      %v1280 = vsel %vm1256, %v1275, %v1279
      %v1282 = vshrl.u32 %v1209, 16
      %v1284 = vrot.slane %v1282, 4
      %v1285 = vshll.u32 %v1209, 16
      %v1287 = vrot.slane %v1285, 5
      %v1288 = vor.u32 %v1284, %v1287
      %v1289 = vrot.slane %v1288, 4
      %v1291 = vshll.u32 %v1210, 16
      %v1293 = vrot.slane %v1291, 5
      %v1294 = vsel %vm1256, %v1289, %v1293
      %v1295 = vshrl.u32 %v1210, 16
      %v1297 = vrot.slane %v1295, 4
      %v1298 = vor.u32 %v1297, %v1293
      %v1299 = vrot.slane %v1298, 4
      %v1301 = vshll.u32 %v1211, 16
      %v1303 = vrot.slane %v1301, 5
      %v1304 = vsel %vm1256, %v1299, %v1303
      %v1306 = vshrl.u32 %v1212, 16
      %v1308 = vrot.slane %v1306, 4
      %v1309 = vshll.u32 %v1212, 16
      %v1311 = vrot.slane %v1309, 5
      %v1312 = vor.u32 %v1308, %v1311
      %v1313 = vrot.slane %v1312, 4
      %v1315 = vshll.u32 %v1213, 16
      %v1317 = vrot.slane %v1315, 5
      %v1318 = vsel %vm1256, %v1313, %v1317
      %v1319 = vshrl.u32 %v1213, 16
      %v1321 = vrot.slane %v1319, 4
      %v1322 = vor.u32 %v1321, %v1317
      %v1323 = vrot.slane %v1322, 4
      %v1325 = vshll.u32 %v1214, 16
      %v1327 = vrot.slane %v1325, 5
      %v1328 = vsel %vm1256, %v1323, %v1327
      %v1330 = vshrl.u32 %v1215, 16
      %v1332 = vrot.slane %v1330, 4
      %v1333 = vshll.u32 %v1215, 16
      %v1335 = vrot.slane %v1333, 5
      %v1336 = vor.u32 %v1332, %v1335
      %v1337 = vrot.slane %v1336, 4
      %v1339 = vshll.u32 %v1216, 16
      %v1341 = vrot.slane %v1339, 5
      %v1342 = vsel %vm1256, %v1337, %v1341
      %v1343 = vshrl.u32 %v1216, 16
      %v1345 = vrot.slane %v1343, 4
      %v1346 = vor.u32 %v1345, %v1341
      %v1347 = vrot.slane %v1346, 4
      %v1349 = vshll.u32 %v1217, 16
      %v1351 = vrot.slane %v1349, 5
      %v1352 = vsel %vm1256, %v1347, %v1351
      %v1354 = vshrl.u32 %v1218, 16
      %v1356 = vrot.slane %v1354, 4
      %v1357 = vshll.u32 %v1218, 16
      %v1359 = vrot.slane %v1357, 5
      %v1360 = vor.u32 %v1356, %v1359
      %v1361 = vrot.slane %v1360, 4
      %v1363 = vshll.u32 %v1219, 16
      %v1365 = vrot.slane %v1363, 5
      %v1366 = vsel %vm1256, %v1361, %v1365
      %v1367 = vshrl.u32 %v1219, 16
      %v1369 = vrot.slane %v1367, 4
      %v1370 = vor.u32 %v1369, %v1365
      %v1371 = vrot.slane %v1370, 4
      %v1373 = vshll.u32 %v1220, 16
      %v1375 = vrot.slane %v1373, 5
      %v1376 = vsel %vm1256, %v1371, %v1375
      %v1378 = vshrl.u32 %v1221, 16
      %v1380 = vrot.slane %v1378, 4
      %v1381 = vshll.u32 %v1221, 16
      %v1383 = vrot.slane %v1381, 5
      %v1384 = vor.u32 %v1380, %v1383
      %v1385 = vrot.slane %v1384, 4
      %v1387 = vshll.u32 %v1222, 16
      %v1389 = vrot.slane %v1387, 5
      %v1390 = vsel %vm1256, %v1385, %v1389
      %v1391 = vshrl.u32 %v1222, 16
      %v1393 = vrot.slane %v1391, 4
      %v1394 = vor.u32 %v1393, %v1389
      %v1395 = vrot.slane %v1394, 4
      %v1397 = vshll.u32 %v1223, 16
      %v1399 = vrot.slane %v1397, 5
      %v1400 = vsel %vm1256, %v1395, %v1399
      %v1402 = vshrl.u32 %v1224, 16
      %v1404 = vrot.slane %v1402, 4
      %v1405 = vshll.u32 %v1224, 16
      %v1407 = vrot.slane %v1405, 5
      %v1408 = vor.u32 %v1404, %v1407
      %v1409 = vrot.slane %v1408, 4
      %v1411 = vshll.u32 %v1225, 16
      %v1413 = vrot.slane %v1411, 5
      %v1414 = vsel %vm1256, %v1409, %v1413
      %v1415 = vshrl.u32 %v1225, 16
      %v1417 = vrot.slane %v1415, 4
      %v1418 = vor.u32 %v1417, %v1413
      %v1419 = vrot.slane %v1418, 4
      %v1421 = vshll.u32 %v1226, 16
      %v1423 = vrot.slane %v1421, 5
      %v1424 = vsel %vm1256, %v1419, %v1423
      %v1426 = vshrl.u32 %v1227, 16
      %v1428 = vrot.slane %v1426, 4
      %v1429 = vshll.u32 %v1227, 16
      %v1431 = vrot.slane %v1429, 5
      %v1432 = vor.u32 %v1428, %v1431
      %v1433 = vrot.slane %v1432, 4
      %v1435 = vshll.u32 %v1228, 16
      %v1437 = vrot.slane %v1435, 5
      %v1438 = vsel %vm1256, %v1433, %v1437
      %v1439 = vshrl.u32 %v1228, 16
      %v1441 = vrot.slane %v1439, 4
      %v1442 = vor.u32 %v1441, %v1437
      %v1443 = vrot.slane %v1442, 4
      %v1445 = vshll.u32 %v1229, 16
      %v1447 = vrot.slane %v1445, 5
      %v1448 = vsel %vm1256, %v1443, %v1447
      %v1450 = vshrl.u32 %v1230, 16
      %v1452 = vrot.slane %v1450, 4
      %v1453 = vshll.u32 %v1230, 16
      %v1455 = vrot.slane %v1453, 5
      %v1456 = vor.u32 %v1452, %v1455
      %v1457 = vrot.slane %v1456, 4
      %v1459 = vshll.u32 %v1231, 16
      %v1461 = vrot.slane %v1459, 5
      %v1462 = vsel %vm1256, %v1457, %v1461
      %v1463 = vshrl.u32 %v1231, 16
      %v1465 = vrot.slane %v1463, 4
      %v1466 = vor.u32 %v1465, %v1461
      %v1467 = vrot.slane %v1466, 4
      %v1469 = vshll.u32 %v1232, 16
      %v1471 = vrot.slane %v1469, 5
      %v1472 = vsel %vm1256, %v1467, %v1471
      %v1474 = vshrl.u32 %v1233, 16
      %v1476 = vrot.slane %v1474, 4
      %v1477 = vshll.u32 %v1233, 16
      %v1479 = vrot.slane %v1477, 5
      %v1480 = vor.u32 %v1476, %v1479
      %v1481 = vrot.slane %v1480, 4
      %v1483 = vshll.u32 %v1234, 16
      %v1485 = vrot.slane %v1483, 5
      %v1486 = vsel %vm1256, %v1481, %v1485
      %v1487 = vshrl.u32 %v1234, 16
      %v1489 = vrot.slane %v1487, 4
      %v1490 = vor.u32 %v1489, %v1485
      %v1491 = vrot.slane %v1490, 4
      %v1493 = vshll.u32 %v1235, 16
      %v1495 = vrot.slane %v1493, 5
      %v1496 = vsel %vm1256, %v1491, %v1495
      %v1498 = vshrl.u32 %v1236, 16
      %v1500 = vrot.slane %v1498, 4
      %v1501 = vshll.u32 %v1236, 16
      %v1503 = vrot.slane %v1501, 5
      %v1504 = vor.u32 %v1500, %v1503
      %v1505 = vrot.slane %v1504, 4
      %v1507 = vshll.u32 %v1237, 16
      %v1509 = vrot.slane %v1507, 5
      %v1510 = vsel %vm1256, %v1505, %v1509
      %v1511 = vshrl.u32 %v1237, 16
      %v1513 = vrot.slane %v1511, 4
      %v1514 = vor.u32 %v1513, %v1509
      %v1515 = vrot.slane %v1514, 4
      %v1517 = vshll.u32 %v1238, 16
      %v1519 = vrot.slane %v1517, 5
      %v1520 = vsel %vm1256, %v1515, %v1519
      %v1522 = vshrl.u32 %v1239, 16
      %v1524 = vrot.slane %v1522, 4
      %v1525 = vshll.u32 %v1239, 16
      %v1527 = vrot.slane %v1525, 5
      %v1528 = vor.u32 %v1524, %v1527
      %v1529 = vrot.slane %v1528, 4
      %v1531 = vshll.u32 %v1240, 16
      %v1533 = vrot.slane %v1531, 5
      %v1534 = vsel %vm1256, %v1529, %v1533
      %v1535 = vshrl.u32 %v1240, 16
      %v1537 = vrot.slane %v1535, 4
      %v1538 = vor.u32 %v1537, %v1533
      %v1539 = vrot.slane %v1538, 4
      %v1541 = vshll.u32 %v1241, 16
      %v1543 = vrot.slane %v1541, 5
      %v1544 = vsel %vm1256, %v1539, %v1543
      %v1546 = vshrl.u32 %v1242, 16
      %v1548 = vrot.slane %v1546, 4
      %v1549 = vshll.u32 %v1242, 16
      %v1551 = vrot.slane %v1549, 5
      %v1552 = vor.u32 %v1548, %v1551
      %v1553 = vrot.slane %v1552, 4
      %v1555 = vshll.u32 %v1243, 16
      %v1557 = vrot.slane %v1555, 5
      %v1558 = vsel %vm1256, %v1553, %v1557
      %v1559 = vshrl.u32 %v1243, 16
      %v1561 = vrot.slane %v1559, 4
      %v1562 = vor.u32 %v1561, %v1557
      %v1563 = vrot.slane %v1562, 4
      %v1565 = vshll.u32 %v1244, 16
      %v1567 = vrot.slane %v1565, 5
      %v1568 = vsel %vm1256, %v1563, %v1567
      %v1570 = vshrl.u32 %v1245, 16
      %v1572 = vrot.slane %v1570, 4
      %v1573 = vshll.u32 %v1245, 16
      %v1575 = vrot.slane %v1573, 5
      %v1576 = vor.u32 %v1572, %v1575
      %v1577 = vrot.slane %v1576, 4
      %v1579 = vshll.u32 %v1246, 16
      %v1581 = vrot.slane %v1579, 5
      %v1582 = vsel %vm1256, %v1577, %v1581
      %v1583 = vshrl.u32 %v1246, 16
      %v1585 = vrot.slane %v1583, 4
      %v1586 = vor.u32 %v1585, %v1581
      %v1587 = vrot.slane %v1586, 4
      %v1589 = vshll.u32 %v1247, 16
      %v1591 = vrot.slane %v1589, 5
      %v1592 = vsel %vm1256, %v1587, %v1591
      %v1594 = vshrl.u32 %v1248, 16
      %v1596 = vrot.slane %v1594, 4
      %v1597 = vshll.u32 %v1248, 16
      %v1599 = vrot.slane %v1597, 5
      %v1600 = vor.u32 %v1596, %v1599
      %v1601 = vrot.slane %v1600, 4
      %v1603 = vshll.u32 %v1249, 16
      %v1605 = vrot.slane %v1603, 5
      %v1606 = vsel %vm1256, %v1601, %v1605
      %v1607 = vshrl.u32 %v1249, 16
      %v1609 = vrot.slane %v1607, 4
      %v1610 = vor.u32 %v1609, %v1605
      %v1611 = vrot.slane %v1610, 4
      %v1613 = vshll.u32 %v1250, 16
      %v1615 = vrot.slane %v1613, 5
      %v1616 = vsel %vm1256, %v1611, %v1615
      %v1618 = vshrl.u32 %v1251, 16
      %v1620 = vrot.slane %v1618, 4
      %v1621 = vshll.u32 %v1251, 16
      %v1623 = vrot.slane %v1621, 5
      %v1624 = vor.u32 %v1620, %v1623
      %v1625 = vrot.slane %v1624, 4
      %v1627 = vshll.u32 %v1252, 16
      %v1629 = vrot.slane %v1627, 5
      %v1630 = vsel %vm1256, %v1625, %v1629
      %v1631 = vshrl.u32 %v1252, 16
      %v1633 = vrot.slane %v1631, 4
      %v1634 = vor.u32 %v1633, %v1629
      %v1635 = vrot.slane %v1634, 4
      %v1637 = vshll.u32 %v1253, 16
      %v1639 = vrot.slane %v1637, 5
      %v1640 = vsel %vm1256, %v1635, %v1639
      %1641 = vrot.lane.b32.xlu0 %v1270, 4
      %v1642 = vpop.permute.xlu0 %1641
      %1643 = vrot.lane.b32.xlu0 %v1280, 4
      %v1644 = vpop.permute.xlu0 %1643
      %1645 = vrot.lane.b32.xlu0 %v1294, 4
      %v1646 = vpop.permute.xlu0 %1645
      %1647 = vrot.lane.b32.xlu0 %v1304, 4
      %v1648 = vpop.permute.xlu0 %1647
      %1649 = vrot.lane.b32.xlu0 %v1318, 4
      %v1650 = vpop.permute.xlu0 %1649
      %1651 = vrot.lane.b32.xlu0 %v1328, 4
      %v1652 = vpop.permute.xlu0 %1651
      %1653 = vrot.lane.b32.xlu0 %v1342, 4
      %v1654 = vpop.permute.xlu0 %1653
      %1655 = vrot.lane.b32.xlu0 %v1352, 4
      %v1656 = vpop.permute.xlu0 %1655
      %1657 = vrot.lane.b32.xlu0 %v1366, 4
      %v1658 = vpop.permute.xlu0 %1657
      %1659 = vrot.lane.b32.xlu0 %v1376, 4
      %v1660 = vpop.permute.xlu0 %1659
      %1661 = vrot.lane.b32.xlu0 %v1390, 4
      %v1662 = vpop.permute.xlu0 %1661
      %1663 = vrot.lane.b32.xlu0 %v1400, 4
      %v1664 = vpop.permute.xlu0 %1663
      %1665 = vrot.lane.b32.xlu0 %v1414, 4
      %v1666 = vpop.permute.xlu0 %1665
      %1667 = vrot.lane.b32.xlu0 %v1424, 4
      %v1668 = vpop.permute.xlu0 %1667
      %1669 = vrot.lane.b32.xlu0 %v1438, 4
      %v1670 = vpop.permute.xlu0 %1669
      %1671 = vrot.lane.b32.xlu0 %v1448, 4
      %v1672 = vpop.permute.xlu0 %1671
      %1673 = vrot.lane.b32.xlu0 %v1462, 4
      %v1674 = vpop.permute.xlu0 %1673
      %1675 = vrot.lane.b32.xlu0 %v1472, 4
      %v1676 = vpop.permute.xlu0 %1675
      %1677 = vrot.lane.b32.xlu0 %v1486, 4
      %v1678 = vpop.permute.xlu0 %1677
      %1679 = vrot.lane.b32.xlu0 %v1496, 4
      %v1680 = vpop.permute.xlu0 %1679
      %1681 = vrot.lane.b32.xlu0 %v1510, 4
      %v1682 = vpop.permute.xlu0 %1681
      %1683 = vrot.lane.b32.xlu0 %v1520, 4
      %v1684 = vpop.permute.xlu0 %1683
      %1685 = vrot.lane.b32.xlu0 %v1534, 4
      %v1686 = vpop.permute.xlu0 %1685
      %1687 = vrot.lane.b32.xlu0 %v1544, 4
      %v1688 = vpop.permute.xlu0 %1687
      %1689 = vrot.lane.b32.xlu0 %v1558, 4
      %v1690 = vpop.permute.xlu0 %1689
      %1691 = vrot.lane.b32.xlu0 %v1568, 4
      %v1692 = vpop.permute.xlu0 %1691
      %1693 = vrot.lane.b32.xlu0 %v1582, 4
      %v1694 = vpop.permute.xlu0 %1693
      %1695 = vrot.lane.b32.xlu0 %v1592, 4
      %v1696 = vpop.permute.xlu0 %1695
      %1697 = vrot.lane.b32.xlu0 %v1606, 4
      %v1698 = vpop.permute.xlu0 %1697
      %1699 = vrot.lane.b32.xlu0 %v1616, 4
      %v1700 = vpop.permute.xlu0 %1699
      %1701 = vrot.lane.b32.xlu0 %v1630, 4
      %v1702 = vpop.permute.xlu0 %1701
      %1703 = vrot.lane.b32.xlu0 %v1640, 4
      %v1704 = vpop.permute.xlu0 %1703
      %vm1737 = vcmask 60448
      %1738 = vst.msk [vmem:[#allocation3] sm:$0xf] %vm1737, %v1642
      %1739 = vst.msk [vmem:[#allocation3 + $0x4] sm:$0xf] %vm1737, %v1644
      %1740 = vst.msk [vmem:[#allocation3 + $0x8] sm:$0xf] %vm1737, %v1646
      %1741 = vst.msk [vmem:[#allocation3 + $0xc] sm:$0xf] %vm1737, %v1648
      %1742 = vst.msk [vmem:[#allocation3 + $0x10] sm:$0xf] %vm1737, %v1650
      %1743 = vst.msk [vmem:[#allocation3 + $0x14] sm:$0xf] %vm1737, %v1652
      %1744 = vst.msk [vmem:[#allocation3 + $0x18] sm:$0xf] %vm1737, %v1654
      %1745 = vst.msk [vmem:[#allocation3 + $0x1c] sm:$0xf] %vm1737, %v1656
      %1746 = vst.msk [vmem:[#allocation3 + $0x20] sm:$0xf] %vm1737, %v1658
      %1747 = vst.msk [vmem:[#allocation3 + $0x24] sm:$0xf] %vm1737, %v1660
      %1748 = vst.msk [vmem:[#allocation3 + $0x28] sm:$0xf] %vm1737, %v1662
      %1749 = vst.msk [vmem:[#allocation3 + $0x2c] sm:$0xf] %vm1737, %v1664
      %1750 = vst.msk [vmem:[#allocation3 + $0x30] sm:$0xf] %vm1737, %v1666
      %1751 = vst.msk [vmem:[#allocation3 + $0x34] sm:$0xf] %vm1737, %v1668
      %1752 = vst.msk [vmem:[#allocation3 + $0x38] sm:$0xf] %vm1737, %v1670
      %1753 = vst.msk [vmem:[#allocation3 + $0x3c] sm:$0xf] %vm1737, %v1672
      %1754 = vst.msk [vmem:[#allocation3 + $0x40] sm:$0xf] %vm1737, %v1674
      %1755 = vst.msk [vmem:[#allocation3 + $0x44] sm:$0xf] %vm1737, %v1676
      %1756 = vst.msk [vmem:[#allocation3 + $0x48] sm:$0xf] %vm1737, %v1678
      %1757 = vst.msk [vmem:[#allocation3 + $0x4c] sm:$0xf] %vm1737, %v1680
      %1758 = vst.msk [vmem:[#allocation3 + $0x50] sm:$0xf] %vm1737, %v1682
      %1759 = vst.msk [vmem:[#allocation3 + $0x54] sm:$0xf] %vm1737, %v1684
      %1760 = vst.msk [vmem:[#allocation3 + $0x58] sm:$0xf] %vm1737, %v1686
      %1761 = vst.msk [vmem:[#allocation3 + $0x5c] sm:$0xf] %vm1737, %v1688
      %1762 = vst.msk [vmem:[#allocation3 + $0x60] sm:$0xf] %vm1737, %v1690
      %1763 = vst.msk [vmem:[#allocation3 + $0x64] sm:$0xf] %vm1737, %v1692
      %1764 = vst.msk [vmem:[#allocation3 + $0x68] sm:$0xf] %vm1737, %v1694
      %1765 = vst.msk [vmem:[#allocation3 + $0x6c] sm:$0xf] %vm1737, %v1696
      %1766 = vst.msk [vmem:[#allocation3 + $0x70] sm:$0xf] %vm1737, %v1698
      %1767 = vst.msk [vmem:[#allocation3 + $0x74] sm:$0xf] %vm1737, %v1700
      %1768 = vst.msk [vmem:[#allocation3 + $0x78] sm:$0xf] %vm1737, %v1702
      %1769 = vst.msk [vmem:[#allocation3 + $0x7c] sm:$0xf] %vm1737, %v1704
      %v1770 = vld [vmem:[#allocation2] sm:$0xe]
      %v1771 = vld [vmem:[#allocation2 + $0x4] sm:$0xf]
      %v1772 = vld [vmem:[#allocation2 + $0x8] sm:$0x1]
      %v1773 = vld [vmem:[#allocation2 + $0xc] sm:$0xe]
      %v1774 = vld [vmem:[#allocation2 + $0x10] sm:$0xf]
      %v1775 = vld [vmem:[#allocation2 + $0x14] sm:$0x1]
      %v1776 = vld [vmem:[#allocation2 + $0x18] sm:$0xe]
      %v1777 = vld [vmem:[#allocation2 + $0x1c] sm:$0xf]
      %v1778 = vld [vmem:[#allocation2 + $0x20] sm:$0x1]
      %v1779 = vld [vmem:[#allocation2 + $0x24] sm:$0xe]
      %v1780 = vld [vmem:[#allocation2 + $0x28] sm:$0xf]
      %v1781 = vld [vmem:[#allocation2 + $0x2c] sm:$0x1]
      %v1782 = vld [vmem:[#allocation2 + $0x30] sm:$0xe]
      %v1783 = vld [vmem:[#allocation2 + $0x34] sm:$0xf]
      %v1784 = vld [vmem:[#allocation2 + $0x38] sm:$0x1]
      %v1785 = vld [vmem:[#allocation2 + $0x3c] sm:$0xe]
      %v1786 = vld [vmem:[#allocation2 + $0x40] sm:$0xf]
      %v1787 = vld [vmem:[#allocation2 + $0x44] sm:$0x1]
      %v1788 = vld [vmem:[#allocation2 + $0x48] sm:$0xe]
      %v1789 = vld [vmem:[#allocation2 + $0x4c] sm:$0xf]
      %v1790 = vld [vmem:[#allocation2 + $0x50] sm:$0x1]
      %v1791 = vld [vmem:[#allocation2 + $0x54] sm:$0xe]
      %v1792 = vld [vmem:[#allocation2 + $0x58] sm:$0xf]
      %v1793 = vld [vmem:[#allocation2 + $0x5c] sm:$0x1]
      %v1794 = vld [vmem:[#allocation2 + $0x60] sm:$0xe]
      %v1795 = vld [vmem:[#allocation2 + $0x64] sm:$0xf]
      %v1796 = vld [vmem:[#allocation2 + $0x68] sm:$0x1]
      %v1797 = vld [vmem:[#allocation2 + $0x6c] sm:$0xe]
      %v1798 = vld [vmem:[#allocation2 + $0x70] sm:$0xf]
      %v1799 = vld [vmem:[#allocation2 + $0x74] sm:$0x1]
      %v1800 = vld [vmem:[#allocation2 + $0x78] sm:$0xe]
      %v1801 = vld [vmem:[#allocation2 + $0x7c] sm:$0xf]
      %v1802 = vld [vmem:[#allocation2 + $0x80] sm:$0x1]
      %v1803 = vld [vmem:[#allocation2 + $0x84] sm:$0xe]
      %v1804 = vld [vmem:[#allocation2 + $0x88] sm:$0xf]
      %v1805 = vld [vmem:[#allocation2 + $0x8c] sm:$0x1]
      %v1806 = vld [vmem:[#allocation2 + $0x90] sm:$0xe]
      %v1807 = vld [vmem:[#allocation2 + $0x94] sm:$0xf]
      %v1808 = vld [vmem:[#allocation2 + $0x98] sm:$0x1]
      %v1809 = vld [vmem:[#allocation2 + $0x9c] sm:$0xe]
      %v1810 = vld [vmem:[#allocation2 + $0xa0] sm:$0xf]
      %v1811 = vld [vmem:[#allocation2 + $0xa4] sm:$0x1]
      %v1812 = vld [vmem:[#allocation2 + $0xa8] sm:$0xe]
      %v1813 = vld [vmem:[#allocation2 + $0xac] sm:$0xf]
      %v1814 = vld [vmem:[#allocation2 + $0xb0] sm:$0x1]
      %v1815 = vld [vmem:[#allocation2 + $0xb4] sm:$0xe]
      %v1816 = vld [vmem:[#allocation2 + $0xb8] sm:$0xf]
      %v1817 = vld [vmem:[#allocation2 + $0xbc] sm:$0x1]
      %vm1866 = vcmask 1042432
      %vm1867 = vcmask 1046532
      %vm1868 = vmor %vm1866, %vm1867
      %v1869 = vrot.slane %v1770, 5
      %v1870 = vrot.slane %v1869, 4
      %v1871 = vrot.slane %v1771, 5
      %v1872 = vsel %vm1868, %v1870, %v1871
      %v1873 = vrot.slane %v1871, 4
      %v1874 = vrot.slane %v1772, 5
      %v1875 = vsel %vm1868, %v1873, %v1874
      %v1876 = vrot.slane %v1773, 5
      %v1877 = vrot.slane %v1876, 4
      %v1878 = vrot.slane %v1774, 5
      %v1879 = vsel %vm1868, %v1877, %v1878
      %v1880 = vrot.slane %v1878, 4
      %v1881 = vrot.slane %v1775, 5
      %v1882 = vsel %vm1868, %v1880, %v1881
      %v1883 = vrot.slane %v1776, 5
      %v1884 = vrot.slane %v1883, 4
      %v1885 = vrot.slane %v1777, 5
      %v1886 = vsel %vm1868, %v1884, %v1885
      %v1887 = vrot.slane %v1885, 4
      %v1888 = vrot.slane %v1778, 5
      %v1889 = vsel %vm1868, %v1887, %v1888
      %v1890 = vrot.slane %v1779, 5
      %v1891 = vrot.slane %v1890, 4
      %v1892 = vrot.slane %v1780, 5
      %v1893 = vsel %vm1868, %v1891, %v1892
      %v1894 = vrot.slane %v1892, 4
      %v1895 = vrot.slane %v1781, 5
      %v1896 = vsel %vm1868, %v1894, %v1895
      %v1897 = vrot.slane %v1782, 5
      %v1898 = vrot.slane %v1897, 4
      %v1899 = vrot.slane %v1783, 5
      %v1900 = vsel %vm1868, %v1898, %v1899
      %v1901 = vrot.slane %v1899, 4
      %v1902 = vrot.slane %v1784, 5
      %v1903 = vsel %vm1868, %v1901, %v1902
      %v1904 = vrot.slane %v1785, 5
      %v1905 = vrot.slane %v1904, 4
      %v1906 = vrot.slane %v1786, 5
      %v1907 = vsel %vm1868, %v1905, %v1906
      %v1908 = vrot.slane %v1906, 4
      %v1909 = vrot.slane %v1787, 5
      %v1910 = vsel %vm1868, %v1908, %v1909
      %v1911 = vrot.slane %v1788, 5
      %v1912 = vrot.slane %v1911, 4
      %v1913 = vrot.slane %v1789, 5
      %v1914 = vsel %vm1868, %v1912, %v1913
      %v1915 = vrot.slane %v1913, 4
      %v1916 = vrot.slane %v1790, 5
      %v1917 = vsel %vm1868, %v1915, %v1916
      %v1918 = vrot.slane %v1791, 5
      %v1919 = vrot.slane %v1918, 4
      %v1920 = vrot.slane %v1792, 5
      %v1921 = vsel %vm1868, %v1919, %v1920
      %v1922 = vrot.slane %v1920, 4
      %v1923 = vrot.slane %v1793, 5
      %v1924 = vsel %vm1868, %v1922, %v1923
      %v1925 = vrot.slane %v1794, 5
      %v1926 = vrot.slane %v1925, 4
      %v1927 = vrot.slane %v1795, 5
      %v1928 = vsel %vm1868, %v1926, %v1927
      %v1929 = vrot.slane %v1927, 4
      %v1930 = vrot.slane %v1796, 5
      %v1931 = vsel %vm1868, %v1929, %v1930
      %v1932 = vrot.slane %v1797, 5
      %v1933 = vrot.slane %v1932, 4
      %v1934 = vrot.slane %v1798, 5
      %v1935 = vsel %vm1868, %v1933, %v1934
      %v1936 = vrot.slane %v1934, 4
      %v1937 = vrot.slane %v1799, 5
      %v1938 = vsel %vm1868, %v1936, %v1937
      %v1939 = vrot.slane %v1800, 5
      %v1940 = vrot.slane %v1939, 4
      %v1941 = vrot.slane %v1801, 5
      %v1942 = vsel %vm1868, %v1940, %v1941
      %v1943 = vrot.slane %v1941, 4
      %v1944 = vrot.slane %v1802, 5
      %v1945 = vsel %vm1868, %v1943, %v1944
      %v1946 = vrot.slane %v1803, 5
      %v1947 = vrot.slane %v1946, 4
      %v1948 = vrot.slane %v1804, 5
      %v1949 = vsel %vm1868, %v1947, %v1948
      %v1950 = vrot.slane %v1948, 4
      %v1951 = vrot.slane %v1805, 5
      %v1952 = vsel %vm1868, %v1950, %v1951
      %v1953 = vrot.slane %v1806, 5
      %v1954 = vrot.slane %v1953, 4
      %v1955 = vrot.slane %v1807, 5
      %v1956 = vsel %vm1868, %v1954, %v1955
      %v1957 = vrot.slane %v1955, 4
      %v1958 = vrot.slane %v1808, 5
      %v1959 = vsel %vm1868, %v1957, %v1958
      %v1960 = vrot.slane %v1809, 5
      %v1961 = vrot.slane %v1960, 4
      %v1962 = vrot.slane %v1810, 5
      %v1963 = vsel %vm1868, %v1961, %v1962
      %v1964 = vrot.slane %v1962, 4
      %v1965 = vrot.slane %v1811, 5
      %v1966 = vsel %vm1868, %v1964, %v1965
      %v1967 = vrot.slane %v1812, 5
      %v1968 = vrot.slane %v1967, 4
      %v1969 = vrot.slane %v1813, 5
      %v1970 = vsel %vm1868, %v1968, %v1969
      %v1971 = vrot.slane %v1969, 4
      %v1972 = vrot.slane %v1814, 5
      %v1973 = vsel %vm1868, %v1971, %v1972
      %v1974 = vrot.slane %v1815, 5
      %v1975 = vrot.slane %v1974, 4
      %v1976 = vrot.slane %v1816, 5
      %v1977 = vsel %vm1868, %v1975, %v1976
      %v1978 = vrot.slane %v1976, 4
      %v1979 = vrot.slane %v1817, 5
      %v1980 = vsel %vm1868, %v1978, %v1979
      %1981 = vrot.lane.b32.xlu0 %v1872, 8
      %v1982 = vpop.permute.xlu0 %1981
      %1983 = vrot.lane.b32.xlu0 %v1875, 8
      %v1984 = vpop.permute.xlu0 %1983
      %1985 = vrot.lane.b32.xlu0 %v1879, 8
      %v1986 = vpop.permute.xlu0 %1985
      %1987 = vrot.lane.b32.xlu0 %v1882, 8
      %v1988 = vpop.permute.xlu0 %1987
      %1989 = vrot.lane.b32.xlu0 %v1886, 8
      %v1990 = vpop.permute.xlu0 %1989
      %1991 = vrot.lane.b32.xlu0 %v1889, 8
      %v1992 = vpop.permute.xlu0 %1991
      %1993 = vrot.lane.b32.xlu0 %v1893, 8
      %v1994 = vpop.permute.xlu0 %1993
      %1995 = vrot.lane.b32.xlu0 %v1896, 8
      %v1996 = vpop.permute.xlu0 %1995
      %1997 = vrot.lane.b32.xlu0 %v1900, 8
      %v1998 = vpop.permute.xlu0 %1997
      %1999 = vrot.lane.b32.xlu0 %v1903, 8
      %v2000 = vpop.permute.xlu0 %1999
      %2001 = vrot.lane.b32.xlu0 %v1907, 8
      %v2002 = vpop.permute.xlu0 %2001
      %2003 = vrot.lane.b32.xlu0 %v1910, 8
      %v2004 = vpop.permute.xlu0 %2003
      %2005 = vrot.lane.b32.xlu0 %v1914, 8
      %v2006 = vpop.permute.xlu0 %2005
      %2007 = vrot.lane.b32.xlu0 %v1917, 8
      %v2008 = vpop.permute.xlu0 %2007
      %2009 = vrot.lane.b32.xlu0 %v1921, 8
      %v2010 = vpop.permute.xlu0 %2009
      %2011 = vrot.lane.b32.xlu0 %v1924, 8
      %v2012 = vpop.permute.xlu0 %2011
      %2013 = vrot.lane.b32.xlu0 %v1928, 8
      %v2014 = vpop.permute.xlu0 %2013
      %2015 = vrot.lane.b32.xlu0 %v1931, 8
      %v2016 = vpop.permute.xlu0 %2015
      %2017 = vrot.lane.b32.xlu0 %v1935, 8
      %v2018 = vpop.permute.xlu0 %2017
      %2019 = vrot.lane.b32.xlu0 %v1938, 8
      %v2020 = vpop.permute.xlu0 %2019
      %2021 = vrot.lane.b32.xlu0 %v1942, 8
      %v2022 = vpop.permute.xlu0 %2021
      %2023 = vrot.lane.b32.xlu0 %v1945, 8
      %v2024 = vpop.permute.xlu0 %2023
      %2025 = vrot.lane.b32.xlu0 %v1949, 8
      %v2026 = vpop.permute.xlu0 %2025
      %2027 = vrot.lane.b32.xlu0 %v1952, 8
      %v2028 = vpop.permute.xlu0 %2027
      %2029 = vrot.lane.b32.xlu0 %v1956, 8
      %v2030 = vpop.permute.xlu0 %2029
      %2031 = vrot.lane.b32.xlu0 %v1959, 8
      %v2032 = vpop.permute.xlu0 %2031
      %2033 = vrot.lane.b32.xlu0 %v1963, 8
      %v2034 = vpop.permute.xlu0 %2033
      %2035 = vrot.lane.b32.xlu0 %v1966, 8
      %v2036 = vpop.permute.xlu0 %2035
      %2037 = vrot.lane.b32.xlu0 %v1970, 8
      %v2038 = vpop.permute.xlu0 %2037
      %2039 = vrot.lane.b32.xlu0 %v1973, 8
      %v2040 = vpop.permute.xlu0 %2039
      %2041 = vrot.lane.b32.xlu0 %v1977, 8
      %v2042 = vpop.permute.xlu0 %2041
      %2043 = vrot.lane.b32.xlu0 %v1980, 8
      %v2044 = vpop.permute.xlu0 %2043
      %vm2077 = vcmask 93248
      %2078 = vst.msk [vmem:[#allocation3] sm:$0xf] %vm2077, %v1982
      %2079 = vst.msk [vmem:[#allocation3 + $0x4] sm:$0xf] %vm2077, %v1984
      %2080 = vst.msk [vmem:[#allocation3 + $0x8] sm:$0xf] %vm2077, %v1986
      %2081 = vst.msk [vmem:[#allocation3 + $0xc] sm:$0xf] %vm2077, %v1988
      %2082 = vst.msk [vmem:[#allocation3 + $0x10] sm:$0xf] %vm2077, %v1990
      %2083 = vst.msk [vmem:[#allocation3 + $0x14] sm:$0xf] %vm2077, %v1992
      %2084 = vst.msk [vmem:[#allocation3 + $0x18] sm:$0xf] %vm2077, %v1994
      %2085 = vst.msk [vmem:[#allocation3 + $0x1c] sm:$0xf] %vm2077, %v1996
      %2086 = vst.msk [vmem:[#allocation3 + $0x20] sm:$0xf] %vm2077, %v1998
      %2087 = vst.msk [vmem:[#allocation3 + $0x24] sm:$0xf] %vm2077, %v2000
      %2088 = vst.msk [vmem:[#allocation3 + $0x28] sm:$0xf] %vm2077, %v2002
      %2089 = vst.msk [vmem:[#allocation3 + $0x2c] sm:$0xf] %vm2077, %v2004
      %2090 = vst.msk [vmem:[#allocation3 + $0x30] sm:$0xf] %vm2077, %v2006
      %2091 = vst.msk [vmem:[#allocation3 + $0x34] sm:$0xf] %vm2077, %v2008
      %2092 = vst.msk [vmem:[#allocation3 + $0x38] sm:$0xf] %vm2077, %v2010
      %2093 = vst.msk [vmem:[#allocation3 + $0x3c] sm:$0xf] %vm2077, %v2012
      %2094 = vst.msk [vmem:[#allocation3 + $0x40] sm:$0xf] %vm2077, %v2014
      %2095 = vst.msk [vmem:[#allocation3 + $0x44] sm:$0xf] %vm2077, %v2016
      %2096 = vst.msk [vmem:[#allocation3 + $0x48] sm:$0xf] %vm2077, %v2018
      %2097 = vst.msk [vmem:[#allocation3 + $0x4c] sm:$0xf] %vm2077, %v2020
      %2098 = vst.msk [vmem:[#allocation3 + $0x50] sm:$0xf] %vm2077, %v2022
      %2099 = vst.msk [vmem:[#allocation3 + $0x54] sm:$0xf] %vm2077, %v2024
      %2100 = vst.msk [vmem:[#allocation3 + $0x58] sm:$0xf] %vm2077, %v2026
      %2101 = vst.msk [vmem:[#allocation3 + $0x5c] sm:$0xf] %vm2077, %v2028
      %2102 = vst.msk [vmem:[#allocation3 + $0x60] sm:$0xf] %vm2077, %v2030
      %2103 = vst.msk [vmem:[#allocation3 + $0x64] sm:$0xf] %vm2077, %v2032
      %2104 = vst.msk [vmem:[#allocation3 + $0x68] sm:$0xf] %vm2077, %v2034
      %2105 = vst.msk [vmem:[#allocation3 + $0x6c] sm:$0xf] %vm2077, %v2036
      %2106 = vst.msk [vmem:[#allocation3 + $0x70] sm:$0xf] %vm2077, %v2038
      %2107 = vst.msk [vmem:[#allocation3 + $0x74] sm:$0xf] %vm2077, %v2040
      %2108 = vst.msk [vmem:[#allocation3 + $0x78] sm:$0xf] %vm2077, %v2042
      %2109 = vst.msk [vmem:[#allocation3 + $0x7c] sm:$0xf] %vm2077, %v2044
      %v2110 = vld [vmem:[%s919] sm:$0xf]
      %v2111 = vld [vmem:[%s919 + $0x4] sm:$0xf]
      %v2112 = vld [vmem:[%s919 + $0xc] sm:$0xf]
      %v2113 = vld [vmem:[%s919 + $0x10] sm:$0xf]
      %v2114 = vld [vmem:[%s919 + $0x18] sm:$0xf]
      %v2115 = vld [vmem:[%s919 + $0x1c] sm:$0xf]
      %v2116 = vld [vmem:[%s919 + $0x24] sm:$0xf]
      %v2117 = vld [vmem:[%s919 + $0x28] sm:$0xf]
      %v2118 = vld [vmem:[%s919 + $0x30] sm:$0xf]
      %v2119 = vld [vmem:[%s919 + $0x34] sm:$0xf]
      %v2120 = vld [vmem:[%s919 + $0x3c] sm:$0xf]
      %v2121 = vld [vmem:[%s919 + $0x40] sm:$0xf]
      %v2122 = vld [vmem:[%s919 + $0x48] sm:$0xf]
      %v2123 = vld [vmem:[%s919 + $0x4c] sm:$0xf]
      %v2124 = vld [vmem:[%s919 + $0x54] sm:$0xf]
      %v2125 = vld [vmem:[%s919 + $0x58] sm:$0xf]
      %v2126 = vld [vmem:[%s919 + $0x60] sm:$0xf]
      %v2127 = vld [vmem:[%s919 + $0x64] sm:$0xf]
      %v2128 = vld [vmem:[%s919 + $0x6c] sm:$0xf]
      %v2129 = vld [vmem:[%s919 + $0x70] sm:$0xf]
      %v2130 = vld [vmem:[%s919 + $0x78] sm:$0xf]
      %v2131 = vld [vmem:[%s919 + $0x7c] sm:$0xf]
      %v2132 = vld [vmem:[%s919 + $0x84] sm:$0xf]
      %v2133 = vld [vmem:[%s919 + $0x88] sm:$0xf]
      %v2134 = vld [vmem:[%s919 + $0x90] sm:$0xf]
      %v2135 = vld [vmem:[%s919 + $0x94] sm:$0xf]
      %v2136 = vld [vmem:[%s919 + $0x9c] sm:$0xf]
      %v2137 = vld [vmem:[%s919 + $0xa0] sm:$0xf]
      %v2138 = vld [vmem:[%s919 + $0xa8] sm:$0xf]
      %v2139 = vld [vmem:[%s919 + $0xac] sm:$0xf]
      %v2140 = vld [vmem:[%s919 + $0xb4] sm:$0xf]
      %v2141 = vld [vmem:[%s919 + $0xb8] sm:$0xf]
      %2174 = vrot.lane.b32.xlu0 %v2110, 12
      %v2175 = vpop.permute.xlu0 %2174
      %2176 = vrot.lane.b32.xlu0 %v2111, 12
      %v2177 = vpop.permute.xlu0 %2176
      %2178 = vrot.lane.b32.xlu0 %v2112, 12
      %v2179 = vpop.permute.xlu0 %2178
      %2180 = vrot.lane.b32.xlu0 %v2113, 12
      %v2181 = vpop.permute.xlu0 %2180
      %2182 = vrot.lane.b32.xlu0 %v2114, 12
      %v2183 = vpop.permute.xlu0 %2182
      %2184 = vrot.lane.b32.xlu0 %v2115, 12
      %v2185 = vpop.permute.xlu0 %2184
      %2186 = vrot.lane.b32.xlu0 %v2116, 12
      %v2187 = vpop.permute.xlu0 %2186
      %2188 = vrot.lane.b32.xlu0 %v2117, 12
      %v2189 = vpop.permute.xlu0 %2188
      %2190 = vrot.lane.b32.xlu0 %v2118, 12
      %v2191 = vpop.permute.xlu0 %2190
      %2192 = vrot.lane.b32.xlu0 %v2119, 12
      %v2193 = vpop.permute.xlu0 %2192
      %2194 = vrot.lane.b32.xlu0 %v2120, 12
      %v2195 = vpop.permute.xlu0 %2194
      %2196 = vrot.lane.b32.xlu0 %v2121, 12
      %v2197 = vpop.permute.xlu0 %2196
      %2198 = vrot.lane.b32.xlu0 %v2122, 12
      %v2199 = vpop.permute.xlu0 %2198
      %2200 = vrot.lane.b32.xlu0 %v2123, 12
      %v2201 = vpop.permute.xlu0 %2200
      %2202 = vrot.lane.b32.xlu0 %v2124, 12
      %v2203 = vpop.permute.xlu0 %2202
      %2204 = vrot.lane.b32.xlu0 %v2125, 12
      %v2205 = vpop.permute.xlu0 %2204
      %2206 = vrot.lane.b32.xlu0 %v2126, 12
      %v2207 = vpop.permute.xlu0 %2206
      %2208 = vrot.lane.b32.xlu0 %v2127, 12
      %v2209 = vpop.permute.xlu0 %2208
      %2210 = vrot.lane.b32.xlu0 %v2128, 12
      %v2211 = vpop.permute.xlu0 %2210
      %2212 = vrot.lane.b32.xlu0 %v2129, 12
      %v2213 = vpop.permute.xlu0 %2212
      %2214 = vrot.lane.b32.xlu0 %v2130, 12
      %v2215 = vpop.permute.xlu0 %2214
      %2216 = vrot.lane.b32.xlu0 %v2131, 12
      %v2217 = vpop.permute.xlu0 %2216
      %2218 = vrot.lane.b32.xlu0 %v2132, 12
      %v2219 = vpop.permute.xlu0 %2218
      %2220 = vrot.lane.b32.xlu0 %v2133, 12
      %v2221 = vpop.permute.xlu0 %2220
      %2222 = vrot.lane.b32.xlu0 %v2134, 12
      %v2223 = vpop.permute.xlu0 %2222
      %2224 = vrot.lane.b32.xlu0 %v2135, 12
      %v2225 = vpop.permute.xlu0 %2224
      %2226 = vrot.lane.b32.xlu0 %v2136, 12
      %v2227 = vpop.permute.xlu0 %2226
      %2228 = vrot.lane.b32.xlu0 %v2137, 12
      %v2229 = vpop.permute.xlu0 %2228
      %2230 = vrot.lane.b32.xlu0 %v2138, 12
      %v2231 = vpop.permute.xlu0 %2230
      %2232 = vrot.lane.b32.xlu0 %v2139, 12
      %v2233 = vpop.permute.xlu0 %2232
      %2234 = vrot.lane.b32.xlu0 %v2140, 12
      %v2235 = vpop.permute.xlu0 %2234
      %2236 = vrot.lane.b32.xlu0 %v2141, 12
      %v2237 = vpop.permute.xlu0 %2236
      %vm2270 = vcmask 126048
      %2271 = vst.msk [vmem:[#allocation3] sm:$0xf] %vm2270, %v2175
      %2272 = vst.msk [vmem:[#allocation3 + $0x4] sm:$0xf] %vm2270, %v2177
      %2273 = vst.msk [vmem:[#allocation3 + $0x8] sm:$0xf] %vm2270, %v2179
      %2274 = vst.msk [vmem:[#allocation3 + $0xc] sm:$0xf] %vm2270, %v2181
      %2275 = vst.msk [vmem:[#allocation3 + $0x10] sm:$0xf] %vm2270, %v2183
      %2276 = vst.msk [vmem:[#allocation3 + $0x14] sm:$0xf] %vm2270, %v2185
      %2277 = vst.msk [vmem:[#allocation3 + $0x18] sm:$0xf] %vm2270, %v2187
      %2278 = vst.msk [vmem:[#allocation3 + $0x1c] sm:$0xf] %vm2270, %v2189
      %2279 = vst.msk [vmem:[#allocation3 + $0x20] sm:$0xf] %vm2270, %v2191
      %2280 = vst.msk [vmem:[#allocation3 + $0x24] sm:$0xf] %vm2270, %v2193
      %2281 = vst.msk [vmem:[#allocation3 + $0x28] sm:$0xf] %vm2270, %v2195
      %2282 = vst.msk [vmem:[#allocation3 + $0x2c] sm:$0xf] %vm2270, %v2197
      %2283 = vst.msk [vmem:[#allocation3 + $0x30] sm:$0xf] %vm2270, %v2199
      %2284 = vst.msk [vmem:[#allocation3 + $0x34] sm:$0xf] %vm2270, %v2201
      %2285 = vst.msk [vmem:[#allocation3 + $0x38] sm:$0xf] %vm2270, %v2203
      %2286 = vst.msk [vmem:[#allocation3 + $0x3c] sm:$0xf] %vm2270, %v2205
      %2287 = vst.msk [vmem:[#allocation3 + $0x40] sm:$0xf] %vm2270, %v2207
      %2288 = vst.msk [vmem:[#allocation3 + $0x44] sm:$0xf] %vm2270, %v2209
      %2289 = vst.msk [vmem:[#allocation3 + $0x48] sm:$0xf] %vm2270, %v2211
      %2290 = vst.msk [vmem:[#allocation3 + $0x4c] sm:$0xf] %vm2270, %v2213
      %2291 = vst.msk [vmem:[#allocation3 + $0x50] sm:$0xf] %vm2270, %v2215
      %2292 = vst.msk [vmem:[#allocation3 + $0x54] sm:$0xf] %vm2270, %v2217
      %2293 = vst.msk [vmem:[#allocation3 + $0x58] sm:$0xf] %vm2270, %v2219
      %2294 = vst.msk [vmem:[#allocation3 + $0x5c] sm:$0xf] %vm2270, %v2221
      %2295 = vst.msk [vmem:[#allocation3 + $0x60] sm:$0xf] %vm2270, %v2223
      %2296 = vst.msk [vmem:[#allocation3 + $0x64] sm:$0xf] %vm2270, %v2225
      %2297 = vst.msk [vmem:[#allocation3 + $0x68] sm:$0xf] %vm2270, %v2227
      %2298 = vst.msk [vmem:[#allocation3 + $0x6c] sm:$0xf] %vm2270, %v2229
      %2299 = vst.msk [vmem:[#allocation3 + $0x70] sm:$0xf] %vm2270, %v2231
      %2300 = vst.msk [vmem:[#allocation3 + $0x74] sm:$0xf] %vm2270, %v2233
      %2301 = vst.msk [vmem:[#allocation3 + $0x78] sm:$0xf] %vm2270, %v2235
      %2302 = vst.msk [vmem:[#allocation3 + $0x7c] sm:$0xf] %vm2270, %v2237
      %v2303 = vld [vmem:[%s919] sm:$0xf]
      %v2304 = vld [vmem:[%s919 + $0x4] sm:$0xf]
      %v2305 = vld [vmem:[%s919 + $0x8] sm:$0x1]
      %v2306 = vld [vmem:[%s919 + $0xc] sm:$0xf]
      %v2307 = vld [vmem:[%s919 + $0x10] sm:$0xf]
      %v2308 = vld [vmem:[%s919 + $0x14] sm:$0x1]
      %v2309 = vld [vmem:[%s919 + $0x18] sm:$0xf]
      %v2310 = vld [vmem:[%s919 + $0x1c] sm:$0xf]
      %v2311 = vld [vmem:[%s919 + $0x20] sm:$0x1]
      %v2312 = vld [vmem:[%s919 + $0x24] sm:$0xf]
      %v2313 = vld [vmem:[%s919 + $0x28] sm:$0xf]
      %v2314 = vld [vmem:[%s919 + $0x2c] sm:$0x1]
      %v2315 = vld [vmem:[%s919 + $0x30] sm:$0xf]
      %v2316 = vld [vmem:[%s919 + $0x34] sm:$0xf]
      %v2317 = vld [vmem:[%s919 + $0x38] sm:$0x1]
      %v2318 = vld [vmem:[%s919 + $0x3c] sm:$0xf]
      %v2319 = vld [vmem:[%s919 + $0x40] sm:$0xf]
      %v2320 = vld [vmem:[%s919 + $0x44] sm:$0x1]
      %v2321 = vld [vmem:[%s919 + $0x48] sm:$0xf]
      %v2322 = vld [vmem:[%s919 + $0x4c] sm:$0xf]
      %v2323 = vld [vmem:[%s919 + $0x50] sm:$0x1]
      %v2324 = vld [vmem:[%s919 + $0x54] sm:$0xf]
      %v2325 = vld [vmem:[%s919 + $0x58] sm:$0xf]
      %v2326 = vld [vmem:[%s919 + $0x5c] sm:$0x1]
      %v2327 = vld [vmem:[%s919 + $0x60] sm:$0xf]
      %v2328 = vld [vmem:[%s919 + $0x64] sm:$0xf]
      %v2329 = vld [vmem:[%s919 + $0x68] sm:$0x1]
      %v2330 = vld [vmem:[%s919 + $0x6c] sm:$0xf]
      %v2331 = vld [vmem:[%s919 + $0x70] sm:$0xf]
      %v2332 = vld [vmem:[%s919 + $0x74] sm:$0x1]
      %v2333 = vld [vmem:[%s919 + $0x78] sm:$0xf]
      %v2334 = vld [vmem:[%s919 + $0x7c] sm:$0xf]
      %v2335 = vld [vmem:[%s919 + $0x80] sm:$0x1]
      %v2336 = vld [vmem:[%s919 + $0x84] sm:$0xf]
      %v2337 = vld [vmem:[%s919 + $0x88] sm:$0xf]
      %v2338 = vld [vmem:[%s919 + $0x8c] sm:$0x1]
      %v2339 = vld [vmem:[%s919 + $0x90] sm:$0xf]
      %v2340 = vld [vmem:[%s919 + $0x94] sm:$0xf]
      %v2341 = vld [vmem:[%s919 + $0x98] sm:$0x1]
      %v2342 = vld [vmem:[%s919 + $0x9c] sm:$0xf]
      %v2343 = vld [vmem:[%s919 + $0xa0] sm:$0xf]
      %v2344 = vld [vmem:[%s919 + $0xa4] sm:$0x1]
      %v2345 = vld [vmem:[%s919 + $0xa8] sm:$0xf]
      %v2346 = vld [vmem:[%s919 + $0xac] sm:$0xf]
      %v2347 = vld [vmem:[%s919 + $0xb0] sm:$0x1]
      %v2348 = vld [vmem:[%s919 + $0xb4] sm:$0xf]
      %v2349 = vld [vmem:[%s919 + $0xb8] sm:$0xf]
      %v2350 = vld [vmem:[%s919 + $0xbc] sm:$0x1]
      %v2352 = vshrl.u32 %v2303, 16
      %v2354 = vrot.slane %v2352, 4
      %v2355 = vshll.u32 %v2303, 16
      %v2357 = vrot.slane %v2355, 5
      %v2358 = vor.u32 %v2354, %v2357
      %v2359 = vrot.slane %v2358, 4
      %v2361 = vshll.u32 %v2304, 16
      %v2363 = vrot.slane %v2361, 5
      %v2364 = vsel %vm1256, %v2359, %v2363
      %v2365 = vshrl.u32 %v2304, 16
      %v2367 = vrot.slane %v2365, 4
      %v2368 = vor.u32 %v2367, %v2363
      %v2369 = vrot.slane %v2368, 4
      %v2371 = vshll.u32 %v2305, 16
      %v2373 = vrot.slane %v2371, 5
      %v2374 = vsel %vm1256, %v2369, %v2373
      %v2376 = vshrl.u32 %v2306, 16
      %v2378 = vrot.slane %v2376, 4
      %v2379 = vshll.u32 %v2306, 16
      %v2381 = vrot.slane %v2379, 5
      %v2382 = vor.u32 %v2378, %v2381
      %v2383 = vrot.slane %v2382, 4
      %v2385 = vshll.u32 %v2307, 16
      %v2387 = vrot.slane %v2385, 5
      %v2388 = vsel %vm1256, %v2383, %v2387
      %v2389 = vshrl.u32 %v2307, 16
      %v2391 = vrot.slane %v2389, 4
      %v2392 = vor.u32 %v2391, %v2387
      %v2393 = vrot.slane %v2392, 4
      %v2395 = vshll.u32 %v2308, 16
      %v2397 = vrot.slane %v2395, 5
      %v2398 = vsel %vm1256, %v2393, %v2397
      %v2400 = vshrl.u32 %v2309, 16
      %v2402 = vrot.slane %v2400, 4
      %v2403 = vshll.u32 %v2309, 16
      %v2405 = vrot.slane %v2403, 5
      %v2406 = vor.u32 %v2402, %v2405
      %v2407 = vrot.slane %v2406, 4
      %v2409 = vshll.u32 %v2310, 16
      %v2411 = vrot.slane %v2409, 5
      %v2412 = vsel %vm1256, %v2407, %v2411
      %v2413 = vshrl.u32 %v2310, 16
      %v2415 = vrot.slane %v2413, 4
      %v2416 = vor.u32 %v2415, %v2411
      %v2417 = vrot.slane %v2416, 4
      %v2419 = vshll.u32 %v2311, 16
      %v2421 = vrot.slane %v2419, 5
      %v2422 = vsel %vm1256, %v2417, %v2421
      %v2424 = vshrl.u32 %v2312, 16
      %v2426 = vrot.slane %v2424, 4
      %v2427 = vshll.u32 %v2312, 16
      %v2429 = vrot.slane %v2427, 5
      %v2430 = vor.u32 %v2426, %v2429
      %v2431 = vrot.slane %v2430, 4
      %v2433 = vshll.u32 %v2313, 16
      %v2435 = vrot.slane %v2433, 5
      %v2436 = vsel %vm1256, %v2431, %v2435
      %v2437 = vshrl.u32 %v2313, 16
      %v2439 = vrot.slane %v2437, 4
      %v2440 = vor.u32 %v2439, %v2435
      %v2441 = vrot.slane %v2440, 4
      %v2443 = vshll.u32 %v2314, 16
      %v2445 = vrot.slane %v2443, 5
      %v2446 = vsel %vm1256, %v2441, %v2445
      %v2448 = vshrl.u32 %v2315, 16
      %v2450 = vrot.slane %v2448, 4
      %v2451 = vshll.u32 %v2315, 16
      %v2453 = vrot.slane %v2451, 5
      %v2454 = vor.u32 %v2450, %v2453
      %v2455 = vrot.slane %v2454, 4
      %v2457 = vshll.u32 %v2316, 16
      %v2459 = vrot.slane %v2457, 5
      %v2460 = vsel %vm1256, %v2455, %v2459
      %v2461 = vshrl.u32 %v2316, 16
      %v2463 = vrot.slane %v2461, 4
      %v2464 = vor.u32 %v2463, %v2459
      %v2465 = vrot.slane %v2464, 4
      %v2467 = vshll.u32 %v2317, 16
      %v2469 = vrot.slane %v2467, 5
      %v2470 = vsel %vm1256, %v2465, %v2469
      %v2472 = vshrl.u32 %v2318, 16
      %v2474 = vrot.slane %v2472, 4
      %v2475 = vshll.u32 %v2318, 16
      %v2477 = vrot.slane %v2475, 5
      %v2478 = vor.u32 %v2474, %v2477
      %v2479 = vrot.slane %v2478, 4
      %v2481 = vshll.u32 %v2319, 16
      %v2483 = vrot.slane %v2481, 5
      %v2484 = vsel %vm1256, %v2479, %v2483
      %v2485 = vshrl.u32 %v2319, 16
      %v2487 = vrot.slane %v2485, 4
      %v2488 = vor.u32 %v2487, %v2483
      %v2489 = vrot.slane %v2488, 4
      %v2491 = vshll.u32 %v2320, 16
      %v2493 = vrot.slane %v2491, 5
      %v2494 = vsel %vm1256, %v2489, %v2493
      %v2496 = vshrl.u32 %v2321, 16
      %v2498 = vrot.slane %v2496, 4
      %v2499 = vshll.u32 %v2321, 16
      %v2501 = vrot.slane %v2499, 5
      %v2502 = vor.u32 %v2498, %v2501
      %v2503 = vrot.slane %v2502, 4
      %v2505 = vshll.u32 %v2322, 16
      %v2507 = vrot.slane %v2505, 5
      %v2508 = vsel %vm1256, %v2503, %v2507
      %v2509 = vshrl.u32 %v2322, 16
      %v2511 = vrot.slane %v2509, 4
      %v2512 = vor.u32 %v2511, %v2507
      %v2513 = vrot.slane %v2512, 4
      %v2515 = vshll.u32 %v2323, 16
      %v2517 = vrot.slane %v2515, 5
      %v2518 = vsel %vm1256, %v2513, %v2517
      %v2520 = vshrl.u32 %v2324, 16
      %v2522 = vrot.slane %v2520, 4
      %v2523 = vshll.u32 %v2324, 16
      %v2525 = vrot.slane %v2523, 5
      %v2526 = vor.u32 %v2522, %v2525
      %v2527 = vrot.slane %v2526, 4
      %v2529 = vshll.u32 %v2325, 16
      %v2531 = vrot.slane %v2529, 5
      %v2532 = vsel %vm1256, %v2527, %v2531
      %v2533 = vshrl.u32 %v2325, 16
      %v2535 = vrot.slane %v2533, 4
      %v2536 = vor.u32 %v2535, %v2531
      %v2537 = vrot.slane %v2536, 4
      %v2539 = vshll.u32 %v2326, 16
      %v2541 = vrot.slane %v2539, 5
      %v2542 = vsel %vm1256, %v2537, %v2541
      %v2544 = vshrl.u32 %v2327, 16
      %v2546 = vrot.slane %v2544, 4
      %v2547 = vshll.u32 %v2327, 16
      %v2549 = vrot.slane %v2547, 5
      %v2550 = vor.u32 %v2546, %v2549
      %v2551 = vrot.slane %v2550, 4
      %v2553 = vshll.u32 %v2328, 16
      %v2555 = vrot.slane %v2553, 5
      %v2556 = vsel %vm1256, %v2551, %v2555
      %v2557 = vshrl.u32 %v2328, 16
      %v2559 = vrot.slane %v2557, 4
      %v2560 = vor.u32 %v2559, %v2555
      %v2561 = vrot.slane %v2560, 4
      %v2563 = vshll.u32 %v2329, 16
      %v2565 = vrot.slane %v2563, 5
      %v2566 = vsel %vm1256, %v2561, %v2565
      %v2568 = vshrl.u32 %v2330, 16
      %v2570 = vrot.slane %v2568, 4
      %v2571 = vshll.u32 %v2330, 16
      %v2573 = vrot.slane %v2571, 5
      %v2574 = vor.u32 %v2570, %v2573
      %v2575 = vrot.slane %v2574, 4
      %v2577 = vshll.u32 %v2331, 16
      %v2579 = vrot.slane %v2577, 5
      %v2580 = vsel %vm1256, %v2575, %v2579
      %v2581 = vshrl.u32 %v2331, 16
      %v2583 = vrot.slane %v2581, 4
      %v2584 = vor.u32 %v2583, %v2579
      %v2585 = vrot.slane %v2584, 4
      %v2587 = vshll.u32 %v2332, 16
      %v2589 = vrot.slane %v2587, 5
      %v2590 = vsel %vm1256, %v2585, %v2589
      %v2592 = vshrl.u32 %v2333, 16
      %v2594 = vrot.slane %v2592, 4
      %v2595 = vshll.u32 %v2333, 16
      %v2597 = vrot.slane %v2595, 5
      %v2598 = vor.u32 %v2594, %v2597
      %v2599 = vrot.slane %v2598, 4
      %v2601 = vshll.u32 %v2334, 16
      %v2603 = vrot.slane %v2601, 5
      %v2604 = vsel %vm1256, %v2599, %v2603
      %v2605 = vshrl.u32 %v2334, 16
      %v2607 = vrot.slane %v2605, 4
      %v2608 = vor.u32 %v2607, %v2603
      %v2609 = vrot.slane %v2608, 4
      %v2611 = vshll.u32 %v2335, 16
      %v2613 = vrot.slane %v2611, 5
      %v2614 = vsel %vm1256, %v2609, %v2613
      %v2616 = vshrl.u32 %v2336, 16
      %v2618 = vrot.slane %v2616, 4
      %v2619 = vshll.u32 %v2336, 16
      %v2621 = vrot.slane %v2619, 5
      %v2622 = vor.u32 %v2618, %v2621
      %v2623 = vrot.slane %v2622, 4
      %v2625 = vshll.u32 %v2337, 16
      %v2627 = vrot.slane %v2625, 5
      %v2628 = vsel %vm1256, %v2623, %v2627
      %v2629 = vshrl.u32 %v2337, 16
      %v2631 = vrot.slane %v2629, 4
      %v2632 = vor.u32 %v2631, %v2627
      %v2633 = vrot.slane %v2632, 4
      %v2635 = vshll.u32 %v2338, 16
      %v2637 = vrot.slane %v2635, 5
      %v2638 = vsel %vm1256, %v2633, %v2637
      %v2640 = vshrl.u32 %v2339, 16
      %v2642 = vrot.slane %v2640, 4
      %v2643 = vshll.u32 %v2339, 16
      %v2645 = vrot.slane %v2643, 5
      %v2646 = vor.u32 %v2642, %v2645
      %v2647 = vrot.slane %v2646, 4
      %v2649 = vshll.u32 %v2340, 16
      %v2651 = vrot.slane %v2649, 5
      %v2652 = vsel %vm1256, %v2647, %v2651
      %v2653 = vshrl.u32 %v2340, 16
      %v2655 = vrot.slane %v2653, 4
      %v2656 = vor.u32 %v2655, %v2651
      %v2657 = vrot.slane %v2656, 4
      %v2659 = vshll.u32 %v2341, 16
      %v2661 = vrot.slane %v2659, 5
      %v2662 = vsel %vm1256, %v2657, %v2661
      %v2664 = vshrl.u32 %v2342, 16
      %v2666 = vrot.slane %v2664, 4
      %v2667 = vshll.u32 %v2342, 16
      %v2669 = vrot.slane %v2667, 5
      %v2670 = vor.u32 %v2666, %v2669
      %v2671 = vrot.slane %v2670, 4
      %v2673 = vshll.u32 %v2343, 16
      %v2675 = vrot.slane %v2673, 5
      %v2676 = vsel %vm1256, %v2671, %v2675
      %v2677 = vshrl.u32 %v2343, 16
      %v2679 = vrot.slane %v2677, 4
      %v2680 = vor.u32 %v2679, %v2675
      %v2681 = vrot.slane %v2680, 4
      %v2683 = vshll.u32 %v2344, 16
      %v2685 = vrot.slane %v2683, 5
      %v2686 = vsel %vm1256, %v2681, %v2685
      %v2688 = vshrl.u32 %v2345, 16
      %v2690 = vrot.slane %v2688, 4
      %v2691 = vshll.u32 %v2345, 16
      %v2693 = vrot.slane %v2691, 5
      %v2694 = vor.u32 %v2690, %v2693
      %v2695 = vrot.slane %v2694, 4
      %v2697 = vshll.u32 %v2346, 16
      %v2699 = vrot.slane %v2697, 5
      %v2700 = vsel %vm1256, %v2695, %v2699
      %v2701 = vshrl.u32 %v2346, 16
      %v2703 = vrot.slane %v2701, 4
      %v2704 = vor.u32 %v2703, %v2699
      %v2705 = vrot.slane %v2704, 4
      %v2707 = vshll.u32 %v2347, 16
      %v2709 = vrot.slane %v2707, 5
      %v2710 = vsel %vm1256, %v2705, %v2709
      %v2712 = vshrl.u32 %v2348, 16
      %v2714 = vrot.slane %v2712, 4
      %v2715 = vshll.u32 %v2348, 16
      %v2717 = vrot.slane %v2715, 5
      %v2718 = vor.u32 %v2714, %v2717
      %v2719 = vrot.slane %v2718, 4
      %v2721 = vshll.u32 %v2349, 16
      %v2723 = vrot.slane %v2721, 5
      %v2724 = vsel %vm1256, %v2719, %v2723
      %v2725 = vshrl.u32 %v2349, 16
      %v2727 = vrot.slane %v2725, 4
      %v2728 = vor.u32 %v2727, %v2723
      %v2729 = vrot.slane %v2728, 4
      %v2731 = vshll.u32 %v2350, 16
      %v2733 = vrot.slane %v2731, 5
      %v2734 = vsel %vm1256, %v2729, %v2733
      %2735 = vrot.lane.b32.xlu0 %v2364, 16
      %v2736 = vpop.permute.xlu0 %2735
      %2737 = vrot.lane.b32.xlu0 %v2374, 16
      %v2738 = vpop.permute.xlu0 %2737
      %2739 = vrot.lane.b32.xlu0 %v2388, 16
      %v2740 = vpop.permute.xlu0 %2739
      %2741 = vrot.lane.b32.xlu0 %v2398, 16
      %v2742 = vpop.permute.xlu0 %2741
      %2743 = vrot.lane.b32.xlu0 %v2412, 16
      %v2744 = vpop.permute.xlu0 %2743
      %2745 = vrot.lane.b32.xlu0 %v2422, 16
      %v2746 = vpop.permute.xlu0 %2745
      %2747 = vrot.lane.b32.xlu0 %v2436, 16
      %v2748 = vpop.permute.xlu0 %2747
      %2749 = vrot.lane.b32.xlu0 %v2446, 16
      %v2750 = vpop.permute.xlu0 %2749
      %2751 = vrot.lane.b32.xlu0 %v2460, 16
      %v2752 = vpop.permute.xlu0 %2751
      %2753 = vrot.lane.b32.xlu0 %v2470, 16
      %v2754 = vpop.permute.xlu0 %2753
      %2755 = vrot.lane.b32.xlu0 %v2484, 16
      %v2756 = vpop.permute.xlu0 %2755
      %2757 = vrot.lane.b32.xlu0 %v2494, 16
      %v2758 = vpop.permute.xlu0 %2757
      %2759 = vrot.lane.b32.xlu0 %v2508, 16
      %v2760 = vpop.permute.xlu0 %2759
      %2761 = vrot.lane.b32.xlu0 %v2518, 16
      %v2762 = vpop.permute.xlu0 %2761
      %2763 = vrot.lane.b32.xlu0 %v2532, 16
      %v2764 = vpop.permute.xlu0 %2763
      %2765 = vrot.lane.b32.xlu0 %v2542, 16
      %v2766 = vpop.permute.xlu0 %2765
      %2767 = vrot.lane.b32.xlu0 %v2556, 16
      %v2768 = vpop.permute.xlu0 %2767
      %2769 = vrot.lane.b32.xlu0 %v2566, 16
      %v2770 = vpop.permute.xlu0 %2769
      %2771 = vrot.lane.b32.xlu0 %v2580, 16
      %v2772 = vpop.permute.xlu0 %2771
      %2773 = vrot.lane.b32.xlu0 %v2590, 16
      %v2774 = vpop.permute.xlu0 %2773
      %2775 = vrot.lane.b32.xlu0 %v2604, 16
      %v2776 = vpop.permute.xlu0 %2775
      %2777 = vrot.lane.b32.xlu0 %v2614, 16
      %v2778 = vpop.permute.xlu0 %2777
      %2779 = vrot.lane.b32.xlu0 %v2628, 16
      %v2780 = vpop.permute.xlu0 %2779
      %2781 = vrot.lane.b32.xlu0 %v2638, 16
      %v2782 = vpop.permute.xlu0 %2781
      %2783 = vrot.lane.b32.xlu0 %v2652, 16
      %v2784 = vpop.permute.xlu0 %2783
      %2785 = vrot.lane.b32.xlu0 %v2662, 16
      %v2786 = vpop.permute.xlu0 %2785
      %2787 = vrot.lane.b32.xlu0 %v2676, 16
      %v2788 = vpop.permute.xlu0 %2787
      %2789 = vrot.lane.b32.xlu0 %v2686, 16
      %v2790 = vpop.permute.xlu0 %2789
      %2791 = vrot.lane.b32.xlu0 %v2700, 16
      %v2792 = vpop.permute.xlu0 %2791
      %2793 = vrot.lane.b32.xlu0 %v2710, 16
      %v2794 = vpop.permute.xlu0 %2793
      %2795 = vrot.lane.b32.xlu0 %v2724, 16
      %v2796 = vpop.permute.xlu0 %2795
      %2797 = vrot.lane.b32.xlu0 %v2734, 16
      %v2798 = vpop.permute.xlu0 %2797
      %vm2831 = vcmask 158848
      %2832 = vst.msk [vmem:[#allocation3] sm:$0xf] %vm2831, %v2736
      %2833 = vst.msk [vmem:[#allocation3 + $0x4] sm:$0xf] %vm2831, %v2738
      %2834 = vst.msk [vmem:[#allocation3 + $0x8] sm:$0xf] %vm2831, %v2740
      %2835 = vst.msk [vmem:[#allocation3 + $0xc] sm:$0xf] %vm2831, %v2742
      %2836 = vst.msk [vmem:[#allocation3 + $0x10] sm:$0xf] %vm2831, %v2744
      %2837 = vst.msk [vmem:[#allocation3 + $0x14] sm:$0xf] %vm2831, %v2746
      %2838 = vst.msk [vmem:[#allocation3 + $0x18] sm:$0xf] %vm2831, %v2748
      %2839 = vst.msk [vmem:[#allocation3 + $0x1c] sm:$0xf] %vm2831, %v2750
      %2840 = vst.msk [vmem:[#allocation3 + $0x20] sm:$0xf] %vm2831, %v2752
      %2841 = vst.msk [vmem:[#allocation3 + $0x24] sm:$0xf] %vm2831, %v2754
      %2842 = vst.msk [vmem:[#allocation3 + $0x28] sm:$0xf] %vm2831, %v2756
      %2843 = vst.msk [vmem:[#allocation3 + $0x2c] sm:$0xf] %vm2831, %v2758
      %2844 = vst.msk [vmem:[#allocation3 + $0x30] sm:$0xf] %vm2831, %v2760
      %2845 = vst.msk [vmem:[#allocation3 + $0x34] sm:$0xf] %vm2831, %v2762
      %2846 = vst.msk [vmem:[#allocation3 + $0x38] sm:$0xf] %vm2831, %v2764
      %2847 = vst.msk [vmem:[#allocation3 + $0x3c] sm:$0xf] %vm2831, %v2766
      %2848 = vst.msk [vmem:[#allocation3 + $0x40] sm:$0xf] %vm2831, %v2768
      %2849 = vst.msk [vmem:[#allocation3 + $0x44] sm:$0xf] %vm2831, %v2770
      %2850 = vst.msk [vmem:[#allocation3 + $0x48] sm:$0xf] %vm2831, %v2772
      %2851 = vst.msk [vmem:[#allocation3 + $0x4c] sm:$0xf] %vm2831, %v2774
      %2852 = vst.msk [vmem:[#allocation3 + $0x50] sm:$0xf] %vm2831, %v2776
      %2853 = vst.msk [vmem:[#allocation3 + $0x54] sm:$0xf] %vm2831, %v2778
      %2854 = vst.msk [vmem:[#allocation3 + $0x58] sm:$0xf] %vm2831, %v2780
      %2855 = vst.msk [vmem:[#allocation3 + $0x5c] sm:$0xf] %vm2831, %v2782
      %2856 = vst.msk [vmem:[#allocation3 + $0x60] sm:$0xf] %vm2831, %v2784
      %2857 = vst.msk [vmem:[#allocation3 + $0x64] sm:$0xf] %vm2831, %v2786
      %2858 = vst.msk [vmem:[#allocation3 + $0x68] sm:$0xf] %vm2831, %v2788
      %2859 = vst.msk [vmem:[#allocation3 + $0x6c] sm:$0xf] %vm2831, %v2790
      %2860 = vst.msk [vmem:[#allocation3 + $0x70] sm:$0xf] %vm2831, %v2792
      %2861 = vst.msk [vmem:[#allocation3 + $0x74] sm:$0xf] %vm2831, %v2794
      %2862 = vst.msk [vmem:[#allocation3 + $0x78] sm:$0xf] %vm2831, %v2796
      %2863 = vst.msk [vmem:[#allocation3 + $0x7c] sm:$0xf] %vm2831, %v2798
      %v2864 = vld [vmem:[%s919] sm:$0xe]
      %v2865 = vld [vmem:[%s919 + $0x4] sm:$0xf]
      %v2866 = vld [vmem:[%s919 + $0x8] sm:$0x1]
      %v2867 = vld [vmem:[%s919 + $0xc] sm:$0xe]
      %v2868 = vld [vmem:[%s919 + $0x10] sm:$0xf]
      %v2869 = vld [vmem:[%s919 + $0x14] sm:$0x1]
      %v2870 = vld [vmem:[%s919 + $0x18] sm:$0xe]
      %v2871 = vld [vmem:[%s919 + $0x1c] sm:$0xf]
      %v2872 = vld [vmem:[%s919 + $0x20] sm:$0x1]
      %v2873 = vld [vmem:[%s919 + $0x24] sm:$0xe]
      %v2874 = vld [vmem:[%s919 + $0x28] sm:$0xf]
      %v2875 = vld [vmem:[%s919 + $0x2c] sm:$0x1]
      %v2876 = vld [vmem:[%s919 + $0x30] sm:$0xe]
      %v2877 = vld [vmem:[%s919 + $0x34] sm:$0xf]
      %v2878 = vld [vmem:[%s919 + $0x38] sm:$0x1]
      %v2879 = vld [vmem:[%s919 + $0x3c] sm:$0xe]
      %v2880 = vld [vmem:[%s919 + $0x40] sm:$0xf]
      %v2881 = vld [vmem:[%s919 + $0x44] sm:$0x1]
      %v2882 = vld [vmem:[%s919 + $0x48] sm:$0xe]
      %v2883 = vld [vmem:[%s919 + $0x4c] sm:$0xf]
      %v2884 = vld [vmem:[%s919 + $0x50] sm:$0x1]
      %v2885 = vld [vmem:[%s919 + $0x54] sm:$0xe]
      %v2886 = vld [vmem:[%s919 + $0x58] sm:$0xf]
      %v2887 = vld [vmem:[%s919 + $0x5c] sm:$0x1]
      %v2888 = vld [vmem:[%s919 + $0x60] sm:$0xe]
      %v2889 = vld [vmem:[%s919 + $0x64] sm:$0xf]
      %v2890 = vld [vmem:[%s919 + $0x68] sm:$0x1]
      %v2891 = vld [vmem:[%s919 + $0x6c] sm:$0xe]
      %v2892 = vld [vmem:[%s919 + $0x70] sm:$0xf]
      %v2893 = vld [vmem:[%s919 + $0x74] sm:$0x1]
      %v2894 = vld [vmem:[%s919 + $0x78] sm:$0xe]
      %v2895 = vld [vmem:[%s919 + $0x7c] sm:$0xf]
      %v2896 = vld [vmem:[%s919 + $0x80] sm:$0x1]
      %v2897 = vld [vmem:[%s919 + $0x84] sm:$0xe]
      %v2898 = vld [vmem:[%s919 + $0x88] sm:$0xf]
      %v2899 = vld [vmem:[%s919 + $0x8c] sm:$0x1]
      %v2900 = vld [vmem:[%s919 + $0x90] sm:$0xe]
      %v2901 = vld [vmem:[%s919 + $0x94] sm:$0xf]
      %v2902 = vld [vmem:[%s919 + $0x98] sm:$0x1]
      %v2903 = vld [vmem:[%s919 + $0x9c] sm:$0xe]
      %v2904 = vld [vmem:[%s919 + $0xa0] sm:$0xf]
      %v2905 = vld [vmem:[%s919 + $0xa4] sm:$0x1]
      %v2906 = vld [vmem:[%s919 + $0xa8] sm:$0xe]
      %v2907 = vld [vmem:[%s919 + $0xac] sm:$0xf]
      %v2908 = vld [vmem:[%s919 + $0xb0] sm:$0x1]
      %v2909 = vld [vmem:[%s919 + $0xb4] sm:$0xe]
      %v2910 = vld [vmem:[%s919 + $0xb8] sm:$0xf]
      %v2911 = vld [vmem:[%s919 + $0xbc] sm:$0x1]
      %v2960 = vrot.slane %v2864, 5
      %v2961 = vrot.slane %v2960, 4
      %v2962 = vrot.slane %v2865, 5
      %v2963 = vsel %vm1868, %v2961, %v2962
      %v2964 = vrot.slane %v2962, 4
      %v2965 = vrot.slane %v2866, 5
      %v2966 = vsel %vm1868, %v2964, %v2965
      %v2967 = vrot.slane %v2867, 5
      %v2968 = vrot.slane %v2967, 4
      %v2969 = vrot.slane %v2868, 5
      %v2970 = vsel %vm1868, %v2968, %v2969
      %v2971 = vrot.slane %v2969, 4
      %v2972 = vrot.slane %v2869, 5
      %v2973 = vsel %vm1868, %v2971, %v2972
      %v2974 = vrot.slane %v2870, 5
      %v2975 = vrot.slane %v2974, 4
      %v2976 = vrot.slane %v2871, 5
      %v2977 = vsel %vm1868, %v2975, %v2976
      %v2978 = vrot.slane %v2976, 4
      %v2979 = vrot.slane %v2872, 5
      %v2980 = vsel %vm1868, %v2978, %v2979
      %v2981 = vrot.slane %v2873, 5
      %v2982 = vrot.slane %v2981, 4
      %v2983 = vrot.slane %v2874, 5
      %v2984 = vsel %vm1868, %v2982, %v2983
      %v2985 = vrot.slane %v2983, 4
      %v2986 = vrot.slane %v2875, 5
      %v2987 = vsel %vm1868, %v2985, %v2986
      %v2988 = vrot.slane %v2876, 5
      %v2989 = vrot.slane %v2988, 4
      %v2990 = vrot.slane %v2877, 5
      %v2991 = vsel %vm1868, %v2989, %v2990
      %v2992 = vrot.slane %v2990, 4
      %v2993 = vrot.slane %v2878, 5
      %v2994 = vsel %vm1868, %v2992, %v2993
      %v2995 = vrot.slane %v2879, 5
      %v2996 = vrot.slane %v2995, 4
      %v2997 = vrot.slane %v2880, 5
      %v2998 = vsel %vm1868, %v2996, %v2997
      %v2999 = vrot.slane %v2997, 4
      %v3000 = vrot.slane %v2881, 5
      %v3001 = vsel %vm1868, %v2999, %v3000
      %v3002 = vrot.slane %v2882, 5
      %v3003 = vrot.slane %v3002, 4
      %v3004 = vrot.slane %v2883, 5
      %v3005 = vsel %vm1868, %v3003, %v3004
      %v3006 = vrot.slane %v3004, 4
      %v3007 = vrot.slane %v2884, 5
      %v3008 = vsel %vm1868, %v3006, %v3007
      %v3009 = vrot.slane %v2885, 5
      %v3010 = vrot.slane %v3009, 4
      %v3011 = vrot.slane %v2886, 5
      %v3012 = vsel %vm1868, %v3010, %v3011
      %v3013 = vrot.slane %v3011, 4
      %v3014 = vrot.slane %v2887, 5
      %v3015 = vsel %vm1868, %v3013, %v3014
      %v3016 = vrot.slane %v2888, 5
      %v3017 = vrot.slane %v3016, 4
      %v3018 = vrot.slane %v2889, 5
      %v3019 = vsel %vm1868, %v3017, %v3018
      %v3020 = vrot.slane %v3018, 4
      %v3021 = vrot.slane %v2890, 5
      %v3022 = vsel %vm1868, %v3020, %v3021
      %v3023 = vrot.slane %v2891, 5
      %v3024 = vrot.slane %v3023, 4
      %v3025 = vrot.slane %v2892, 5
      %v3026 = vsel %vm1868, %v3024, %v3025
      %v3027 = vrot.slane %v3025, 4
      %v3028 = vrot.slane %v2893, 5
      %v3029 = vsel %vm1868, %v3027, %v3028
      %v3030 = vrot.slane %v2894, 5
      %v3031 = vrot.slane %v3030, 4
      %v3032 = vrot.slane %v2895, 5
      %v3033 = vsel %vm1868, %v3031, %v3032
      %v3034 = vrot.slane %v3032, 4
      %v3035 = vrot.slane %v2896, 5
      %v3036 = vsel %vm1868, %v3034, %v3035
      %v3037 = vrot.slane %v2897, 5
      %v3038 = vrot.slane %v3037, 4
      %v3039 = vrot.slane %v2898, 5
      %v3040 = vsel %vm1868, %v3038, %v3039
      %v3041 = vrot.slane %v3039, 4
      %v3042 = vrot.slane %v2899, 5
      %v3043 = vsel %vm1868, %v3041, %v3042
      %v3044 = vrot.slane %v2900, 5
      %v3045 = vrot.slane %v3044, 4
      %v3046 = vrot.slane %v2901, 5
      %v3047 = vsel %vm1868, %v3045, %v3046
      %v3048 = vrot.slane %v3046, 4
      %v3049 = vrot.slane %v2902, 5
      %v3050 = vsel %vm1868, %v3048, %v3049
      %v3051 = vrot.slane %v2903, 5
      %v3052 = vrot.slane %v3051, 4
      %v3053 = vrot.slane %v2904, 5
      %v3054 = vsel %vm1868, %v3052, %v3053
      %v3055 = vrot.slane %v3053, 4
      %v3056 = vrot.slane %v2905, 5
      %v3057 = vsel %vm1868, %v3055, %v3056
      %v3058 = vrot.slane %v2906, 5
      %v3059 = vrot.slane %v3058, 4
      %v3060 = vrot.slane %v2907, 5
      %v3061 = vsel %vm1868, %v3059, %v3060
      %v3062 = vrot.slane %v3060, 4
      %v3063 = vrot.slane %v2908, 5
      %v3064 = vsel %vm1868, %v3062, %v3063
      %v3065 = vrot.slane %v2909, 5
      %v3066 = vrot.slane %v3065, 4
      %v3067 = vrot.slane %v2910, 5
      %v3068 = vsel %vm1868, %v3066, %v3067
      %v3069 = vrot.slane %v3067, 4
      %v3070 = vrot.slane %v2911, 5
      %v3071 = vsel %vm1868, %v3069, %v3070
      %3072 = vrot.lane.b32.xlu0 %v2963, 20
      %v3073 = vpop.permute.xlu0 %3072
      %3074 = vrot.lane.b32.xlu0 %v2966, 20
      %v3075 = vpop.permute.xlu0 %3074
      %3076 = vrot.lane.b32.xlu0 %v2970, 20
      %v3077 = vpop.permute.xlu0 %3076
      %3078 = vrot.lane.b32.xlu0 %v2973, 20
      %v3079 = vpop.permute.xlu0 %3078
      %3080 = vrot.lane.b32.xlu0 %v2977, 20
      %v3081 = vpop.permute.xlu0 %3080
      %3082 = vrot.lane.b32.xlu0 %v2980, 20
      %v3083 = vpop.permute.xlu0 %3082
      %3084 = vrot.lane.b32.xlu0 %v2984, 20
      %v3085 = vpop.permute.xlu0 %3084
      %3086 = vrot.lane.b32.xlu0 %v2987, 20
      %v3087 = vpop.permute.xlu0 %3086
      %3088 = vrot.lane.b32.xlu0 %v2991, 20
      %v3089 = vpop.permute.xlu0 %3088
      %3090 = vrot.lane.b32.xlu0 %v2994, 20
      %v3091 = vpop.permute.xlu0 %3090
      %3092 = vrot.lane.b32.xlu0 %v2998, 20
      %v3093 = vpop.permute.xlu0 %3092
      %3094 = vrot.lane.b32.xlu0 %v3001, 20
      %v3095 = vpop.permute.xlu0 %3094
      %3096 = vrot.lane.b32.xlu0 %v3005, 20
      %v3097 = vpop.permute.xlu0 %3096
      %3098 = vrot.lane.b32.xlu0 %v3008, 20
      %v3099 = vpop.permute.xlu0 %3098
      %3100 = vrot.lane.b32.xlu0 %v3012, 20
      %v3101 = vpop.permute.xlu0 %3100
      %3102 = vrot.lane.b32.xlu0 %v3015, 20
      %v3103 = vpop.permute.xlu0 %3102
      %3104 = vrot.lane.b32.xlu0 %v3019, 20
      %v3105 = vpop.permute.xlu0 %3104
      %3106 = vrot.lane.b32.xlu0 %v3022, 20
      %v3107 = vpop.permute.xlu0 %3106
      %3108 = vrot.lane.b32.xlu0 %v3026, 20
      %v3109 = vpop.permute.xlu0 %3108
      %3110 = vrot.lane.b32.xlu0 %v3029, 20
      %v3111 = vpop.permute.xlu0 %3110
      %3112 = vrot.lane.b32.xlu0 %v3033, 20
      %v3113 = vpop.permute.xlu0 %3112
      %3114 = vrot.lane.b32.xlu0 %v3036, 20
      %v3115 = vpop.permute.xlu0 %3114
      %3116 = vrot.lane.b32.xlu0 %v3040, 20
      %v3117 = vpop.permute.xlu0 %3116
      %3118 = vrot.lane.b32.xlu0 %v3043, 20
      %v3119 = vpop.permute.xlu0 %3118
      %3120 = vrot.lane.b32.xlu0 %v3047, 20
      %v3121 = vpop.permute.xlu0 %3120
      %3122 = vrot.lane.b32.xlu0 %v3050, 20
      %v3123 = vpop.permute.xlu0 %3122
      %3124 = vrot.lane.b32.xlu0 %v3054, 20
      %v3125 = vpop.permute.xlu0 %3124
      %3126 = vrot.lane.b32.xlu0 %v3057, 20
      %v3127 = vpop.permute.xlu0 %3126
      %3128 = vrot.lane.b32.xlu0 %v3061, 20
      %v3129 = vpop.permute.xlu0 %3128
      %3130 = vrot.lane.b32.xlu0 %v3064, 20
      %v3131 = vpop.permute.xlu0 %3130
      %3132 = vrot.lane.b32.xlu0 %v3068, 20
      %v3133 = vpop.permute.xlu0 %3132
      %3134 = vrot.lane.b32.xlu0 %v3071, 20
      %v3135 = vpop.permute.xlu0 %3134
      %vm3168 = vcmask 191648
      %3169 = vst.msk [vmem:[#allocation3] sm:$0xf] %vm3168, %v3073
      %3170 = vst.msk [vmem:[#allocation3 + $0x4] sm:$0xf] %vm3168, %v3075
      %3171 = vst.msk [vmem:[#allocation3 + $0x8] sm:$0xf] %vm3168, %v3077
      %3172 = vst.msk [vmem:[#allocation3 + $0xc] sm:$0xf] %vm3168, %v3079
      %3173 = vst.msk [vmem:[#allocation3 + $0x10] sm:$0xf] %vm3168, %v3081
      %3174 = vst.msk [vmem:[#allocation3 + $0x14] sm:$0xf] %vm3168, %v3083
      %3175 = vst.msk [vmem:[#allocation3 + $0x18] sm:$0xf] %vm3168, %v3085
      %3176 = vst.msk [vmem:[#allocation3 + $0x1c] sm:$0xf] %vm3168, %v3087
      %3177 = vst.msk [vmem:[#allocation3 + $0x20] sm:$0xf] %vm3168, %v3089
      %3178 = vst.msk [vmem:[#allocation3 + $0x24] sm:$0xf] %vm3168, %v3091
      %3179 = vst.msk [vmem:[#allocation3 + $0x28] sm:$0xf] %vm3168, %v3093
      %3180 = vst.msk [vmem:[#allocation3 + $0x2c] sm:$0xf] %vm3168, %v3095
      %3181 = vst.msk [vmem:[#allocation3 + $0x30] sm:$0xf] %vm3168, %v3097
      %3182 = vst.msk [vmem:[#allocation3 + $0x34] sm:$0xf] %vm3168, %v3099
      %3183 = vst.msk [vmem:[#allocation3 + $0x38] sm:$0xf] %vm3168, %v3101
      %3184 = vst.msk [vmem:[#allocation3 + $0x3c] sm:$0xf] %vm3168, %v3103
      %3185 = vst.msk [vmem:[#allocation3 + $0x40] sm:$0xf] %vm3168, %v3105
      %3186 = vst.msk [vmem:[#allocation3 + $0x44] sm:$0xf] %vm3168, %v3107
      %3187 = vst.msk [vmem:[#allocation3 + $0x48] sm:$0xf] %vm3168, %v3109
      %3188 = vst.msk [vmem:[#allocation3 + $0x4c] sm:$0xf] %vm3168, %v3111
      %3189 = vst.msk [vmem:[#allocation3 + $0x50] sm:$0xf] %vm3168, %v3113
      %3190 = vst.msk [vmem:[#allocation3 + $0x54] sm:$0xf] %vm3168, %v3115
      %3191 = vst.msk [vmem:[#allocation3 + $0x58] sm:$0xf] %vm3168, %v3117
      %3192 = vst.msk [vmem:[#allocation3 + $0x5c] sm:$0xf] %vm3168, %v3119
      %3193 = vst.msk [vmem:[#allocation3 + $0x60] sm:$0xf] %vm3168, %v3121
      %3194 = vst.msk [vmem:[#allocation3 + $0x64] sm:$0xf] %vm3168, %v3123
      %3195 = vst.msk [vmem:[#allocation3 + $0x68] sm:$0xf] %vm3168, %v3125
      %3196 = vst.msk [vmem:[#allocation3 + $0x6c] sm:$0xf] %vm3168, %v3127
      %3197 = vst.msk [vmem:[#allocation3 + $0x70] sm:$0xf] %vm3168, %v3129
      %3198 = vst.msk [vmem:[#allocation3 + $0x74] sm:$0xf] %vm3168, %v3131
      %3199 = vst.msk [vmem:[#allocation3 + $0x78] sm:$0xf] %vm3168, %v3133
      %3200 = vst.msk [vmem:[#allocation3 + $0x7c] sm:$0xf] %vm3168, %v3135
      %s3201 = scalar_lea.vmem [#allocation2], 24
      %v3202 = vld [vmem:[%s3201] sm:$0xf]
      %v3203 = vld [vmem:[%s3201 + $0x4] sm:$0xf]
      %v3204 = vld [vmem:[%s3201 + $0xc] sm:$0xf]
      %v3205 = vld [vmem:[%s3201 + $0x10] sm:$0xf]
      %v3206 = vld [vmem:[%s3201 + $0x18] sm:$0xf]
      %v3207 = vld [vmem:[%s3201 + $0x1c] sm:$0xf]
      %v3208 = vld [vmem:[%s3201 + $0x24] sm:$0xf]
      %v3209 = vld [vmem:[%s3201 + $0x28] sm:$0xf]
      %v3210 = vld [vmem:[%s3201 + $0x30] sm:$0xf]
      %v3211 = vld [vmem:[%s3201 + $0x34] sm:$0xf]
      %v3212 = vld [vmem:[%s3201 + $0x3c] sm:$0xf]
      %v3213 = vld [vmem:[%s3201 + $0x40] sm:$0xf]
      %v3214 = vld [vmem:[%s3201 + $0x48] sm:$0xf]
      %v3215 = vld [vmem:[%s3201 + $0x4c] sm:$0xf]
      %v3216 = vld [vmem:[%s3201 + $0x54] sm:$0xf]
      %v3217 = vld [vmem:[%s3201 + $0x58] sm:$0xf]
      %v3218 = vld [vmem:[%s3201 + $0x60] sm:$0xf]
      %v3219 = vld [vmem:[%s3201 + $0x64] sm:$0xf]
      %v3220 = vld [vmem:[%s3201 + $0x6c] sm:$0xf]
      %v3221 = vld [vmem:[%s3201 + $0x70] sm:$0xf]
      %v3222 = vld [vmem:[%s3201 + $0x78] sm:$0xf]
      %v3223 = vld [vmem:[%s3201 + $0x7c] sm:$0xf]
      %v3224 = vld [vmem:[%s3201 + $0x84] sm:$0xf]
      %v3225 = vld [vmem:[%s3201 + $0x88] sm:$0xf]
      %v3226 = vld [vmem:[%s3201 + $0x90] sm:$0xf]
      %v3227 = vld [vmem:[%s3201 + $0x94] sm:$0xf]
      %v3228 = vld [vmem:[%s3201 + $0x9c] sm:$0xf]
      %v3229 = vld [vmem:[%s3201 + $0xa0] sm:$0xf]
      %v3230 = vld [vmem:[%s3201 + $0xa8] sm:$0xf]
      %v3231 = vld [vmem:[%s3201 + $0xac] sm:$0xf]
      %v3232 = vld [vmem:[%s3201 + $0xb4] sm:$0xf]
      %v3233 = vld [vmem:[%s3201 + $0xb8] sm:$0xf]
      %3266 = vrot.lane.b32.xlu0 %v3202, 24
      %v3267 = vpop.permute.xlu0 %3266
      %3268 = vrot.lane.b32.xlu0 %v3203, 24
      %v3269 = vpop.permute.xlu0 %3268
      %3270 = vrot.lane.b32.xlu0 %v3204, 24
      %v3271 = vpop.permute.xlu0 %3270
      %3272 = vrot.lane.b32.xlu0 %v3205, 24
      %v3273 = vpop.permute.xlu0 %3272
      %3274 = vrot.lane.b32.xlu0 %v3206, 24
      %v3275 = vpop.permute.xlu0 %3274
      %3276 = vrot.lane.b32.xlu0 %v3207, 24
      %v3277 = vpop.permute.xlu0 %3276
      %3278 = vrot.lane.b32.xlu0 %v3208, 24
      %v3279 = vpop.permute.xlu0 %3278
      %3280 = vrot.lane.b32.xlu0 %v3209, 24
      %v3281 = vpop.permute.xlu0 %3280
      %3282 = vrot.lane.b32.xlu0 %v3210, 24
      %v3283 = vpop.permute.xlu0 %3282
      %3284 = vrot.lane.b32.xlu0 %v3211, 24
      %v3285 = vpop.permute.xlu0 %3284
      %3286 = vrot.lane.b32.xlu0 %v3212, 24
      %v3287 = vpop.permute.xlu0 %3286
      %3288 = vrot.lane.b32.xlu0 %v3213, 24
      %v3289 = vpop.permute.xlu0 %3288
      %3290 = vrot.lane.b32.xlu0 %v3214, 24
      %v3291 = vpop.permute.xlu0 %3290
      %3292 = vrot.lane.b32.xlu0 %v3215, 24
      %v3293 = vpop.permute.xlu0 %3292
      %3294 = vrot.lane.b32.xlu0 %v3216, 24
      %v3295 = vpop.permute.xlu0 %3294
      %3296 = vrot.lane.b32.xlu0 %v3217, 24
      %v3297 = vpop.permute.xlu0 %3296
      %3298 = vrot.lane.b32.xlu0 %v3218, 24
      %v3299 = vpop.permute.xlu0 %3298
      %3300 = vrot.lane.b32.xlu0 %v3219, 24
      %v3301 = vpop.permute.xlu0 %3300
      %3302 = vrot.lane.b32.xlu0 %v3220, 24
      %v3303 = vpop.permute.xlu0 %3302
      %3304 = vrot.lane.b32.xlu0 %v3221, 24
      %v3305 = vpop.permute.xlu0 %3304
      %3306 = vrot.lane.b32.xlu0 %v3222, 24
      %v3307 = vpop.permute.xlu0 %3306
      %3308 = vrot.lane.b32.xlu0 %v3223, 24
      %v3309 = vpop.permute.xlu0 %3308
      %3310 = vrot.lane.b32.xlu0 %v3224, 24
      %v3311 = vpop.permute.xlu0 %3310
      %3312 = vrot.lane.b32.xlu0 %v3225, 24
      %v3313 = vpop.permute.xlu0 %3312
      %3314 = vrot.lane.b32.xlu0 %v3226, 24
      %v3315 = vpop.permute.xlu0 %3314
      %3316 = vrot.lane.b32.xlu0 %v3227, 24
      %v3317 = vpop.permute.xlu0 %3316
      %3318 = vrot.lane.b32.xlu0 %v3228, 24
      %v3319 = vpop.permute.xlu0 %3318
      %3320 = vrot.lane.b32.xlu0 %v3229, 24
      %v3321 = vpop.permute.xlu0 %3320
      %3322 = vrot.lane.b32.xlu0 %v3230, 24
      %v3323 = vpop.permute.xlu0 %3322
      %3324 = vrot.lane.b32.xlu0 %v3231, 24
      %v3325 = vpop.permute.xlu0 %3324
      %3326 = vrot.lane.b32.xlu0 %v3232, 24
      %v3327 = vpop.permute.xlu0 %3326
      %3328 = vrot.lane.b32.xlu0 %v3233, 24
      %v3329 = vpop.permute.xlu0 %3328
      %vm3362 = vcmask 224448
      %3363 = vst.msk [vmem:[#allocation3] sm:$0xf] %vm3362, %v3267
      %3364 = vst.msk [vmem:[#allocation3 + $0x4] sm:$0xf] %vm3362, %v3269
      %3365 = vst.msk [vmem:[#allocation3 + $0x8] sm:$0xf] %vm3362, %v3271
      %3366 = vst.msk [vmem:[#allocation3 + $0xc] sm:$0xf] %vm3362, %v3273
      %3367 = vst.msk [vmem:[#allocation3 + $0x10] sm:$0xf] %vm3362, %v3275
      %3368 = vst.msk [vmem:[#allocation3 + $0x14] sm:$0xf] %vm3362, %v3277
      %3369 = vst.msk [vmem:[#allocation3 + $0x18] sm:$0xf] %vm3362, %v3279
      %3370 = vst.msk [vmem:[#allocation3 + $0x1c] sm:$0xf] %vm3362, %v3281
      %3371 = vst.msk [vmem:[#allocation3 + $0x20] sm:$0xf] %vm3362, %v3283
      %3372 = vst.msk [vmem:[#allocation3 + $0x24] sm:$0xf] %vm3362, %v3285
      %3373 = vst.msk [vmem:[#allocation3 + $0x28] sm:$0xf] %vm3362, %v3287
      %3374 = vst.msk [vmem:[#allocation3 + $0x2c] sm:$0xf] %vm3362, %v3289
      %3375 = vst.msk [vmem:[#allocation3 + $0x30] sm:$0xf] %vm3362, %v3291
      %3376 = vst.msk [vmem:[#allocation3 + $0x34] sm:$0xf] %vm3362, %v3293
      %3377 = vst.msk [vmem:[#allocation3 + $0x38] sm:$0xf] %vm3362, %v3295
      %3378 = vst.msk [vmem:[#allocation3 + $0x3c] sm:$0xf] %vm3362, %v3297
      %3379 = vst.msk [vmem:[#allocation3 + $0x40] sm:$0xf] %vm3362, %v3299
      %3380 = vst.msk [vmem:[#allocation3 + $0x44] sm:$0xf] %vm3362, %v3301
      %3381 = vst.msk [vmem:[#allocation3 + $0x48] sm:$0xf] %vm3362, %v3303
      %3382 = vst.msk [vmem:[#allocation3 + $0x4c] sm:$0xf] %vm3362, %v3305
      %3383 = vst.msk [vmem:[#allocation3 + $0x50] sm:$0xf] %vm3362, %v3307
      %3384 = vst.msk [vmem:[#allocation3 + $0x54] sm:$0xf] %vm3362, %v3309
      %3385 = vst.msk [vmem:[#allocation3 + $0x58] sm:$0xf] %vm3362, %v3311
      %3386 = vst.msk [vmem:[#allocation3 + $0x5c] sm:$0xf] %vm3362, %v3313
      %3387 = vst.msk [vmem:[#allocation3 + $0x60] sm:$0xf] %vm3362, %v3315
      %3388 = vst.msk [vmem:[#allocation3 + $0x64] sm:$0xf] %vm3362, %v3317
      %3389 = vst.msk [vmem:[#allocation3 + $0x68] sm:$0xf] %vm3362, %v3319
      %3390 = vst.msk [vmem:[#allocation3 + $0x6c] sm:$0xf] %vm3362, %v3321
      %3391 = vst.msk [vmem:[#allocation3 + $0x70] sm:$0xf] %vm3362, %v3323
      %3392 = vst.msk [vmem:[#allocation3 + $0x74] sm:$0xf] %vm3362, %v3325
      %3393 = vst.msk [vmem:[#allocation3 + $0x78] sm:$0xf] %vm3362, %v3327
      %3394 = vst.msk [vmem:[#allocation3 + $0x7c] sm:$0xf] %vm3362, %v3329
      %v3395 = vld [vmem:[%s3201] sm:$0xf]
      %v3396 = vld [vmem:[%s3201 + $0x4] sm:$0xf]
      %v3397 = vld [vmem:[%s3201 + $0x8] sm:$0x1]
      %v3398 = vld [vmem:[%s3201 + $0xc] sm:$0xf]
      %v3399 = vld [vmem:[%s3201 + $0x10] sm:$0xf]
      %v3400 = vld [vmem:[%s3201 + $0x14] sm:$0x1]
      %v3401 = vld [vmem:[%s3201 + $0x18] sm:$0xf]
      %v3402 = vld [vmem:[%s3201 + $0x1c] sm:$0xf]
      %v3403 = vld [vmem:[%s3201 + $0x20] sm:$0x1]
      %v3404 = vld [vmem:[%s3201 + $0x24] sm:$0xf]
      %v3405 = vld [vmem:[%s3201 + $0x28] sm:$0xf]
      %v3406 = vld [vmem:[%s3201 + $0x2c] sm:$0x1]
      %v3407 = vld [vmem:[%s3201 + $0x30] sm:$0xf]
      %v3408 = vld [vmem:[%s3201 + $0x34] sm:$0xf]
      %v3409 = vld [vmem:[%s3201 + $0x38] sm:$0x1]
      %v3410 = vld [vmem:[%s3201 + $0x3c] sm:$0xf]
      %v3411 = vld [vmem:[%s3201 + $0x40] sm:$0xf]
      %v3412 = vld [vmem:[%s3201 + $0x44] sm:$0x1]
      %v3413 = vld [vmem:[%s3201 + $0x48] sm:$0xf]
      %v3414 = vld [vmem:[%s3201 + $0x4c] sm:$0xf]
      %v3415 = vld [vmem:[%s3201 + $0x50] sm:$0x1]
      %v3416 = vld [vmem:[%s3201 + $0x54] sm:$0xf]
      %v3417 = vld [vmem:[%s3201 + $0x58] sm:$0xf]
      %v3418 = vld [vmem:[%s3201 + $0x5c] sm:$0x1]
      %v3419 = vld [vmem:[%s3201 + $0x60] sm:$0xf]
      %v3420 = vld [vmem:[%s3201 + $0x64] sm:$0xf]
      %v3421 = vld [vmem:[%s3201 + $0x68] sm:$0x1]
      %v3422 = vld [vmem:[%s3201 + $0x6c] sm:$0xf]
      %v3423 = vld [vmem:[%s3201 + $0x70] sm:$0xf]
      %v3424 = vld [vmem:[%s3201 + $0x74] sm:$0x1]
      %v3425 = vld [vmem:[%s3201 + $0x78] sm:$0xf]
      %v3426 = vld [vmem:[%s3201 + $0x7c] sm:$0xf]
      %v3427 = vld [vmem:[%s3201 + $0x80] sm:$0x1]
      %v3428 = vld [vmem:[%s3201 + $0x84] sm:$0xf]
      %v3429 = vld [vmem:[%s3201 + $0x88] sm:$0xf]
      %v3430 = vld [vmem:[%s3201 + $0x8c] sm:$0x1]
      %v3431 = vld [vmem:[%s3201 + $0x90] sm:$0xf]
      %v3432 = vld [vmem:[%s3201 + $0x94] sm:$0xf]
      %v3433 = vld [vmem:[%s3201 + $0x98] sm:$0x1]
      %v3434 = vld [vmem:[%s3201 + $0x9c] sm:$0xf]
      %v3435 = vld [vmem:[%s3201 + $0xa0] sm:$0xf]
      %v3436 = vld [vmem:[%s3201 + $0xa4] sm:$0x1]
      %v3437 = vld [vmem:[%s3201 + $0xa8] sm:$0xf]
      %v3438 = vld [vmem:[%s3201 + $0xac] sm:$0xf]
      %v3439 = vld [vmem:[%s3201 + $0xb0] sm:$0x1]
      %v3440 = vld [vmem:[%s3201 + $0xb4] sm:$0xf]
      %v3441 = vld [vmem:[%s3201 + $0xb8] sm:$0xf]
      %v3442 = vld [vmem:[%s3201 + $0xbc] sm:$0x1]
      %v3444 = vshrl.u32 %v3395, 16
      %v3446 = vrot.slane %v3444, 4
      %v3447 = vshll.u32 %v3395, 16
      %v3449 = vrot.slane %v3447, 5
      %v3450 = vor.u32 %v3446, %v3449
      %v3451 = vrot.slane %v3450, 4
      %v3453 = vshll.u32 %v3396, 16
      %v3455 = vrot.slane %v3453, 5
      %v3456 = vsel %vm1256, %v3451, %v3455
      %v3457 = vshrl.u32 %v3396, 16
      %v3459 = vrot.slane %v3457, 4
      %v3460 = vor.u32 %v3459, %v3455
      %v3461 = vrot.slane %v3460, 4
      %v3463 = vshll.u32 %v3397, 16
      %v3465 = vrot.slane %v3463, 5
      %v3466 = vsel %vm1256, %v3461, %v3465
      %v3468 = vshrl.u32 %v3398, 16
      %v3470 = vrot.slane %v3468, 4
      %v3471 = vshll.u32 %v3398, 16
      %v3473 = vrot.slane %v3471, 5
      %v3474 = vor.u32 %v3470, %v3473
      %v3475 = vrot.slane %v3474, 4
      %v3477 = vshll.u32 %v3399, 16
      %v3479 = vrot.slane %v3477, 5
      %v3480 = vsel %vm1256, %v3475, %v3479
      %v3481 = vshrl.u32 %v3399, 16
      %v3483 = vrot.slane %v3481, 4
      %v3484 = vor.u32 %v3483, %v3479
      %v3485 = vrot.slane %v3484, 4
      %v3487 = vshll.u32 %v3400, 16
      %v3489 = vrot.slane %v3487, 5
      %v3490 = vsel %vm1256, %v3485, %v3489
      %v3492 = vshrl.u32 %v3401, 16
      %v3494 = vrot.slane %v3492, 4
      %v3495 = vshll.u32 %v3401, 16
      %v3497 = vrot.slane %v3495, 5
      %v3498 = vor.u32 %v3494, %v3497
      %v3499 = vrot.slane %v3498, 4
      %v3501 = vshll.u32 %v3402, 16
      %v3503 = vrot.slane %v3501, 5
      %v3504 = vsel %vm1256, %v3499, %v3503
      %v3505 = vshrl.u32 %v3402, 16
      %v3507 = vrot.slane %v3505, 4
      %v3508 = vor.u32 %v3507, %v3503
      %v3509 = vrot.slane %v3508, 4
      %v3511 = vshll.u32 %v3403, 16
      %v3513 = vrot.slane %v3511, 5
      %v3514 = vsel %vm1256, %v3509, %v3513
      %v3516 = vshrl.u32 %v3404, 16
      %v3518 = vrot.slane %v3516, 4
      %v3519 = vshll.u32 %v3404, 16
      %v3521 = vrot.slane %v3519, 5
      %v3522 = vor.u32 %v3518, %v3521
      %v3523 = vrot.slane %v3522, 4
      %v3525 = vshll.u32 %v3405, 16
      %v3527 = vrot.slane %v3525, 5
      %v3528 = vsel %vm1256, %v3523, %v3527
      %v3529 = vshrl.u32 %v3405, 16
      %v3531 = vrot.slane %v3529, 4
      %v3532 = vor.u32 %v3531, %v3527
      %v3533 = vrot.slane %v3532, 4
      %v3535 = vshll.u32 %v3406, 16
      %v3537 = vrot.slane %v3535, 5
      %v3538 = vsel %vm1256, %v3533, %v3537
      %v3540 = vshrl.u32 %v3407, 16
      %v3542 = vrot.slane %v3540, 4
      %v3543 = vshll.u32 %v3407, 16
      %v3545 = vrot.slane %v3543, 5
      %v3546 = vor.u32 %v3542, %v3545
      %v3547 = vrot.slane %v3546, 4
      %v3549 = vshll.u32 %v3408, 16
      %v3551 = vrot.slane %v3549, 5
      %v3552 = vsel %vm1256, %v3547, %v3551
      %v3553 = vshrl.u32 %v3408, 16
      %v3555 = vrot.slane %v3553, 4
      %v3556 = vor.u32 %v3555, %v3551
      %v3557 = vrot.slane %v3556, 4
      %v3559 = vshll.u32 %v3409, 16
      %v3561 = vrot.slane %v3559, 5
      %v3562 = vsel %vm1256, %v3557, %v3561
      %v3564 = vshrl.u32 %v3410, 16
      %v3566 = vrot.slane %v3564, 4
      %v3567 = vshll.u32 %v3410, 16
      %v3569 = vrot.slane %v3567, 5
      %v3570 = vor.u32 %v3566, %v3569
      %v3571 = vrot.slane %v3570, 4
      %v3573 = vshll.u32 %v3411, 16
      %v3575 = vrot.slane %v3573, 5
      %v3576 = vsel %vm1256, %v3571, %v3575
      %v3577 = vshrl.u32 %v3411, 16
      %v3579 = vrot.slane %v3577, 4
      %v3580 = vor.u32 %v3579, %v3575
      %v3581 = vrot.slane %v3580, 4
      %v3583 = vshll.u32 %v3412, 16
      %v3585 = vrot.slane %v3583, 5
      %v3586 = vsel %vm1256, %v3581, %v3585
      %v3588 = vshrl.u32 %v3413, 16
      %v3590 = vrot.slane %v3588, 4
      %v3591 = vshll.u32 %v3413, 16
      %v3593 = vrot.slane %v3591, 5
      %v3594 = vor.u32 %v3590, %v3593
      %v3595 = vrot.slane %v3594, 4
      %v3597 = vshll.u32 %v3414, 16
      %v3599 = vrot.slane %v3597, 5
      %v3600 = vsel %vm1256, %v3595, %v3599
      %v3601 = vshrl.u32 %v3414, 16
      %v3603 = vrot.slane %v3601, 4
      %v3604 = vor.u32 %v3603, %v3599
      %v3605 = vrot.slane %v3604, 4
      %v3607 = vshll.u32 %v3415, 16
      %v3609 = vrot.slane %v3607, 5
      %v3610 = vsel %vm1256, %v3605, %v3609
      %v3612 = vshrl.u32 %v3416, 16
      %v3614 = vrot.slane %v3612, 4
      %v3615 = vshll.u32 %v3416, 16
      %v3617 = vrot.slane %v3615, 5
      %v3618 = vor.u32 %v3614, %v3617
      %v3619 = vrot.slane %v3618, 4
      %v3621 = vshll.u32 %v3417, 16
      %v3623 = vrot.slane %v3621, 5
      %v3624 = vsel %vm1256, %v3619, %v3623
      %v3625 = vshrl.u32 %v3417, 16
      %v3627 = vrot.slane %v3625, 4
      %v3628 = vor.u32 %v3627, %v3623
      %v3629 = vrot.slane %v3628, 4
      %v3631 = vshll.u32 %v3418, 16
      %v3633 = vrot.slane %v3631, 5
      %v3634 = vsel %vm1256, %v3629, %v3633
      %v3636 = vshrl.u32 %v3419, 16
      %v3638 = vrot.slane %v3636, 4
      %v3639 = vshll.u32 %v3419, 16
      %v3641 = vrot.slane %v3639, 5
      %v3642 = vor.u32 %v3638, %v3641
      %v3643 = vrot.slane %v3642, 4
      %v3645 = vshll.u32 %v3420, 16
      %v3647 = vrot.slane %v3645, 5
      %v3648 = vsel %vm1256, %v3643, %v3647
      %v3649 = vshrl.u32 %v3420, 16
      %v3651 = vrot.slane %v3649, 4
      %v3652 = vor.u32 %v3651, %v3647
      %v3653 = vrot.slane %v3652, 4
      %v3655 = vshll.u32 %v3421, 16
      %v3657 = vrot.slane %v3655, 5
      %v3658 = vsel %vm1256, %v3653, %v3657
      %v3660 = vshrl.u32 %v3422, 16
      %v3662 = vrot.slane %v3660, 4
      %v3663 = vshll.u32 %v3422, 16
      %v3665 = vrot.slane %v3663, 5
      %v3666 = vor.u32 %v3662, %v3665
      %v3667 = vrot.slane %v3666, 4
      %v3669 = vshll.u32 %v3423, 16
      %v3671 = vrot.slane %v3669, 5
      %v3672 = vsel %vm1256, %v3667, %v3671
      %v3673 = vshrl.u32 %v3423, 16
      %v3675 = vrot.slane %v3673, 4
      %v3676 = vor.u32 %v3675, %v3671
      %v3677 = vrot.slane %v3676, 4
      %v3679 = vshll.u32 %v3424, 16
      %v3681 = vrot.slane %v3679, 5
      %v3682 = vsel %vm1256, %v3677, %v3681
      %v3684 = vshrl.u32 %v3425, 16
      %v3686 = vrot.slane %v3684, 4
      %v3687 = vshll.u32 %v3425, 16
      %v3689 = vrot.slane %v3687, 5
      %v3690 = vor.u32 %v3686, %v3689
      %v3691 = vrot.slane %v3690, 4
      %v3693 = vshll.u32 %v3426, 16
      %v3695 = vrot.slane %v3693, 5
      %v3696 = vsel %vm1256, %v3691, %v3695
      %v3697 = vshrl.u32 %v3426, 16
      %v3699 = vrot.slane %v3697, 4
      %v3700 = vor.u32 %v3699, %v3695
      %v3701 = vrot.slane %v3700, 4
      %v3703 = vshll.u32 %v3427, 16
      %v3705 = vrot.slane %v3703, 5
      %v3706 = vsel %vm1256, %v3701, %v3705
      %v3708 = vshrl.u32 %v3428, 16
      %v3710 = vrot.slane %v3708, 4
      %v3711 = vshll.u32 %v3428, 16
      %v3713 = vrot.slane %v3711, 5
      %v3714 = vor.u32 %v3710, %v3713
      %v3715 = vrot.slane %v3714, 4
      %v3717 = vshll.u32 %v3429, 16
      %v3719 = vrot.slane %v3717, 5
      %v3720 = vsel %vm1256, %v3715, %v3719
      %v3721 = vshrl.u32 %v3429, 16
      %v3723 = vrot.slane %v3721, 4
      %v3724 = vor.u32 %v3723, %v3719
      %v3725 = vrot.slane %v3724, 4
      %v3727 = vshll.u32 %v3430, 16
      %v3729 = vrot.slane %v3727, 5
      %v3730 = vsel %vm1256, %v3725, %v3729
      %v3732 = vshrl.u32 %v3431, 16
      %v3734 = vrot.slane %v3732, 4
      %v3735 = vshll.u32 %v3431, 16
      %v3737 = vrot.slane %v3735, 5
      %v3738 = vor.u32 %v3734, %v3737
      %v3739 = vrot.slane %v3738, 4
      %v3741 = vshll.u32 %v3432, 16
      %v3743 = vrot.slane %v3741, 5
      %v3744 = vsel %vm1256, %v3739, %v3743
      %v3745 = vshrl.u32 %v3432, 16
      %v3747 = vrot.slane %v3745, 4
      %v3748 = vor.u32 %v3747, %v3743
      %v3749 = vrot.slane %v3748, 4
      %v3751 = vshll.u32 %v3433, 16
      %v3753 = vrot.slane %v3751, 5
      %v3754 = vsel %vm1256, %v3749, %v3753
      %v3756 = vshrl.u32 %v3434, 16
      %v3758 = vrot.slane %v3756, 4
      %v3759 = vshll.u32 %v3434, 16
      %v3761 = vrot.slane %v3759, 5
      %v3762 = vor.u32 %v3758, %v3761
      %v3763 = vrot.slane %v3762, 4
      %v3765 = vshll.u32 %v3435, 16
      %v3767 = vrot.slane %v3765, 5
      %v3768 = vsel %vm1256, %v3763, %v3767
      %v3769 = vshrl.u32 %v3435, 16
      %v3771 = vrot.slane %v3769, 4
      %v3772 = vor.u32 %v3771, %v3767
      %v3773 = vrot.slane %v3772, 4
      %v3775 = vshll.u32 %v3436, 16
      %v3777 = vrot.slane %v3775, 5
      %v3778 = vsel %vm1256, %v3773, %v3777
      %v3780 = vshrl.u32 %v3437, 16
      %v3782 = vrot.slane %v3780, 4
      %v3783 = vshll.u32 %v3437, 16
      %v3785 = vrot.slane %v3783, 5
      %v3786 = vor.u32 %v3782, %v3785
      %v3787 = vrot.slane %v3786, 4
      %v3789 = vshll.u32 %v3438, 16
      %v3791 = vrot.slane %v3789, 5
      %v3792 = vsel %vm1256, %v3787, %v3791
      %v3793 = vshrl.u32 %v3438, 16
      %v3795 = vrot.slane %v3793, 4
      %v3796 = vor.u32 %v3795, %v3791
      %v3797 = vrot.slane %v3796, 4
      %v3799 = vshll.u32 %v3439, 16
      %v3801 = vrot.slane %v3799, 5
      %v3802 = vsel %vm1256, %v3797, %v3801
      %v3804 = vshrl.u32 %v3440, 16
      %v3806 = vrot.slane %v3804, 4
      %v3807 = vshll.u32 %v3440, 16
      %v3809 = vrot.slane %v3807, 5
      %v3810 = vor.u32 %v3806, %v3809
      %v3811 = vrot.slane %v3810, 4
      %v3813 = vshll.u32 %v3441, 16
      %v3815 = vrot.slane %v3813, 5
      %v3816 = vsel %vm1256, %v3811, %v3815
      %v3817 = vshrl.u32 %v3441, 16
      %v3819 = vrot.slane %v3817, 4
      %v3820 = vor.u32 %v3819, %v3815
      %v3821 = vrot.slane %v3820, 4
      %v3823 = vshll.u32 %v3442, 16
      %v3825 = vrot.slane %v3823, 5
      %v3826 = vsel %vm1256, %v3821, %v3825
      %3827 = vrot.lane.b32.xlu0 %v3456, 28
      %v3828 = vpop.permute.xlu0 %3827
      %3829 = vrot.lane.b32.xlu0 %v3466, 28
      %v3830 = vpop.permute.xlu0 %3829
      %3831 = vrot.lane.b32.xlu0 %v3480, 28
      %v3832 = vpop.permute.xlu0 %3831
      %3833 = vrot.lane.b32.xlu0 %v3490, 28
      %v3834 = vpop.permute.xlu0 %3833
      %3835 = vrot.lane.b32.xlu0 %v3504, 28
      %v3836 = vpop.permute.xlu0 %3835
      %3837 = vrot.lane.b32.xlu0 %v3514, 28
      %v3838 = vpop.permute.xlu0 %3837
      %3839 = vrot.lane.b32.xlu0 %v3528, 28
      %v3840 = vpop.permute.xlu0 %3839
      %3841 = vrot.lane.b32.xlu0 %v3538, 28
      %v3842 = vpop.permute.xlu0 %3841
      %3843 = vrot.lane.b32.xlu0 %v3552, 28
      %v3844 = vpop.permute.xlu0 %3843
      %3845 = vrot.lane.b32.xlu0 %v3562, 28
      %v3846 = vpop.permute.xlu0 %3845
      %3847 = vrot.lane.b32.xlu0 %v3576, 28
      %v3848 = vpop.permute.xlu0 %3847
      %3849 = vrot.lane.b32.xlu0 %v3586, 28
      %v3850 = vpop.permute.xlu0 %3849
      %3851 = vrot.lane.b32.xlu0 %v3600, 28
      %v3852 = vpop.permute.xlu0 %3851
      %3853 = vrot.lane.b32.xlu0 %v3610, 28
      %v3854 = vpop.permute.xlu0 %3853
      %3855 = vrot.lane.b32.xlu0 %v3624, 28
      %v3856 = vpop.permute.xlu0 %3855
      %3857 = vrot.lane.b32.xlu0 %v3634, 28
      %v3858 = vpop.permute.xlu0 %3857
      %3859 = vrot.lane.b32.xlu0 %v3648, 28
      %v3860 = vpop.permute.xlu0 %3859
      %3861 = vrot.lane.b32.xlu0 %v3658, 28
      %v3862 = vpop.permute.xlu0 %3861
      %3863 = vrot.lane.b32.xlu0 %v3672, 28
      %v3864 = vpop.permute.xlu0 %3863
      %3865 = vrot.lane.b32.xlu0 %v3682, 28
      %v3866 = vpop.permute.xlu0 %3865
      %3867 = vrot.lane.b32.xlu0 %v3696, 28
      %v3868 = vpop.permute.xlu0 %3867
      %3869 = vrot.lane.b32.xlu0 %v3706, 28
      %v3870 = vpop.permute.xlu0 %3869
      %3871 = vrot.lane.b32.xlu0 %v3720, 28
      %v3872 = vpop.permute.xlu0 %3871
      %3873 = vrot.lane.b32.xlu0 %v3730, 28
      %v3874 = vpop.permute.xlu0 %3873
      %3875 = vrot.lane.b32.xlu0 %v3744, 28
      %v3876 = vpop.permute.xlu0 %3875
      %3877 = vrot.lane.b32.xlu0 %v3754, 28
      %v3878 = vpop.permute.xlu0 %3877
      %3879 = vrot.lane.b32.xlu0 %v3768, 28
      %v3880 = vpop.permute.xlu0 %3879
      %3881 = vrot.lane.b32.xlu0 %v3778, 28
      %v3882 = vpop.permute.xlu0 %3881
      %3883 = vrot.lane.b32.xlu0 %v3792, 28
      %v3884 = vpop.permute.xlu0 %3883
      %3885 = vrot.lane.b32.xlu0 %v3802, 28
      %v3886 = vpop.permute.xlu0 %3885
      %3887 = vrot.lane.b32.xlu0 %v3816, 28
      %v3888 = vpop.permute.xlu0 %3887
      %3889 = vrot.lane.b32.xlu0 %v3826, 28
      %v3890 = vpop.permute.xlu0 %3889
      %vm3923 = vcmask 257248
      %3924 = vst.msk [vmem:[#allocation3] sm:$0xf] %vm3923, %v3828
      %3925 = vst.msk [vmem:[#allocation3 + $0x4] sm:$0xf] %vm3923, %v3830
      %3926 = vst.msk [vmem:[#allocation3 + $0x8] sm:$0xf] %vm3923, %v3832
      %3927 = vst.msk [vmem:[#allocation3 + $0xc] sm:$0xf] %vm3923, %v3834
      %3928 = vst.msk [vmem:[#allocation3 + $0x10] sm:$0xf] %vm3923, %v3836
      %3929 = vst.msk [vmem:[#allocation3 + $0x14] sm:$0xf] %vm3923, %v3838
      %3930 = vst.msk [vmem:[#allocation3 + $0x18] sm:$0xf] %vm3923, %v3840
      %3931 = vst.msk [vmem:[#allocation3 + $0x1c] sm:$0xf] %vm3923, %v3842
      %3932 = vst.msk [vmem:[#allocation3 + $0x20] sm:$0xf] %vm3923, %v3844
      %3933 = vst.msk [vmem:[#allocation3 + $0x24] sm:$0xf] %vm3923, %v3846
      %3934 = vst.msk [vmem:[#allocation3 + $0x28] sm:$0xf] %vm3923, %v3848
      %3935 = vst.msk [vmem:[#allocation3 + $0x2c] sm:$0xf] %vm3923, %v3850
      %3936 = vst.msk [vmem:[#allocation3 + $0x30] sm:$0xf] %vm3923, %v3852
      %3937 = vst.msk [vmem:[#allocation3 + $0x34] sm:$0xf] %vm3923, %v3854
      %3938 = vst.msk [vmem:[#allocation3 + $0x38] sm:$0xf] %vm3923, %v3856
      %3939 = vst.msk [vmem:[#allocation3 + $0x3c] sm:$0xf] %vm3923, %v3858
      %3940 = vst.msk [vmem:[#allocation3 + $0x40] sm:$0xf] %vm3923, %v3860
      %3941 = vst.msk [vmem:[#allocation3 + $0x44] sm:$0xf] %vm3923, %v3862
      %3942 = vst.msk [vmem:[#allocation3 + $0x48] sm:$0xf] %vm3923, %v3864
      %3943 = vst.msk [vmem:[#allocation3 + $0x4c] sm:$0xf] %vm3923, %v3866
      %3944 = vst.msk [vmem:[#allocation3 + $0x50] sm:$0xf] %vm3923, %v3868
      %3945 = vst.msk [vmem:[#allocation3 + $0x54] sm:$0xf] %vm3923, %v3870
      %3946 = vst.msk [vmem:[#allocation3 + $0x58] sm:$0xf] %vm3923, %v3872
      %3947 = vst.msk [vmem:[#allocation3 + $0x5c] sm:$0xf] %vm3923, %v3874
      %3948 = vst.msk [vmem:[#allocation3 + $0x60] sm:$0xf] %vm3923, %v3876
      %3949 = vst.msk [vmem:[#allocation3 + $0x64] sm:$0xf] %vm3923, %v3878
      %3950 = vst.msk [vmem:[#allocation3 + $0x68] sm:$0xf] %vm3923, %v3880
      %3951 = vst.msk [vmem:[#allocation3 + $0x6c] sm:$0xf] %vm3923, %v3882
      %3952 = vst.msk [vmem:[#allocation3 + $0x70] sm:$0xf] %vm3923, %v3884
      %3953 = vst.msk [vmem:[#allocation3 + $0x74] sm:$0xf] %vm3923, %v3886
      %3954 = vst.msk [vmem:[#allocation3 + $0x78] sm:$0xf] %vm3923, %v3888
      %3955 = vst.msk [vmem:[#allocation3 + $0x7c] sm:$0xf] %vm3923, %v3890
      %v3956 = vld [vmem:[%s3201] sm:$0xe]
      %v3957 = vld [vmem:[%s3201 + $0x4] sm:$0xf]
      %v3958 = vld [vmem:[%s3201 + $0x8] sm:$0x1]
      %v3959 = vld [vmem:[%s3201 + $0xc] sm:$0xe]
      %v3960 = vld [vmem:[%s3201 + $0x10] sm:$0xf]
      %v3961 = vld [vmem:[%s3201 + $0x14] sm:$0x1]
      %v3962 = vld [vmem:[%s3201 + $0x18] sm:$0xe]
      %v3963 = vld [vmem:[%s3201 + $0x1c] sm:$0xf]
      %v3964 = vld [vmem:[%s3201 + $0x20] sm:$0x1]
      %v3965 = vld [vmem:[%s3201 + $0x24] sm:$0xe]
      %v3966 = vld [vmem:[%s3201 + $0x28] sm:$0xf]
      %v3967 = vld [vmem:[%s3201 + $0x2c] sm:$0x1]
      %v3968 = vld [vmem:[%s3201 + $0x30] sm:$0xe]
      %v3969 = vld [vmem:[%s3201 + $0x34] sm:$0xf]
      %v3970 = vld [vmem:[%s3201 + $0x38] sm:$0x1]
      %v3971 = vld [vmem:[%s3201 + $0x3c] sm:$0xe]
      %v3972 = vld [vmem:[%s3201 + $0x40] sm:$0xf]
      %v3973 = vld [vmem:[%s3201 + $0x44] sm:$0x1]
      %v3974 = vld [vmem:[%s3201 + $0x48] sm:$0xe]
      %v3975 = vld [vmem:[%s3201 + $0x4c] sm:$0xf]
      %v3976 = vld [vmem:[%s3201 + $0x50] sm:$0x1]
      %v3977 = vld [vmem:[%s3201 + $0x54] sm:$0xe]
      %v3978 = vld [vmem:[%s3201 + $0x58] sm:$0xf]
      %v3979 = vld [vmem:[%s3201 + $0x5c] sm:$0x1]
      %v3980 = vld [vmem:[%s3201 + $0x60] sm:$0xe]
      %v3981 = vld [vmem:[%s3201 + $0x64] sm:$0xf]
      %v3982 = vld [vmem:[%s3201 + $0x68] sm:$0x1]
      %v3983 = vld [vmem:[%s3201 + $0x6c] sm:$0xe]
      %v3984 = vld [vmem:[%s3201 + $0x70] sm:$0xf]
      %v3985 = vld [vmem:[%s3201 + $0x74] sm:$0x1]
      %v3986 = vld [vmem:[%s3201 + $0x78] sm:$0xe]
      %v3987 = vld [vmem:[%s3201 + $0x7c] sm:$0xf]
      %v3988 = vld [vmem:[%s3201 + $0x80] sm:$0x1]
      %v3989 = vld [vmem:[%s3201 + $0x84] sm:$0xe]
      %v3990 = vld [vmem:[%s3201 + $0x88] sm:$0xf]
      %v3991 = vld [vmem:[%s3201 + $0x8c] sm:$0x1]
      %v3992 = vld [vmem:[%s3201 + $0x90] sm:$0xe]
      %v3993 = vld [vmem:[%s3201 + $0x94] sm:$0xf]
      %v3994 = vld [vmem:[%s3201 + $0x98] sm:$0x1]
      %v3995 = vld [vmem:[%s3201 + $0x9c] sm:$0xe]
      %v3996 = vld [vmem:[%s3201 + $0xa0] sm:$0xf]
      %v3997 = vld [vmem:[%s3201 + $0xa4] sm:$0x1]
      %v3998 = vld [vmem:[%s3201 + $0xa8] sm:$0xe]
      %v3999 = vld [vmem:[%s3201 + $0xac] sm:$0xf]
      %v4000 = vld [vmem:[%s3201 + $0xb0] sm:$0x1]
      %v4001 = vld [vmem:[%s3201 + $0xb4] sm:$0xe]
      %v4002 = vld [vmem:[%s3201 + $0xb8] sm:$0xf]
      %v4003 = vld [vmem:[%s3201 + $0xbc] sm:$0x1]
      %v4052 = vrot.slane %v3956, 5
      %v4053 = vrot.slane %v4052, 4
      %v4054 = vrot.slane %v3957, 5
      %v4055 = vsel %vm1868, %v4053, %v4054
      %v4056 = vrot.slane %v4054, 4
      %v4057 = vrot.slane %v3958, 5
      %v4058 = vsel %vm1868, %v4056, %v4057
      %v4059 = vrot.slane %v3959, 5
      %v4060 = vrot.slane %v4059, 4
      %v4061 = vrot.slane %v3960, 5
      %v4062 = vsel %vm1868, %v4060, %v4061
      %v4063 = vrot.slane %v4061, 4
      %v4064 = vrot.slane %v3961, 5
      %v4065 = vsel %vm1868, %v4063, %v4064
      %v4066 = vrot.slane %v3962, 5
      %v4067 = vrot.slane %v4066, 4
      %v4068 = vrot.slane %v3963, 5
      %v4069 = vsel %vm1868, %v4067, %v4068
      %v4070 = vrot.slane %v4068, 4
      %v4071 = vrot.slane %v3964, 5
      %v4072 = vsel %vm1868, %v4070, %v4071
      %v4073 = vrot.slane %v3965, 5
      %v4074 = vrot.slane %v4073, 4
      %v4075 = vrot.slane %v3966, 5
      %v4076 = vsel %vm1868, %v4074, %v4075
      %v4077 = vrot.slane %v4075, 4
      %v4078 = vrot.slane %v3967, 5
      %v4079 = vsel %vm1868, %v4077, %v4078
      %v4080 = vrot.slane %v3968, 5
      %v4081 = vrot.slane %v4080, 4
      %v4082 = vrot.slane %v3969, 5
      %v4083 = vsel %vm1868, %v4081, %v4082
      %v4084 = vrot.slane %v4082, 4
      %v4085 = vrot.slane %v3970, 5
      %v4086 = vsel %vm1868, %v4084, %v4085
      %v4087 = vrot.slane %v3971, 5
      %v4088 = vrot.slane %v4087, 4
      %v4089 = vrot.slane %v3972, 5
      %v4090 = vsel %vm1868, %v4088, %v4089
      %v4091 = vrot.slane %v4089, 4
      %v4092 = vrot.slane %v3973, 5
      %v4093 = vsel %vm1868, %v4091, %v4092
      %v4094 = vrot.slane %v3974, 5
      %v4095 = vrot.slane %v4094, 4
      %v4096 = vrot.slane %v3975, 5
      %v4097 = vsel %vm1868, %v4095, %v4096
      %v4098 = vrot.slane %v4096, 4
      %v4099 = vrot.slane %v3976, 5
      %v4100 = vsel %vm1868, %v4098, %v4099
      %v4101 = vrot.slane %v3977, 5
      %v4102 = vrot.slane %v4101, 4
      %v4103 = vrot.slane %v3978, 5
      %v4104 = vsel %vm1868, %v4102, %v4103
      %v4105 = vrot.slane %v4103, 4
      %v4106 = vrot.slane %v3979, 5
      %v4107 = vsel %vm1868, %v4105, %v4106
      %v4108 = vrot.slane %v3980, 5
      %v4109 = vrot.slane %v4108, 4
      %v4110 = vrot.slane %v3981, 5
      %v4111 = vsel %vm1868, %v4109, %v4110
      %v4112 = vrot.slane %v4110, 4
      %v4113 = vrot.slane %v3982, 5
      %v4114 = vsel %vm1868, %v4112, %v4113
      %v4115 = vrot.slane %v3983, 5
      %v4116 = vrot.slane %v4115, 4
      %v4117 = vrot.slane %v3984, 5
      %v4118 = vsel %vm1868, %v4116, %v4117
      %v4119 = vrot.slane %v4117, 4
      %v4120 = vrot.slane %v3985, 5
      %v4121 = vsel %vm1868, %v4119, %v4120
      %v4122 = vrot.slane %v3986, 5
      %v4123 = vrot.slane %v4122, 4
      %v4124 = vrot.slane %v3987, 5
      %v4125 = vsel %vm1868, %v4123, %v4124
      %v4126 = vrot.slane %v4124, 4
      %v4127 = vrot.slane %v3988, 5
      %v4128 = vsel %vm1868, %v4126, %v4127
      %v4129 = vrot.slane %v3989, 5
      %v4130 = vrot.slane %v4129, 4
      %v4131 = vrot.slane %v3990, 5
      %v4132 = vsel %vm1868, %v4130, %v4131
      %v4133 = vrot.slane %v4131, 4
      %v4134 = vrot.slane %v3991, 5
      %v4135 = vsel %vm1868, %v4133, %v4134
      %v4136 = vrot.slane %v3992, 5
      %v4137 = vrot.slane %v4136, 4
      %v4138 = vrot.slane %v3993, 5
      %v4139 = vsel %vm1868, %v4137, %v4138
      %v4140 = vrot.slane %v4138, 4
      %v4141 = vrot.slane %v3994, 5
      %v4142 = vsel %vm1868, %v4140, %v4141
      %v4143 = vrot.slane %v3995, 5
      %v4144 = vrot.slane %v4143, 4
      %v4145 = vrot.slane %v3996, 5
      %v4146 = vsel %vm1868, %v4144, %v4145
      %v4147 = vrot.slane %v4145, 4
      %v4148 = vrot.slane %v3997, 5
      %v4149 = vsel %vm1868, %v4147, %v4148
      %v4150 = vrot.slane %v3998, 5
      %v4151 = vrot.slane %v4150, 4
      %v4152 = vrot.slane %v3999, 5
      %v4153 = vsel %vm1868, %v4151, %v4152
      %v4154 = vrot.slane %v4152, 4
      %v4155 = vrot.slane %v4000, 5
      %v4156 = vsel %vm1868, %v4154, %v4155
      %v4157 = vrot.slane %v4001, 5
      %v4158 = vrot.slane %v4157, 4
      %v4159 = vrot.slane %v4002, 5
      %v4160 = vsel %vm1868, %v4158, %v4159
      %v4161 = vrot.slane %v4159, 4
      %v4162 = vrot.slane %v4003, 5
      %v4163 = vsel %vm1868, %v4161, %v4162
      %4164 = vrot.lane.b32.xlu0 %v4055, 32
      %v4165 = vpop.permute.xlu0 %4164
      %4166 = vrot.lane.b32.xlu0 %v4058, 32
      %v4167 = vpop.permute.xlu0 %4166
      %4168 = vrot.lane.b32.xlu0 %v4062, 32
      %v4169 = vpop.permute.xlu0 %4168
      %4170 = vrot.lane.b32.xlu0 %v4065, 32
      %v4171 = vpop.permute.xlu0 %4170
      %4172 = vrot.lane.b32.xlu0 %v4069, 32
      %v4173 = vpop.permute.xlu0 %4172
      %4174 = vrot.lane.b32.xlu0 %v4072, 32
      %v4175 = vpop.permute.xlu0 %4174
      %4176 = vrot.lane.b32.xlu0 %v4076, 32
      %v4177 = vpop.permute.xlu0 %4176
      %4178 = vrot.lane.b32.xlu0 %v4079, 32
      %v4179 = vpop.permute.xlu0 %4178
      %4180 = vrot.lane.b32.xlu0 %v4083, 32
      %v4181 = vpop.permute.xlu0 %4180
      %4182 = vrot.lane.b32.xlu0 %v4086, 32
      %v4183 = vpop.permute.xlu0 %4182
      %4184 = vrot.lane.b32.xlu0 %v4090, 32
      %v4185 = vpop.permute.xlu0 %4184
      %4186 = vrot.lane.b32.xlu0 %v4093, 32
      %v4187 = vpop.permute.xlu0 %4186
      %4188 = vrot.lane.b32.xlu0 %v4097, 32
      %v4189 = vpop.permute.xlu0 %4188
      %4190 = vrot.lane.b32.xlu0 %v4100, 32
      %v4191 = vpop.permute.xlu0 %4190
      %4192 = vrot.lane.b32.xlu0 %v4104, 32
      %v4193 = vpop.permute.xlu0 %4192
      %4194 = vrot.lane.b32.xlu0 %v4107, 32
      %v4195 = vpop.permute.xlu0 %4194
      %4196 = vrot.lane.b32.xlu0 %v4111, 32
      %v4197 = vpop.permute.xlu0 %4196
      %4198 = vrot.lane.b32.xlu0 %v4114, 32
      %v4199 = vpop.permute.xlu0 %4198
      %4200 = vrot.lane.b32.xlu0 %v4118, 32
      %v4201 = vpop.permute.xlu0 %4200
      %4202 = vrot.lane.b32.xlu0 %v4121, 32
      %v4203 = vpop.permute.xlu0 %4202
      %4204 = vrot.lane.b32.xlu0 %v4125, 32
      %v4205 = vpop.permute.xlu0 %4204
      %4206 = vrot.lane.b32.xlu0 %v4128, 32
      %v4207 = vpop.permute.xlu0 %4206
      %4208 = vrot.lane.b32.xlu0 %v4132, 32
      %v4209 = vpop.permute.xlu0 %4208
      %4210 = vrot.lane.b32.xlu0 %v4135, 32
      %v4211 = vpop.permute.xlu0 %4210
      %4212 = vrot.lane.b32.xlu0 %v4139, 32
      %v4213 = vpop.permute.xlu0 %4212
      %4214 = vrot.lane.b32.xlu0 %v4142, 32
      %v4215 = vpop.permute.xlu0 %4214
      %4216 = vrot.lane.b32.xlu0 %v4146, 32
      %v4217 = vpop.permute.xlu0 %4216
      %4218 = vrot.lane.b32.xlu0 %v4149, 32
      %v4219 = vpop.permute.xlu0 %4218
      %4220 = vrot.lane.b32.xlu0 %v4153, 32
      %v4221 = vpop.permute.xlu0 %4220
      %4222 = vrot.lane.b32.xlu0 %v4156, 32
      %v4223 = vpop.permute.xlu0 %4222
      %4224 = vrot.lane.b32.xlu0 %v4160, 32
      %v4225 = vpop.permute.xlu0 %4224
      %4226 = vrot.lane.b32.xlu0 %v4163, 32
      %v4227 = vpop.permute.xlu0 %4226
      %vm4260 = vcmask 290048
      %4261 = vst.msk [vmem:[#allocation3] sm:$0xf] %vm4260, %v4165
      %4262 = vst.msk [vmem:[#allocation3 + $0x4] sm:$0xf] %vm4260, %v4167
      %4263 = vst.msk [vmem:[#allocation3 + $0x8] sm:$0xf] %vm4260, %v4169
      %4264 = vst.msk [vmem:[#allocation3 + $0xc] sm:$0xf] %vm4260, %v4171
      %4265 = vst.msk [vmem:[#allocation3 + $0x10] sm:$0xf] %vm4260, %v4173
      %4266 = vst.msk [vmem:[#allocation3 + $0x14] sm:$0xf] %vm4260, %v4175
      %4267 = vst.msk [vmem:[#allocation3 + $0x18] sm:$0xf] %vm4260, %v4177
      %4268 = vst.msk [vmem:[#allocation3 + $0x1c] sm:$0xf] %vm4260, %v4179
      %4269 = vst.msk [vmem:[#allocation3 + $0x20] sm:$0xf] %vm4260, %v4181
      %4270 = vst.msk [vmem:[#allocation3 + $0x24] sm:$0xf] %vm4260, %v4183
      %4271 = vst.msk [vmem:[#allocation3 + $0x28] sm:$0xf] %vm4260, %v4185
      %4272 = vst.msk [vmem:[#allocation3 + $0x2c] sm:$0xf] %vm4260, %v4187
      %4273 = vst.msk [vmem:[#allocation3 + $0x30] sm:$0xf] %vm4260, %v4189
      %4274 = vst.msk [vmem:[#allocation3 + $0x34] sm:$0xf] %vm4260, %v4191
      %4275 = vst.msk [vmem:[#allocation3 + $0x38] sm:$0xf] %vm4260, %v4193
      %4276 = vst.msk [vmem:[#allocation3 + $0x3c] sm:$0xf] %vm4260, %v4195
      %4277 = vst.msk [vmem:[#allocation3 + $0x40] sm:$0xf] %vm4260, %v4197
      %4278 = vst.msk [vmem:[#allocation3 + $0x44] sm:$0xf] %vm4260, %v4199
      %4279 = vst.msk [vmem:[#allocation3 + $0x48] sm:$0xf] %vm4260, %v4201
      %4280 = vst.msk [vmem:[#allocation3 + $0x4c] sm:$0xf] %vm4260, %v4203
      %4281 = vst.msk [vmem:[#allocation3 + $0x50] sm:$0xf] %vm4260, %v4205
      %4282 = vst.msk [vmem:[#allocation3 + $0x54] sm:$0xf] %vm4260, %v4207
      %4283 = vst.msk [vmem:[#allocation3 + $0x58] sm:$0xf] %vm4260, %v4209
      %4284 = vst.msk [vmem:[#allocation3 + $0x5c] sm:$0xf] %vm4260, %v4211
      %4285 = vst.msk [vmem:[#allocation3 + $0x60] sm:$0xf] %vm4260, %v4213
      %4286 = vst.msk [vmem:[#allocation3 + $0x64] sm:$0xf] %vm4260, %v4215
      %4287 = vst.msk [vmem:[#allocation3 + $0x68] sm:$0xf] %vm4260, %v4217
      %4288 = vst.msk [vmem:[#allocation3 + $0x6c] sm:$0xf] %vm4260, %v4219
      %4289 = vst.msk [vmem:[#allocation3 + $0x70] sm:$0xf] %vm4260, %v4221
      %4290 = vst.msk [vmem:[#allocation3 + $0x74] sm:$0xf] %vm4260, %v4223
      %4291 = vst.msk [vmem:[#allocation3 + $0x78] sm:$0xf] %vm4260, %v4225
      %4292 = vst.msk [vmem:[#allocation3 + $0x7c] sm:$0xf] %vm4260, %v4227
      %v4293 = vld [vmem:[#allocation3] sm:$0xf]
      %v4294 = vld [vmem:[#allocation3 + $0x4] sm:$0xf]
      %v4295 = vld [vmem:[#allocation3 + $0x8] sm:$0xf]
      %v4296 = vld [vmem:[#allocation3 + $0xc] sm:$0xf]
      %v4297 = vld [vmem:[#allocation3 + $0x10] sm:$0xf]
      %v4298 = vld [vmem:[#allocation3 + $0x14] sm:$0xf]
      %v4299 = vld [vmem:[#allocation3 + $0x18] sm:$0xf]
      %v4300 = vld [vmem:[#allocation3 + $0x1c] sm:$0xf]
      %v4301 = vld [vmem:[#allocation3 + $0x20] sm:$0xf]
      %v4302 = vld [vmem:[#allocation3 + $0x24] sm:$0xf]
      %v4303 = vld [vmem:[#allocation3 + $0x28] sm:$0xf]
      %v4304 = vld [vmem:[#allocation3 + $0x2c] sm:$0xf]
      %v4305 = vld [vmem:[#allocation3 + $0x30] sm:$0xf]
      %v4306 = vld [vmem:[#allocation3 + $0x34] sm:$0xf]
      %v4307 = vld [vmem:[#allocation3 + $0x38] sm:$0xf]
      %v4308 = vld [vmem:[#allocation3 + $0x3c] sm:$0xf]
      %v4309 = vld [vmem:[#allocation3 + $0x40] sm:$0xf]
      %v4310 = vld [vmem:[#allocation3 + $0x44] sm:$0xf]
      %v4311 = vld [vmem:[#allocation3 + $0x48] sm:$0xf]
      %v4312 = vld [vmem:[#allocation3 + $0x4c] sm:$0xf]
      %v4313 = vld [vmem:[#allocation3 + $0x50] sm:$0xf]
      %v4314 = vld [vmem:[#allocation3 + $0x54] sm:$0xf]
      %v4315 = vld [vmem:[#allocation3 + $0x58] sm:$0xf]
      %v4316 = vld [vmem:[#allocation3 + $0x5c] sm:$0xf]
      %v4317 = vld [vmem:[#allocation3 + $0x60] sm:$0xf]
      %v4318 = vld [vmem:[#allocation3 + $0x64] sm:$0xf]
      %v4319 = vld [vmem:[#allocation3 + $0x68] sm:$0xf]
      %v4320 = vld [vmem:[#allocation3 + $0x6c] sm:$0xf]
      %v4321 = vld [vmem:[#allocation3 + $0x70] sm:$0xf]
      %v4322 = vld [vmem:[#allocation3 + $0x74] sm:$0xf]
      %v4323 = vld [vmem:[#allocation3 + $0x78] sm:$0xf]
      %v4324 = vld [vmem:[#allocation3 + $0x7c] sm:$0xf]
      %v4325 = vld [vmem:[%s3] sm:$0xf]
      %v4326 = vld [vmem:[%s3 + $0x4] sm:$0xf]
      %v4327 = vld [vmem:[%s3 + $0x8] sm:$0xf]
      %v4328 = vld [vmem:[%s3 + $0xc] sm:$0xf]
      %v4329 = vld [vmem:[%s3 + $0x10] sm:$0x3]
      %v4362 = vunpack.c.l.b16 %v4293
      %v4363 = vunpack.c.l.b16 %v4294
      %v4364 = vunpack.c.l.b16 %v4295
      %v4365 = vunpack.c.l.b16 %v4296
      %v4366 = vunpack.c.l.b16 %v4297
      %v4367 = vunpack.c.l.b16 %v4298
      %v4368 = vunpack.c.l.b16 %v4299
      %v4369 = vunpack.c.l.b16 %v4300
      %v4370 = vunpack.c.l.b16 %v4301
      %v4371 = vunpack.c.l.b16 %v4302
      %v4372 = vunpack.c.l.b16 %v4303
      %v4373 = vunpack.c.l.b16 %v4304
      %v4374 = vunpack.c.l.b16 %v4305
      %v4375 = vunpack.c.l.b16 %v4306
      %v4376 = vunpack.c.l.b16 %v4307
      %v4377 = vunpack.c.l.b16 %v4308
      %v4378 = vunpack.c.l.b16 %v4309
      %v4379 = vunpack.c.l.b16 %v4310
      %v4380 = vunpack.c.l.b16 %v4311
      %v4381 = vunpack.c.l.b16 %v4312
      %v4382 = vunpack.c.l.b16 %v4313
      %v4383 = vunpack.c.l.b16 %v4314
      %v4384 = vunpack.c.l.b16 %v4315
      %v4385 = vunpack.c.l.b16 %v4316
      %v4386 = vunpack.c.l.b16 %v4317
      %v4387 = vunpack.c.l.b16 %v4318
      %v4388 = vunpack.c.l.b16 %v4319
      %v4389 = vunpack.c.l.b16 %v4320
      %v4390 = vunpack.c.l.b16 %v4321
      %v4391 = vunpack.c.l.b16 %v4322
      %v4392 = vunpack.c.l.b16 %v4323
      %v4393 = vunpack.c.l.b16 %v4324
      %v4394 = vpack.c.b16 %v4363, %v4362
      %v4395 = vpack.c.b16 %v4365, %v4364
      %v4396 = vpack.c.b16 %v4367, %v4366
      %v4397 = vpack.c.b16 %v4369, %v4368
      %v4398 = vpack.c.b16 %v4371, %v4370
      %v4399 = vpack.c.b16 %v4373, %v4372
      %v4400 = vpack.c.b16 %v4375, %v4374
      %v4401 = vpack.c.b16 %v4377, %v4376
      %v4402 = vpack.c.b16 %v4379, %v4378
      %v4403 = vpack.c.b16 %v4381, %v4380
      %v4404 = vpack.c.b16 %v4383, %v4382
      %v4405 = vpack.c.b16 %v4385, %v4384
      %v4406 = vpack.c.b16 %v4387, %v4386
      %v4407 = vpack.c.b16 %v4389, %v4388
      %v4408 = vpack.c.b16 %v4391, %v4390
      %v4409 = vpack.c.b16 %v4393, %v4392
      %v4415 = vunpack.c.l.b16 %v4325
      %v4416 = vunpack.c.l.b16 %v4326
      %v4417 = vunpack.c.l.b16 %v4327
      %v4418 = vunpack.c.l.b16 %v4328
      %v4419 = vunpack.c.l.b16 %v4329
      %v4420 = vpack.c.b16 %v4416, %v4415
      %v4421 = vpack.c.b16 %v4418, %v4417
      %v4422 = vpack.c.b16 %v4419, %v4419
      %vm4425 = vcmask 293888
      %v4427 = vsel %vm4425, %v4394, 0
      %v4430 = vsel %vm4425, %v4395, 0
      %v4433 = vsel %vm4425, %v4396, 0
      %v4436 = vsel %vm4425, %v4397, 0
      %v4439 = vsel %vm4425, %v4398, 0
      %v4442 = vsel %vm4425, %v4399, 0
      %v4445 = vsel %vm4425, %v4400, 0
      %v4448 = vsel %vm4425, %v4401, 0
      %v4451 = vsel %vm4425, %v4402, 0
      %v4454 = vsel %vm4425, %v4403, 0
      %v4457 = vsel %vm4425, %v4404, 0
      %v4460 = vsel %vm4425, %v4405, 0
      %v4463 = vsel %vm4425, %v4406, 0
      %v4466 = vsel %vm4425, %v4407, 0
      %v4469 = vsel %vm4425, %v4408, 0
      %v4472 = vsel %vm4425, %v4409, 0
      %vm4474 = vcmask 1041408
      %v4476 = vsel %vm4474, %v4422, 0
      %4478 = vmatpush.bf16.msra.mxu0 0
      %4479 = vmatpush.bf16.msra.mxu0 0
      %4480 = vmatpush.bf16.msra.mxu0 0
      %4481 = vmatpush.bf16.msra.mxu0 0
      %4482 = vmatpush.bf16.msra.mxu0 0
      %4483 = vmatpush.bf16.msra.mxu0 %v4476
      %4484 = vmatpush.bf16.msra.mxu0 %v4421
      %4485 = vmatpush.bf16.msra.mxu0 %v4420
      %4486 = vmatmul.bf16.gmra.mxu0 %v4427
      %v4487 = vpop.f32.mrf.mxu0
      %v4488 = vadd.f32 0.0, %v4487
      %v4489 = vpop.f32.mrf.mxu0
      %v4490 = vadd.f32 0.0, %v4489
      %4491 = vmatmul.bf16.gmra.mxu0 %v4430
      %v4492 = vpop.f32.mrf.mxu0
      %v4493 = vadd.f32 0.0, %v4492
      %v4494 = vpop.f32.mrf.mxu0
      %v4495 = vadd.f32 0.0, %v4494
      %4496 = vmatmul.bf16.gmra.mxu0 %v4433
      %v4497 = vpop.f32.mrf.mxu0
      %v4498 = vadd.f32 0.0, %v4497
      %v4499 = vpop.f32.mrf.mxu0
      %v4500 = vadd.f32 0.0, %v4499
      %4501 = vmatmul.bf16.gmra.mxu0 %v4436
      %v4502 = vpop.f32.mrf.mxu0
      %v4503 = vadd.f32 0.0, %v4502
      %v4504 = vpop.f32.mrf.mxu0
      %v4505 = vadd.f32 0.0, %v4504
      %4506 = vmatmul.bf16.gmra.mxu0 %v4439
      %v4507 = vpop.f32.mrf.mxu0
      %v4508 = vadd.f32 0.0, %v4507
      %v4509 = vpop.f32.mrf.mxu0
      %v4510 = vadd.f32 0.0, %v4509
      %4511 = vmatmul.bf16.gmra.mxu0 %v4442
      %v4512 = vpop.f32.mrf.mxu0
      %v4513 = vadd.f32 0.0, %v4512
      %v4514 = vpop.f32.mrf.mxu0
      %v4515 = vadd.f32 0.0, %v4514
      %4516 = vmatmul.bf16.gmra.mxu0 %v4445
      %v4517 = vpop.f32.mrf.mxu0
      %v4518 = vadd.f32 0.0, %v4517
      %v4519 = vpop.f32.mrf.mxu0
      %v4520 = vadd.f32 0.0, %v4519
      %4521 = vmatmul.bf16.gmra.mxu0 %v4448
      %v4522 = vpop.f32.mrf.mxu0
      %v4523 = vadd.f32 0.0, %v4522
      %v4524 = vpop.f32.mrf.mxu0
      %v4525 = vadd.f32 0.0, %v4524
      %4526 = vmatmul.bf16.gmra.mxu0 %v4451
      %v4527 = vpop.f32.mrf.mxu0
      %v4528 = vadd.f32 0.0, %v4527
      %v4529 = vpop.f32.mrf.mxu0
      %v4530 = vadd.f32 0.0, %v4529
      %4531 = vmatmul.bf16.gmra.mxu0 %v4454
      %v4532 = vpop.f32.mrf.mxu0
      %v4533 = vadd.f32 0.0, %v4532
      %v4534 = vpop.f32.mrf.mxu0
      %v4535 = vadd.f32 0.0, %v4534
      %4536 = vmatmul.bf16.gmra.mxu0 %v4457
      %v4537 = vpop.f32.mrf.mxu0
      %v4538 = vadd.f32 0.0, %v4537
      %v4539 = vpop.f32.mrf.mxu0
      %v4540 = vadd.f32 0.0, %v4539
      %4541 = vmatmul.bf16.gmra.mxu0 %v4460
      %v4542 = vpop.f32.mrf.mxu0
      %v4543 = vadd.f32 0.0, %v4542
      %v4544 = vpop.f32.mrf.mxu0
      %v4545 = vadd.f32 0.0, %v4544
      %4546 = vmatmul.bf16.gmra.mxu0 %v4463
      %v4547 = vpop.f32.mrf.mxu0
      %v4548 = vadd.f32 0.0, %v4547
      %v4549 = vpop.f32.mrf.mxu0
      %v4550 = vadd.f32 0.0, %v4549
      %4551 = vmatmul.bf16.gmra.mxu0 %v4466
      %v4552 = vpop.f32.mrf.mxu0
      %v4553 = vadd.f32 0.0, %v4552
      %v4554 = vpop.f32.mrf.mxu0
      %v4555 = vadd.f32 0.0, %v4554
      %4556 = vmatmul.bf16.gmra.mxu0 %v4469
      %v4557 = vpop.f32.mrf.mxu0
      %v4558 = vadd.f32 0.0, %v4557
      %v4559 = vpop.f32.mrf.mxu0
      %v4560 = vadd.f32 0.0, %v4559
      %4561 = vmatmul.bf16.gmra.mxu0 %v4472
      %v4562 = vpop.f32.mrf.mxu0
      %v4563 = vadd.f32 0.0, %v4562
      %v4564 = vpop.f32.mrf.mxu0
      %v4565 = vadd.f32 0.0, %v4564
      %4566 = vdwg.mxu0
      %v4567 = vpack.c.bf16 %v4488, %v4488
      %v4568 = vpack.c.bf16 %v4490, %v4490
      %v4569 = vpack.c.bf16 %v4493, %v4493
      %v4570 = vpack.c.bf16 %v4495, %v4495
      %v4571 = vpack.c.bf16 %v4498, %v4498
      %v4572 = vpack.c.bf16 %v4500, %v4500
      %v4573 = vpack.c.bf16 %v4503, %v4503
      %v4574 = vpack.c.bf16 %v4505, %v4505
      %v4575 = vpack.c.bf16 %v4508, %v4508
      %v4576 = vpack.c.bf16 %v4510, %v4510
      %v4577 = vpack.c.bf16 %v4513, %v4513
      %v4578 = vpack.c.bf16 %v4515, %v4515
      %v4579 = vpack.c.bf16 %v4518, %v4518
      %v4580 = vpack.c.bf16 %v4520, %v4520
      %v4581 = vpack.c.bf16 %v4523, %v4523
      %v4582 = vpack.c.bf16 %v4525, %v4525
      %v4583 = vpack.c.bf16 %v4528, %v4528
      %v4584 = vpack.c.bf16 %v4530, %v4530
      %v4585 = vpack.c.bf16 %v4533, %v4533
      %v4586 = vpack.c.bf16 %v4535, %v4535
      %v4587 = vpack.c.bf16 %v4538, %v4538
      %v4588 = vpack.c.bf16 %v4540, %v4540
      %v4589 = vpack.c.bf16 %v4543, %v4543
      %v4590 = vpack.c.bf16 %v4545, %v4545
      %v4591 = vpack.c.bf16 %v4548, %v4548
      %v4592 = vpack.c.bf16 %v4550, %v4550
      %v4593 = vpack.c.bf16 %v4553, %v4553
      %v4594 = vpack.c.bf16 %v4555, %v4555
      %v4595 = vpack.c.bf16 %v4558, %v4558
      %v4596 = vpack.c.bf16 %v4560, %v4560
      %v4597 = vpack.c.bf16 %v4563, %v4563
      %v4598 = vpack.c.bf16 %v4565, %v4565
      %vm4599 = vcmask 60416
      %4600 = vst.msk [vmem:[%s437] sm:$0xf] %vm4599, %v4567
      %4601 = vst.msk [vmem:[%s437 + $0x4] sm:$0xf] %vm4599, %v4568
      %4602 = vst.msk [vmem:[%s437 + $0x8] sm:$0xf] %vm4599, %v4569
      %4603 = vst.msk [vmem:[%s437 + $0xc] sm:$0xf] %vm4599, %v4570
      %4604 = vst.msk [vmem:[%s437 + $0x10] sm:$0xf] %vm4599, %v4571
      %4605 = vst.msk [vmem:[%s437 + $0x14] sm:$0xf] %vm4599, %v4572
      %4606 = vst.msk [vmem:[%s437 + $0x18] sm:$0xf] %vm4599, %v4573
      %4607 = vst.msk [vmem:[%s437 + $0x1c] sm:$0xf] %vm4599, %v4574
      %4608 = vst.msk [vmem:[%s437 + $0x20] sm:$0xf] %vm4599, %v4575
      %4609 = vst.msk [vmem:[%s437 + $0x24] sm:$0xf] %vm4599, %v4576
      %4610 = vst.msk [vmem:[%s437 + $0x28] sm:$0xf] %vm4599, %v4577
      %4611 = vst.msk [vmem:[%s437 + $0x2c] sm:$0xf] %vm4599, %v4578
      %4612 = vst.msk [vmem:[%s437 + $0x30] sm:$0xf] %vm4599, %v4579
      %4613 = vst.msk [vmem:[%s437 + $0x34] sm:$0xf] %vm4599, %v4580
      %4614 = vst.msk [vmem:[%s437 + $0x38] sm:$0xf] %vm4599, %v4581
      %4615 = vst.msk [vmem:[%s437 + $0x3c] sm:$0xf] %vm4599, %v4582
      %4616 = vst.msk [vmem:[%s437 + $0x40] sm:$0xf] %vm4599, %v4583
      %4617 = vst.msk [vmem:[%s437 + $0x44] sm:$0xf] %vm4599, %v4584
      %4618 = vst.msk [vmem:[%s437 + $0x48] sm:$0xf] %vm4599, %v4585
      %4619 = vst.msk [vmem:[%s437 + $0x4c] sm:$0xf] %vm4599, %v4586
      %4620 = vst.msk [vmem:[%s437 + $0x50] sm:$0xf] %vm4599, %v4587
      %4621 = vst.msk [vmem:[%s437 + $0x54] sm:$0xf] %vm4599, %v4588
      %4622 = vst.msk [vmem:[%s437 + $0x58] sm:$0xf] %vm4599, %v4589
      %4623 = vst.msk [vmem:[%s437 + $0x5c] sm:$0xf] %vm4599, %v4590
      %4624 = vst.msk [vmem:[%s437 + $0x60] sm:$0xf] %vm4599, %v4591
      %4625 = vst.msk [vmem:[%s437 + $0x64] sm:$0xf] %vm4599, %v4592
      %4626 = vst.msk [vmem:[%s437 + $0x68] sm:$0xf] %vm4599, %v4593
      %4627 = vst.msk [vmem:[%s437 + $0x6c] sm:$0xf] %vm4599, %v4594
      %4628 = vst.msk [vmem:[%s437 + $0x70] sm:$0xf] %vm4599, %v4595
      %4629 = vst.msk [vmem:[%s437 + $0x74] sm:$0xf] %vm4599, %v4596
      %4630 = vst.msk [vmem:[%s437 + $0x78] sm:$0xf] %vm4599, %v4597
      %4631 = vst.msk [vmem:[%s437 + $0x7c] sm:$0xf] %vm4599, %v4598
      %vm4632 = vcmask 64512
      %v4633 = vsel %vm4632, %v4488, 0.0
      %v4634 = vsel %vm4632, %v4490, 0.0
      %v4635 = vadd.f32 %v4633, %v4634
      %v4636 = vsel %vm4632, %v4493, 0.0
      %v4637 = vadd.f32 %v4635, %v4636
      %v4638 = vsel %vm4632, %v4495, 0.0
      %v4639 = vadd.f32 %v4637, %v4638
      %v4640 = vsel %vm4632, %v4498, 0.0
      %v4641 = vadd.f32 %v4639, %v4640
      %v4642 = vsel %vm4632, %v4500, 0.0
      %v4643 = vadd.f32 %v4641, %v4642
      %v4644 = vsel %vm4632, %v4503, 0.0
      %v4645 = vadd.f32 %v4643, %v4644
      %v4646 = vsel %vm4632, %v4505, 0.0
      %v4647 = vadd.f32 %v4645, %v4646
      %v4648 = vsel %vm4632, %v4508, 0.0
      %v4649 = vadd.f32 %v4647, %v4648
      %v4650 = vsel %vm4632, %v4510, 0.0
      %v4651 = vadd.f32 %v4649, %v4650
      %v4652 = vsel %vm4632, %v4513, 0.0
      %v4653 = vadd.f32 %v4651, %v4652
      %v4654 = vsel %vm4632, %v4515, 0.0
      %v4655 = vadd.f32 %v4653, %v4654
      %v4656 = vsel %vm4632, %v4518, 0.0
      %v4657 = vadd.f32 %v4655, %v4656
      %v4658 = vsel %vm4632, %v4520, 0.0
      %v4659 = vadd.f32 %v4657, %v4658
      %v4660 = vsel %vm4632, %v4523, 0.0
      %v4661 = vadd.f32 %v4659, %v4660
      %v4662 = vsel %vm4632, %v4525, 0.0
      %v4663 = vadd.f32 %v4661, %v4662
      %v4664 = vsel %vm4632, %v4528, 0.0
      %v4665 = vadd.f32 %v4663, %v4664
      %v4666 = vsel %vm4632, %v4530, 0.0
      %v4667 = vadd.f32 %v4665, %v4666
      %v4668 = vsel %vm4632, %v4533, 0.0
      %v4669 = vadd.f32 %v4667, %v4668
      %v4670 = vsel %vm4632, %v4535, 0.0
      %v4671 = vadd.f32 %v4669, %v4670
      %v4672 = vsel %vm4632, %v4538, 0.0
      %v4673 = vadd.f32 %v4671, %v4672
      %v4674 = vsel %vm4632, %v4540, 0.0
      %v4675 = vadd.f32 %v4673, %v4674
      %v4676 = vsel %vm4632, %v4543, 0.0
      %v4677 = vadd.f32 %v4675, %v4676
      %v4678 = vsel %vm4632, %v4545, 0.0
      %v4679 = vadd.f32 %v4677, %v4678
      %v4680 = vsel %vm4632, %v4548, 0.0
      %v4681 = vadd.f32 %v4679, %v4680
      %v4682 = vsel %vm4632, %v4550, 0.0
      %v4683 = vadd.f32 %v4681, %v4682
      %v4684 = vsel %vm4632, %v4553, 0.0
      %v4685 = vadd.f32 %v4683, %v4684
      %v4686 = vsel %vm4632, %v4555, 0.0
      %v4687 = vadd.f32 %v4685, %v4686
      %v4688 = vsel %vm4632, %v4558, 0.0
      %v4689 = vadd.f32 %v4687, %v4688
      %v4690 = vsel %vm4632, %v4560, 0.0
      %v4691 = vadd.f32 %v4689, %v4690
      %v4692 = vsel %vm4632, %v4563, 0.0
      %v4693 = vadd.f32 %v4691, %v4692
      %v4694 = vsel %vm4632, %v4565, 0.0
      %v4695 = vadd.f32 %v4693, %v4694
      %v4696 = vrot.slane %v4695, 4
      %v4697 = vadd.f32 %v4695, %v4696
      %v4698 = vrot.slane %v4697, 2
      %v4699 = vadd.f32 %v4697, %v4698
      %v4700 = vrot.slane %v4699, 1
      %v4701 = vadd.f32 %v4699, %v4700
      %vm4702 = vcmask 57344
      %4703 = vst.msk [vmem:[%s444] sm:$0x1] %vm4702, %v4701
      %v4704 = vmul.f32 %v4488, %v4488
      %v4705 = vmul.f32 %v4490, %v4490
      %v4706 = vmul.f32 %v4493, %v4493
      %v4707 = vmul.f32 %v4495, %v4495
      %v4708 = vmul.f32 %v4498, %v4498
      %v4709 = vmul.f32 %v4500, %v4500
      %v4710 = vmul.f32 %v4503, %v4503
      %v4711 = vmul.f32 %v4505, %v4505
      %v4712 = vmul.f32 %v4508, %v4508
      %v4713 = vmul.f32 %v4510, %v4510
      %v4714 = vmul.f32 %v4513, %v4513
      %v4715 = vmul.f32 %v4515, %v4515
      %v4716 = vmul.f32 %v4518, %v4518
      %v4717 = vmul.f32 %v4520, %v4520
      %v4718 = vmul.f32 %v4523, %v4523
      %v4719 = vmul.f32 %v4525, %v4525
      %v4720 = vmul.f32 %v4528, %v4528
      %v4721 = vmul.f32 %v4530, %v4530
      %v4722 = vmul.f32 %v4533, %v4533
      %v4723 = vmul.f32 %v4535, %v4535
      %v4724 = vmul.f32 %v4538, %v4538
      %v4725 = vmul.f32 %v4540, %v4540
      %v4726 = vmul.f32 %v4543, %v4543
      %v4727 = vmul.f32 %v4545, %v4545
      %v4728 = vmul.f32 %v4548, %v4548
      %v4729 = vmul.f32 %v4550, %v4550
      %v4730 = vmul.f32 %v4553, %v4553
      %v4731 = vmul.f32 %v4555, %v4555
      %v4732 = vmul.f32 %v4558, %v4558
      %v4733 = vmul.f32 %v4560, %v4560
      %v4734 = vmul.f32 %v4563, %v4563
      %v4735 = vmul.f32 %v4565, %v4565
      %v4736 = vsel %vm4632, %v4704, 0.0
      %v4737 = vsel %vm4632, %v4705, 0.0
      %v4738 = vadd.f32 %v4736, %v4737
      %v4739 = vsel %vm4632, %v4706, 0.0
      %v4740 = vadd.f32 %v4738, %v4739
      %v4741 = vsel %vm4632, %v4707, 0.0
      %v4742 = vadd.f32 %v4740, %v4741
      %v4743 = vsel %vm4632, %v4708, 0.0
      %v4744 = vadd.f32 %v4742, %v4743
      %v4745 = vsel %vm4632, %v4709, 0.0
      %v4746 = vadd.f32 %v4744, %v4745
      %v4747 = vsel %vm4632, %v4710, 0.0
      %v4748 = vadd.f32 %v4746, %v4747
      %v4749 = vsel %vm4632, %v4711, 0.0
      %v4750 = vadd.f32 %v4748, %v4749
      %v4751 = vsel %vm4632, %v4712, 0.0
      %v4752 = vadd.f32 %v4750, %v4751
      %v4753 = vsel %vm4632, %v4713, 0.0
      %v4754 = vadd.f32 %v4752, %v4753
      %v4755 = vsel %vm4632, %v4714, 0.0
      %v4756 = vadd.f32 %v4754, %v4755
      %v4757 = vsel %vm4632, %v4715, 0.0
      %v4758 = vadd.f32 %v4756, %v4757
      %v4759 = vsel %vm4632, %v4716, 0.0
      %v4760 = vadd.f32 %v4758, %v4759
      %v4761 = vsel %vm4632, %v4717, 0.0
      %v4762 = vadd.f32 %v4760, %v4761
      %v4763 = vsel %vm4632, %v4718, 0.0
      %v4764 = vadd.f32 %v4762, %v4763
      %v4765 = vsel %vm4632, %v4719, 0.0
      %v4766 = vadd.f32 %v4764, %v4765
      %v4767 = vsel %vm4632, %v4720, 0.0
      %v4768 = vadd.f32 %v4766, %v4767
      %v4769 = vsel %vm4632, %v4721, 0.0
      %v4770 = vadd.f32 %v4768, %v4769
      %v4771 = vsel %vm4632, %v4722, 0.0
      %v4772 = vadd.f32 %v4770, %v4771
      %v4773 = vsel %vm4632, %v4723, 0.0
      %v4774 = vadd.f32 %v4772, %v4773
      %v4775 = vsel %vm4632, %v4724, 0.0
      %v4776 = vadd.f32 %v4774, %v4775
      %v4777 = vsel %vm4632, %v4725, 0.0
      %v4778 = vadd.f32 %v4776, %v4777
      %v4779 = vsel %vm4632, %v4726, 0.0
      %v4780 = vadd.f32 %v4778, %v4779
      %v4781 = vsel %vm4632, %v4727, 0.0
      %v4782 = vadd.f32 %v4780, %v4781
      %v4783 = vsel %vm4632, %v4728, 0.0
      %v4784 = vadd.f32 %v4782, %v4783
      %v4785 = vsel %vm4632, %v4729, 0.0
      %v4786 = vadd.f32 %v4784, %v4785
      %v4787 = vsel %vm4632, %v4730, 0.0
      %v4788 = vadd.f32 %v4786, %v4787
      %v4789 = vsel %vm4632, %v4731, 0.0
      %v4790 = vadd.f32 %v4788, %v4789
      %v4791 = vsel %vm4632, %v4732, 0.0
      %v4792 = vadd.f32 %v4790, %v4791
      %v4793 = vsel %vm4632, %v4733, 0.0
      %v4794 = vadd.f32 %v4792, %v4793
      %v4795 = vsel %vm4632, %v4734, 0.0
      %v4796 = vadd.f32 %v4794, %v4795
      %v4797 = vsel %vm4632, %v4735, 0.0
      %v4798 = vadd.f32 %v4796, %v4797
      %v4799 = vrot.slane %v4798, 4
      %v4800 = vadd.f32 %v4798, %v4799
      %v4801 = vrot.slane %v4800, 2
      %v4802 = vadd.f32 %v4800, %v4801
      %v4803 = vrot.slane %v4802, 1
      %v4804 = vadd.f32 %v4802, %v4803
      %4805 = vst.msk [vmem:[%s450] sm:$0x1] %vm4702, %v4804
      %s4806 = smul.u32 32, %s23
      %p4807 = scmp.lt.s32.totalorder %s22, 1
      %s4808 = scalar_select %p4807, %s22, 1
      %p4809 = scmp.lt.s32.totalorder %s4806, 31
      %s4810 = scalar_select %p4809, %s4806, 31
      %s4811 = smul.addr %s4808, 32
      %s4812 = sadd.s32 %s4810, %s4811
      %s4813 = smul.addr %s4812, 4
      %s4814 = scalar_lea.vmem %s4, %s4813
      %p4815 = scmp.lt.s32.totalorder %s22, 1
      %s4816 = scalar_select %p4815, %s22, 1
      %p4817 = scmp.lt.s32.totalorder %s23, 0
      %s4818 = scalar_select %p4817, %s23, 0
      %s4819 = sadd.s32 %s4818, %s4816
      %s4820 = scalar_lea.vmem %s5, %s4819
      %p4821 = scmp.lt.s32.totalorder %s22, 1
      %s4822 = scalar_select %p4821, %s22, 1
      %p4823 = scmp.lt.s32.totalorder %s23, 0
      %s4824 = scalar_select %p4823, %s23, 0
      %s4825 = sadd.s32 %s4824, %s4822
      %s4826 = scalar_lea.vmem %s6, %s4825
      // Predicated region
      $region37: #{conv_block_forward.2} parent=35 // pred_check
        %p4827 = pneg %p171
      $region38: #{conv_block_forward.2} parent=35 // pred_check_branch
        %4829 = sbr.rel (%p4827) target = $region40
      $region39: #{conv_block_forward.2} parent=35 // pred_region
        %s4830 = smul.u32 32, %s23
      $region40: #{conv_block_forward.2} parent=35 // pred_fallthru
        _
      // Predicated region
      $region41: #{conv_block_forward.2} parent=35 // pred_check
        %p4831 = pneg %p199
      $region42: #{conv_block_forward.2} parent=35 // pred_check_branch
        %4833 = sbr.rel (%p4831) target = $region44
      $region43: #{conv_block_forward.2} parent=35 // pred_region
        _
      $region44: #{conv_block_forward.2} parent=35 // pred_fallthru
        _
      // Predicated region
      $region45: #{conv_block_forward.2} parent=35 // pred_check
        %p4834 = pneg %p227
      $region46: #{conv_block_forward.2} parent=35 // pred_check_branch
        %4836 = sbr.rel (%p4834) target = $region48
      $region47: #{conv_block_forward.2} parent=35 // pred_region
        _
      $region48: #{conv_block_forward.2} parent=35 // pred_fallthru
        _
    $region36: #{conv_block_forward.2} parent=5 // pred_fallthru
      _
    %p4837 = scmp.le.s32.totalorder 2, %s13
    // Predicated region
    $region49: #{conv_block_forward.2} parent=5 // pred_check
      %p4838 = pneg %p4837
    $region50: #{conv_block_forward.2} parent=5 // pred_check_branch
      %4840 = sbr.rel (%p4838) target = $region52
    $region51: #{conv_block_forward.2} parent=5 // pred_region
      %s4841 = ssub.s32 %s13, 2
      // Predicated region
      $region53: #{conv_block_forward.2} parent=51 // pred_check
        %p4842 = pneg %p177
      $region54: #{conv_block_forward.2} parent=51 // pred_check_branch
        %4844 = sbr.rel (%p4842) target = $region56
      $region55: #{conv_block_forward.2} parent=51 // pred_region
        %s4845 = smul.u32 32, %s25
        %p4846 = scmp.lt.s32.totalorder %s24, 1
        %s4847 = scalar_select %p4846, %s24, 1
        %p4848 = scmp.lt.s32.totalorder %s4845, 31
        %s4849 = scalar_select %p4848, %s4845, 31
        %s4850 = smul.addr %s4847, 32
        %s4851 = sadd.s32 %s4849, %s4850
        %s4852 = smul.addr %s4851, 4
        %s4853 = scalar_lea.vmem %s4, %s4852
      $region56: #{conv_block_forward.2} parent=51 // pred_fallthru
        _
      // Predicated region
      $region57: #{conv_block_forward.2} parent=51 // pred_check
        %p4854 = pneg %p205
      $region58: #{conv_block_forward.2} parent=51 // pred_check_branch
        %4856 = sbr.rel (%p4854) target = $region60
      $region59: #{conv_block_forward.2} parent=51 // pred_region
        %p4857 = scmp.lt.s32.totalorder %s24, 1
        %s4858 = scalar_select %p4857, %s24, 1
        %p4859 = scmp.lt.s32.totalorder %s25, 0
        %s4860 = scalar_select %p4859, %s25, 0
        %s4861 = sadd.s32 %s4860, %s4858
        %s4862 = scalar_lea.vmem %s5, %s4861
      $region60: #{conv_block_forward.2} parent=51 // pred_fallthru
        _
      // Predicated region
      $region61: #{conv_block_forward.2} parent=51 // pred_check
        %p4863 = pneg %p233
      $region62: #{conv_block_forward.2} parent=51 // pred_check_branch
        %4865 = sbr.rel (%p4863) target = $region64
      $region63: #{conv_block_forward.2} parent=51 // pred_region
        %p4866 = scmp.lt.s32.totalorder %s24, 1
        %s4867 = scalar_select %p4866, %s24, 1
        %p4868 = scmp.lt.s32.totalorder %s25, 0
        %s4869 = scalar_select %p4868, %s25, 0
        %s4870 = sadd.s32 %s4869, %s4867
        %s4871 = scalar_lea.vmem %s6, %s4870
      $region64: #{conv_block_forward.2} parent=51 // pred_fallthru
        _
    $region52: #{conv_block_forward.2} parent=5 // pred_fallthru
      _
  $region6: #{conv_block_forward.2} parent=0 // loop_footer
    %s17 = sadd.s32 1, %s13
  $region7: #{conv_block_forward.2} parent=0 // loop_footer_branch
    %12 = sbr.rel target = $region3
  $region8: #{conv_block_forward.2} parent=0 // loop_exit
    _

</llo_original>
